<compile_context>
chip_gen: v7x
topology: tpu7x:2x2x1
jax: 0.10.0
libtpu: 0.0.40
codegen_flags: <defaults>
</compile_context>

<pallas_src>
import functools

import jax
import jax.numpy as jnp
from jax import lax
from jax.experimental import pallas as pl
from jax.experimental.pallas import tpu as pltpu

# ---- module hyperparameters (scaled-down T, consistent with the forward) ----
N_EMBD = 384                        # n_embd in the PyTorch module
NUM_HEADS = 6
HEAD_SIZE = N_EMBD // NUM_HEADS     # 64
BATCH = 2
SEQ = 8                             # T <= block_size (256), causal tril mask on [:T, :T]


# ---------------------------------------------------------------------------
# Fused kernel (single invocation, whole problem in VMEM):
#   x_ref     : (B, T, C)   bf16
#   wqkv_ref  : (C, 3*C)    bf16   (wq columns pre-scaled by head_size**-0.5)
#   wproj_ref : (C, C)      bf16   (in, out) orientation
#   bproj_ref : (1, C)      f32
#   o_ref     : (B, T, C)   f32
# ---------------------------------------------------------------------------
def _fused_mha_kernel(x_ref, wqkv_ref, wproj_ref, bproj_ref, o_ref,
                      *, num_heads, head_size):
    B, T, C = x_ref.shape
    H, hs = num_heads, head_size
    N = B * H * T

    x = x_ref[...].reshape(B * T, C)              # (B*T, C) bf16, tile-aligned reshape
    wqkv = wqkv_ref[...]                          # (C, 3C) bf16
    wproj = wproj_ref[...]                        # (C, C)  bf16
    bias = bproj_ref[...]                         # (1, C)  f32

    # One wide, lane-dense MXU matmul produces Q|K|V for all heads & both batches.
    # f32 accumulation, then a single bf16 cast of the whole (B*T, 3C) tile.
    qkv = jnp.dot(x, wqkv, preferred_element_type=jnp.float32).astype(jnp.bfloat16)

    # ---- scores for every (batch, head), stacked along sublanes ----------------
    score_tiles = []
    for b in range(B):                            # static loops (B=2, H=6)
        rows = slice(b * T, (b + 1) * T)
        for h in range(H):
            q_h = qkv[rows, h * hs:(h + 1) * hs]              # (T, hs), already scaled
            k_h = qkv[rows, C + h * hs:C + (h + 1) * hs]      # (T, hs)
            # q @ k^T : contract the head dim directly (no materialized transpose)
            score_tiles.append(
                lax.dot_general(q_h, k_h, (((1,), (1,)), ((), ())),
                                preferred_element_type=jnp.float32))   # (T, T) f32
    s_all = jnp.concatenate(score_tiles, axis=0)              # (B*H*T, T) f32

    # Causal mask replicated per (batch, head) tile via row-within-tile = r % T.
    r = lax.broadcasted_iota(jnp.int32, (N, T), 0)
    c = lax.broadcasted_iota(jnp.int32, (N, T), 1)
    causal = c <= (r % T)
    s_all = jnp.where(causal, s_all, jnp.float32(-1e30))      # finite: no inf-inf NaNs

    # ---- ONE batched softmax in f32 (EUP reciprocal for the denominator) -------
    s_all = s_all - jnp.max(s_all, axis=-1, keepdims=True)
    p_all = jnp.exp(s_all)
    p_all = p_all * pl.reciprocal(jnp.sum(p_all, axis=-1, keepdims=True), approx=True)
    p_all = p_all.astype(jnp.bfloat16)

    # ---- P @ V and per-head output-projection accumulation (no concat) ---------
    for b in range(B):
        rows = slice(b * T, (b + 1) * T)
        y = jnp.zeros((T, C), jnp.float32)
        for h in range(H):
            i = b * H + h
            p_h = p_all[i * T:(i + 1) * T, :]                          # (T, T)  bf16
            v_h = qkv[rows, 2 * C + h * hs:2 * C + (h + 1) * hs]       # (T, hs) bf16
            o_h = jnp.dot(p_h, v_h, preferred_element_type=jnp.float32)  # (T, hs) f32
            y = y + jnp.dot(o_h.astype(jnp.bfloat16),
                            wproj[h * hs:(h + 1) * hs, :],             # sublane-aligned
                            preferred_element_type=jnp.float32)
        # output projection bias; final dropout is identity in eval mode
        o_ref[b] = (y + bias).astype(o_ref.dtype)                      # lane-dense store


# ---------------------------------------------------------------------------
# One-time weight preprocessing (hoisted out of the per-call hot path):
#   (H, C, hs) q/k/v weights -> single (C, 3C) bf16 buffer, 1/sqrt(hs) folded into wq.
# ---------------------------------------------------------------------------
def prepare_mha_params(params):
    H, C, hs = params["wq"].shape
    scale = float(hs) ** -0.5

    def stack(w):                                  # (H, C, hs) -> (C, H*hs)
        return jnp.transpose(w, (1, 0, 2)).reshape(C, H * hs)

    wqkv = jnp.concatenate(
        [stack(params["wq"]) * scale, stack(params["wk"]), stack(params["wv"])],
        axis=-1).astype(jnp.bfloat16)              # (C, 3C)
    return {
        "wqkv": wqkv,
        "w_proj": params["w_proj"].astype(jnp.bfloat16),   # (C, C)
        "b_proj": params["b_proj"].astype(jnp.float32),    # (1, C)
    }


# ---------------------------------------------------------------------------
# Wrapper: single pallas_call, grid=(1,) (everything fits in VMEM at this size)
# ---------------------------------------------------------------------------
def multi_head_attention(x, fused, *, num_heads=NUM_HEADS, head_size=HEAD_SIZE):
    """x: (B, T, C); fused: output of prepare_mha_params()."""
    B, T, C = x.shape
    kernel = functools.partial(_fused_mha_kernel,
                               num_heads=num_heads, head_size=head_size)
    return pl.pallas_call(
        kernel,
        out_shape=jax.ShapeDtypeStruct((B, T, C), jnp.float32),
        grid=(1,),
        in_specs=[
            pl.BlockSpec((B, T, C), lambda i: (0, 0, 0)),      # x
            pl.BlockSpec((C, 3 * C), lambda i: (0, 0)),        # stacked QKV weights
            pl.BlockSpec((C, C), lambda i: (0, 0)),            # w_proj
            pl.BlockSpec((1, C), lambda i: (0, 0)),            # b_proj
        ],
        out_specs=pl.BlockSpec((B, T, C), lambda i: (0, 0, 0)),
        compiler_params=pltpu.CompilerParams(
            dimension_semantics=("arbitrary",)),               # no megacore weight dup
    )(x.astype(jnp.bfloat16), fused["wqkv"], fused["w_proj"], fused["b_proj"])


# ---------------------------------------------------------------------------
# Pure-JAX f32 reference for a sanity check
# ---------------------------------------------------------------------------
def reference(x, params):
    q = jnp.einsum("btc,hcd->bhtd", x, params["wq"])
    k = jnp.einsum("btc,hcd->bhtd", x, params["wk"])
    v = jnp.einsum("btc,hcd->bhtd", x, params["wv"])
    wei = jnp.einsum("bhtd,bhsd->bhts", q, k) * (HEAD_SIZE ** -0.5)
    T = x.shape[1]
    mask = jnp.tril(jnp.ones((T, T), dtype=bool))
    wei = jnp.where(mask, wei, -jnp.inf)
    wei = jax.nn.softmax(wei, axis=-1)
    o = jnp.einsum("bhts,bhsd->bhtd", wei, v)
    cat = jnp.transpose(o, (0, 2, 1, 3)).reshape(x.shape[0], T, N_EMBD)
    return cat @ params["w_proj"] + params["b_proj"][0]


if __name__ == "__main__":
    key = jax.random.PRNGKey(0)
    k_x, k_q, k_k, k_v, k_p, k_b = jax.random.split(key, 6)

    x = jax.random.normal(k_x, (BATCH, SEQ, N_EMBD), dtype=jnp.float32)
    params = {
        "wq": 0.02 * jax.random.normal(k_q, (NUM_HEADS, N_EMBD, HEAD_SIZE), jnp.float32),
        "wk": 0.02 * jax.random.normal(k_k, (NUM_HEADS, N_EMBD, HEAD_SIZE), jnp.float32),
        "wv": 0.02 * jax.random.normal(k_v, (NUM_HEADS, N_EMBD, HEAD_SIZE), jnp.float32),
        "w_proj": 0.02 * jax.random.normal(k_p, (N_EMBD, N_EMBD), jnp.float32),
        "b_proj": 0.02 * jax.random.normal(k_b, (1, N_EMBD), jnp.float32),
    }

    fused = prepare_mha_params(params)             # one-time weight prep (hoisted)
    out = jax.block_until_ready(multi_head_attention(x, fused))
    ref = jax.block_until_ready(reference(x, params))

    assert out.shape == (BATCH, SEQ, N_EMBD)
    # MXU operands are bf16 in the kernel; compare against the f32 reference with a
    # tolerance covering bf16 rounding (softmax itself stays f32).
    assert jnp.allclose(out, ref, atol=2e-2, rtol=2e-2), "mismatch vs reference"
    print("KERNEL_OK")
</pallas_src>

<mosaic_0001>
module attributes {stable_mosaic.version = 11 : i64} {
  func.func @_fused_mha_kernel(%arg0: i32, %arg1: memref<2x8x384xbf16, #tpu.memory_space<vmem>>, %arg2: memref<384x1152xbf16, #tpu.memory_space<vmem>>, %arg3: memref<384x384xbf16, #tpu.memory_space<vmem>>, %arg4: memref<1x384xf32, #tpu.memory_space<vmem>>, %arg5: memref<2x8x384xf32, #tpu.memory_space<vmem>>) attributes {dimension_semantics = [#tpu.dimension_semantics<arbitrary>], iteration_bounds = array<i64: 1>, scalar_prefetch = 0 : i64, scratch_operands = 0 : i64, tpu.core_type = #tpu.core_type<tc>, window_params = [{pipeline_mode = #tpu.pipeline_mode<synchronous>, transform_indices = @transform_0, window_bounds = array<i64: 2, 8, 384>}, {pipeline_mode = #tpu.pipeline_mode<synchronous>, transform_indices = @transform_1, window_bounds = array<i64: 384, 1152>}, {pipeline_mode = #tpu.pipeline_mode<synchronous>, transform_indices = @transform_2, window_bounds = array<i64: 384, 384>}, {pipeline_mode = #tpu.pipeline_mode<synchronous>, transform_indices = @transform_3, window_bounds = array<i64: 1, 384>}, {pipeline_mode = #tpu.pipeline_mode<synchronous>, transform_indices = @transform_4, window_bounds = array<i64: 2, 8, 384>}]} {
    %c0 = arith.constant 0 : index
    %c0_0 = arith.constant 0 : index
    %c0_1 = arith.constant 0 : index
    %0 = vector.load %arg1[%c0, %c0_0, %c0_1] : memref<2x8x384xbf16, #tpu.memory_space<vmem>>, vector<2x8x384xbf16>
    %1 = vector.shape_cast %0 : vector<2x8x384xbf16> to vector<16x384xbf16>
    %c0_2 = arith.constant 0 : index
    %c0_3 = arith.constant 0 : index
    %2 = vector.load %arg2[%c0_2, %c0_3] : memref<384x1152xbf16, #tpu.memory_space<vmem>>, vector<384x1152xbf16>
    %c0_4 = arith.constant 0 : index
    %c0_5 = arith.constant 0 : index
    %3 = vector.load %arg3[%c0_4, %c0_5] : memref<384x384xbf16, #tpu.memory_space<vmem>>, vector<384x384xbf16>
    %c0_6 = arith.constant 0 : index
    %c0_7 = arith.constant 0 : index
    %4 = vector.load %arg4[%c0_6, %c0_7] : memref<1x384xf32, #tpu.memory_space<vmem>>, vector<1x384xf32>
    %cst = arith.constant dense<0.000000e+00> : vector<16x1152xf32>
    %5 = tpu.matmul %1, %2, %cst {dimension_numbers = #tpu.dot_dimension_numbers<[1], [0], [0], [1], [0, 0, 1, 1], [], []>} : vector<16x384xbf16>, vector<384x1152xbf16>, vector<16x1152xf32> -> vector<16x1152xf32>
    %6 = arith.truncf %5 : vector<16x1152xf32> to vector<16x1152xbf16>
    %7 = vector.extract_strided_slice %6 {offsets = [0, 0], sizes = [8, 64], strides = [1, 1]} : vector<16x1152xbf16> to vector<8x64xbf16>
    %8 = vector.extract_strided_slice %6 {offsets = [0, 384], sizes = [8, 64], strides = [1, 1]} : vector<16x1152xbf16> to vector<8x64xbf16>
    %cst_8 = arith.constant dense<0.000000e+00> : vector<8x8xf32>
    %9 = tpu.matmul %7, %8, %cst_8 {dimension_numbers = #tpu.dot_dimension_numbers<[1], [1], [0], [0], [0, 0, 1, 0], [], []>} : vector<8x64xbf16>, vector<8x64xbf16>, vector<8x8xf32> -> vector<8x8xf32>
    %10 = vector.extract_strided_slice %6 {offsets = [0, 64], sizes = [8, 64], strides = [1, 1]} : vector<16x1152xbf16> to vector<8x64xbf16>
    %11 = vector.extract_strided_slice %6 {offsets = [0, 448], sizes = [8, 64], strides = [1, 1]} : vector<16x1152xbf16> to vector<8x64xbf16>
    %cst_9 = arith.constant dense<0.000000e+00> : vector<8x8xf32>
    %12 = tpu.matmul %10, %11, %cst_9 {dimension_numbers = #tpu.dot_dimension_numbers<[1], [1], [0], [0], [0, 0, 1, 0], [], []>} : vector<8x64xbf16>, vector<8x64xbf16>, vector<8x8xf32> -> vector<8x8xf32>
    %13 = vector.extract_strided_slice %6 {offsets = [0, 128], sizes = [8, 64], strides = [1, 1]} : vector<16x1152xbf16> to vector<8x64xbf16>
    %14 = vector.extract_strided_slice %6 {offsets = [0, 512], sizes = [8, 64], strides = [1, 1]} : vector<16x1152xbf16> to vector<8x64xbf16>
    %cst_10 = arith.constant dense<0.000000e+00> : vector<8x8xf32>
    %15 = tpu.matmul %13, %14, %cst_10 {dimension_numbers = #tpu.dot_dimension_numbers<[1], [1], [0], [0], [0, 0, 1, 0], [], []>} : vector<8x64xbf16>, vector<8x64xbf16>, vector<8x8xf32> -> vector<8x8xf32>
    %16 = vector.extract_strided_slice %6 {offsets = [0, 192], sizes = [8, 64], strides = [1, 1]} : vector<16x1152xbf16> to vector<8x64xbf16>
    %17 = vector.extract_strided_slice %6 {offsets = [0, 576], sizes = [8, 64], strides = [1, 1]} : vector<16x1152xbf16> to vector<8x64xbf16>
    %cst_11 = arith.constant dense<0.000000e+00> : vector<8x8xf32>
    %18 = tpu.matmul %16, %17, %cst_11 {dimension_numbers = #tpu.dot_dimension_numbers<[1], [1], [0], [0], [0, 0, 1, 0], [], []>} : vector<8x64xbf16>, vector<8x64xbf16>, vector<8x8xf32> -> vector<8x8xf32>
    %19 = vector.extract_strided_slice %6 {offsets = [0, 256], sizes = [8, 64], strides = [1, 1]} : vector<16x1152xbf16> to vector<8x64xbf16>
    %20 = vector.extract_strided_slice %6 {offsets = [0, 640], sizes = [8, 64], strides = [1, 1]} : vector<16x1152xbf16> to vector<8x64xbf16>
    %cst_12 = arith.constant dense<0.000000e+00> : vector<8x8xf32>
    %21 = tpu.matmul %19, %20, %cst_12 {dimension_numbers = #tpu.dot_dimension_numbers<[1], [1], [0], [0], [0, 0, 1, 0], [], []>} : vector<8x64xbf16>, vector<8x64xbf16>, vector<8x8xf32> -> vector<8x8xf32>
    %22 = vector.extract_strided_slice %6 {offsets = [0, 320], sizes = [8, 64], strides = [1, 1]} : vector<16x1152xbf16> to vector<8x64xbf16>
    %23 = vector.extract_strided_slice %6 {offsets = [0, 704], sizes = [8, 64], strides = [1, 1]} : vector<16x1152xbf16> to vector<8x64xbf16>
    %cst_13 = arith.constant dense<0.000000e+00> : vector<8x8xf32>
    %24 = tpu.matmul %22, %23, %cst_13 {dimension_numbers = #tpu.dot_dimension_numbers<[1], [1], [0], [0], [0, 0, 1, 0], [], []>} : vector<8x64xbf16>, vector<8x64xbf16>, vector<8x8xf32> -> vector<8x8xf32>
    %25 = vector.extract_strided_slice %6 {offsets = [8, 0], sizes = [8, 64], strides = [1, 1]} : vector<16x1152xbf16> to vector<8x64xbf16>
    %26 = vector.extract_strided_slice %6 {offsets = [8, 384], sizes = [8, 64], strides = [1, 1]} : vector<16x1152xbf16> to vector<8x64xbf16>
    %cst_14 = arith.constant dense<0.000000e+00> : vector<8x8xf32>
    %27 = tpu.matmul %25, %26, %cst_14 {dimension_numbers = #tpu.dot_dimension_numbers<[1], [1], [0], [0], [0, 0, 1, 0], [], []>} : vector<8x64xbf16>, vector<8x64xbf16>, vector<8x8xf32> -> vector<8x8xf32>
    %28 = vector.extract_strided_slice %6 {offsets = [8, 64], sizes = [8, 64], strides = [1, 1]} : vector<16x1152xbf16> to vector<8x64xbf16>
    %29 = vector.extract_strided_slice %6 {offsets = [8, 448], sizes = [8, 64], strides = [1, 1]} : vector<16x1152xbf16> to vector<8x64xbf16>
    %cst_15 = arith.constant dense<0.000000e+00> : vector<8x8xf32>
    %30 = tpu.matmul %28, %29, %cst_15 {dimension_numbers = #tpu.dot_dimension_numbers<[1], [1], [0], [0], [0, 0, 1, 0], [], []>} : vector<8x64xbf16>, vector<8x64xbf16>, vector<8x8xf32> -> vector<8x8xf32>
    %31 = vector.extract_strided_slice %6 {offsets = [8, 128], sizes = [8, 64], strides = [1, 1]} : vector<16x1152xbf16> to vector<8x64xbf16>
    %32 = vector.extract_strided_slice %6 {offsets = [8, 512], sizes = [8, 64], strides = [1, 1]} : vector<16x1152xbf16> to vector<8x64xbf16>
    %cst_16 = arith.constant dense<0.000000e+00> : vector<8x8xf32>
    %33 = tpu.matmul %31, %32, %cst_16 {dimension_numbers = #tpu.dot_dimension_numbers<[1], [1], [0], [0], [0, 0, 1, 0], [], []>} : vector<8x64xbf16>, vector<8x64xbf16>, vector<8x8xf32> -> vector<8x8xf32>
    %34 = vector.extract_strided_slice %6 {offsets = [8, 192], sizes = [8, 64], strides = [1, 1]} : vector<16x1152xbf16> to vector<8x64xbf16>
    %35 = vector.extract_strided_slice %6 {offsets = [8, 576], sizes = [8, 64], strides = [1, 1]} : vector<16x1152xbf16> to vector<8x64xbf16>
    %cst_17 = arith.constant dense<0.000000e+00> : vector<8x8xf32>
    %36 = tpu.matmul %34, %35, %cst_17 {dimension_numbers = #tpu.dot_dimension_numbers<[1], [1], [0], [0], [0, 0, 1, 0], [], []>} : vector<8x64xbf16>, vector<8x64xbf16>, vector<8x8xf32> -> vector<8x8xf32>
    %37 = vector.extract_strided_slice %6 {offsets = [8, 256], sizes = [8, 64], strides = [1, 1]} : vector<16x1152xbf16> to vector<8x64xbf16>
    %38 = vector.extract_strided_slice %6 {offsets = [8, 640], sizes = [8, 64], strides = [1, 1]} : vector<16x1152xbf16> to vector<8x64xbf16>
    %cst_18 = arith.constant dense<0.000000e+00> : vector<8x8xf32>
    %39 = tpu.matmul %37, %38, %cst_18 {dimension_numbers = #tpu.dot_dimension_numbers<[1], [1], [0], [0], [0, 0, 1, 0], [], []>} : vector<8x64xbf16>, vector<8x64xbf16>, vector<8x8xf32> -> vector<8x8xf32>
    %40 = vector.extract_strided_slice %6 {offsets = [8, 320], sizes = [8, 64], strides = [1, 1]} : vector<16x1152xbf16> to vector<8x64xbf16>
    %41 = vector.extract_strided_slice %6 {offsets = [8, 704], sizes = [8, 64], strides = [1, 1]} : vector<16x1152xbf16> to vector<8x64xbf16>
    %cst_19 = arith.constant dense<0.000000e+00> : vector<8x8xf32>
    %42 = tpu.matmul %40, %41, %cst_19 {dimension_numbers = #tpu.dot_dimension_numbers<[1], [1], [0], [0], [0, 0, 1, 0], [], []>} : vector<8x64xbf16>, vector<8x64xbf16>, vector<8x8xf32> -> vector<8x8xf32>
    %43 = tpu.concatenate %9, %12, %15, %18, %21, %24, %27, %30, %33, %36, %39, %42 in 0 : vector<8x8xf32>, vector<8x8xf32>, vector<8x8xf32>, vector<8x8xf32>, vector<8x8xf32>, vector<8x8xf32>, vector<8x8xf32>, vector<8x8xf32>, vector<8x8xf32>, vector<8x8xf32>, vector<8x8xf32>, vector<8x8xf32> -> vector<96x8xf32>
    %44 = tpu.iota {dimensions = array<i32: 0>} : vector<96x8xi32>
    %45 = tpu.iota {dimensions = array<i32: 1>} : vector<96x8xi32>
    %c8_i32 = arith.constant 8 : i32
    %c0_i32 = arith.constant 0 : i32
    %46 = arith.cmpi eq, %c8_i32, %c0_i32 : i32
    %c1_i32 = arith.constant 1 : i32
    %47 = arith.select %46, %c1_i32, %c8_i32 : i32
    %48 = vector.broadcast %47 : i32 to vector<96x8xi32>
    %49 = arith.remsi %44, %48 : vector<96x8xi32>
    %c0_i32_20 = arith.constant 0 : i32
    %50 = vector.broadcast %c0_i32_20 : i32 to vector<96x8xi32>
    %51 = arith.cmpi ne, %49, %50 : vector<96x8xi32>
    %c0_i32_21 = arith.constant 0 : i32
    %52 = vector.broadcast %c0_i32_21 : i32 to vector<96x8xi32>
    %53 = arith.cmpi slt, %49, %52 : vector<96x8xi32>
    %c0_i32_22 = arith.constant 0 : i32
    %54 = arith.cmpi slt, %47, %c0_i32_22 : i32
    %55 = vector.broadcast %54 : i1 to vector<96x8xi1>
    %56 = vector.broadcast %55 : vector<96x8xi1> to vector<96x8xi1>
    %57 = arith.xori %53, %56 : vector<96x8xi1>
    %58 = arith.andi %57, %51 : vector<96x8xi1>
    %59 = vector.broadcast %47 : i32 to vector<96x8xi32>
    %60 = arith.addi %49, %59 : vector<96x8xi32>
    %61 = arith.select %58, %60, %49 : vector<96x8xi1>, vector<96x8xi32>
    %62 = arith.cmpi sle, %45, %61 : vector<96x8xi32>
    %cst_23 = arith.constant -1.000000e+30 : f32
    %63 = vector.broadcast %cst_23 : f32 to vector<96x8xf32>
    %64 = arith.select %62, %43, %63 : vector<96x8xi1>, vector<96x8xf32>
    %cst_24 = arith.constant dense<0xFF800000> : vector<96xf32>
    %65 = vector.multi_reduction <maximumf>, %64, %cst_24 [1] : vector<96x8xf32> to vector<96xf32>
    %66 = vector.shape_cast %65 : vector<96xf32> to vector<96x1xf32>
    %67 = vector.broadcast %66 : vector<96x1xf32> to vector<96x8xf32>
    %68 = arith.subf %64, %67 : vector<96x8xf32>
    %69 = math.exp %68 : vector<96x8xf32>
    %cst_25 = arith.constant dense<0.000000e+00> : vector<96xf32>
    %70 = vector.multi_reduction <add>, %69, %cst_25 [1] : vector<96x8xf32> to vector<96xf32>
    %71 = vector.shape_cast %70 : vector<96xf32> to vector<96x1xf32>
    %72 = tpu.reciprocal %71 {approx = true} : vector<96x1xf32> -> vector<96x1xf32>
    %73 = vector.broadcast %72 : vector<96x1xf32> to vector<96x8xf32>
    %74 = arith.mulf %69, %73 : vector<96x8xf32>
    %75 = arith.truncf %74 : vector<96x8xf32> to vector<96x8xbf16>
    %cst_26 = arith.constant 0.000000e+00 : f32
    %76 = vector.broadcast %cst_26 : f32 to vector<8x384xf32>
    %77 = vector.extract_strided_slice %75 {offsets = [0, 0], sizes = [8, 8], strides = [1, 1]} : vector<96x8xbf16> to vector<8x8xbf16>
    %78 = vector.extract_strided_slice %6 {offsets = [0, 768], sizes = [8, 64], strides = [1, 1]} : vector<16x1152xbf16> to vector<8x64xbf16>
    %cst_27 = arith.constant dense<0.000000e+00> : vector<8x64xf32>
    %79 = tpu.matmul %77, %78, %cst_27 {dimension_numbers = #tpu.dot_dimension_numbers<[1], [0], [0], [1], [0, 0, 1, 1], [], []>} : vector<8x8xbf16>, vector<8x64xbf16>, vector<8x64xf32> -> vector<8x64xf32>
    %80 = arith.truncf %79 : vector<8x64xf32> to vector<8x64xbf16>
    %81 = vector.extract_strided_slice %3 {offsets = [0, 0], sizes = [64, 384], strides = [1, 1]} : vector<384x384xbf16> to vector<64x384xbf16>
    %cst_28 = arith.constant dense<0.000000e+00> : vector<8x384xf32>
    %82 = tpu.matmul %80, %81, %cst_28 {dimension_numbers = #tpu.dot_dimension_numbers<[1], [0], [0], [1], [0, 0, 1, 1], [], []>} : vector<8x64xbf16>, vector<64x384xbf16>, vector<8x384xf32> -> vector<8x384xf32>
    %83 = arith.addf %76, %82 : vector<8x384xf32>
    %84 = vector.extract_strided_slice %75 {offsets = [8, 0], sizes = [8, 8], strides = [1, 1]} : vector<96x8xbf16> to vector<8x8xbf16>
    %85 = vector.extract_strided_slice %6 {offsets = [0, 832], sizes = [8, 64], strides = [1, 1]} : vector<16x1152xbf16> to vector<8x64xbf16>
    %cst_29 = arith.constant dense<0.000000e+00> : vector<8x64xf32>
    %86 = tpu.matmul %84, %85, %cst_29 {dimension_numbers = #tpu.dot_dimension_numbers<[1], [0], [0], [1], [0, 0, 1, 1], [], []>} : vector<8x8xbf16>, vector<8x64xbf16>, vector<8x64xf32> -> vector<8x64xf32>
    %87 = arith.truncf %86 : vector<8x64xf32> to vector<8x64xbf16>
    %88 = vector.extract_strided_slice %3 {offsets = [64, 0], sizes = [64, 384], strides = [1, 1]} : vector<384x384xbf16> to vector<64x384xbf16>
    %cst_30 = arith.constant dense<0.000000e+00> : vector<8x384xf32>
    %89 = tpu.matmul %87, %88, %cst_30 {dimension_numbers = #tpu.dot_dimension_numbers<[1], [0], [0], [1], [0, 0, 1, 1], [], []>} : vector<8x64xbf16>, vector<64x384xbf16>, vector<8x384xf32> -> vector<8x384xf32>
    %90 = arith.addf %83, %89 : vector<8x384xf32>
    %91 = vector.extract_strided_slice %75 {offsets = [16, 0], sizes = [8, 8], strides = [1, 1]} : vector<96x8xbf16> to vector<8x8xbf16>
    %92 = vector.extract_strided_slice %6 {offsets = [0, 896], sizes = [8, 64], strides = [1, 1]} : vector<16x1152xbf16> to vector<8x64xbf16>
    %cst_31 = arith.constant dense<0.000000e+00> : vector<8x64xf32>
    %93 = tpu.matmul %91, %92, %cst_31 {dimension_numbers = #tpu.dot_dimension_numbers<[1], [0], [0], [1], [0, 0, 1, 1], [], []>} : vector<8x8xbf16>, vector<8x64xbf16>, vector<8x64xf32> -> vector<8x64xf32>
    %94 = arith.truncf %93 : vector<8x64xf32> to vector<8x64xbf16>
    %95 = vector.extract_strided_slice %3 {offsets = [128, 0], sizes = [64, 384], strides = [1, 1]} : vector<384x384xbf16> to vector<64x384xbf16>
    %cst_32 = arith.constant dense<0.000000e+00> : vector<8x384xf32>
    %96 = tpu.matmul %94, %95, %cst_32 {dimension_numbers = #tpu.dot_dimension_numbers<[1], [0], [0], [1], [0, 0, 1, 1], [], []>} : vector<8x64xbf16>, vector<64x384xbf16>, vector<8x384xf32> -> vector<8x384xf32>
    %97 = arith.addf %90, %96 : vector<8x384xf32>
    %98 = vector.extract_strided_slice %75 {offsets = [24, 0], sizes = [8, 8], strides = [1, 1]} : vector<96x8xbf16> to vector<8x8xbf16>
    %99 = vector.extract_strided_slice %6 {offsets = [0, 960], sizes = [8, 64], strides = [1, 1]} : vector<16x1152xbf16> to vector<8x64xbf16>
    %cst_33 = arith.constant dense<0.000000e+00> : vector<8x64xf32>
    %100 = tpu.matmul %98, %99, %cst_33 {dimension_numbers = #tpu.dot_dimension_numbers<[1], [0], [0], [1], [0, 0, 1, 1], [], []>} : vector<8x8xbf16>, vector<8x64xbf16>, vector<8x64xf32> -> vector<8x64xf32>
    %101 = arith.truncf %100 : vector<8x64xf32> to vector<8x64xbf16>
    %102 = vector.extract_strided_slice %3 {offsets = [192, 0], sizes = [64, 384], strides = [1, 1]} : vector<384x384xbf16> to vector<64x384xbf16>
    %cst_34 = arith.constant dense<0.000000e+00> : vector<8x384xf32>
    %103 = tpu.matmul %101, %102, %cst_34 {dimension_numbers = #tpu.dot_dimension_numbers<[1], [0], [0], [1], [0, 0, 1, 1], [], []>} : vector<8x64xbf16>, vector<64x384xbf16>, vector<8x384xf32> -> vector<8x384xf32>
    %104 = arith.addf %97, %103 : vector<8x384xf32>
    %105 = vector.extract_strided_slice %75 {offsets = [32, 0], sizes = [8, 8], strides = [1, 1]} : vector<96x8xbf16> to vector<8x8xbf16>
    %106 = vector.extract_strided_slice %6 {offsets = [0, 1024], sizes = [8, 64], strides = [1, 1]} : vector<16x1152xbf16> to vector<8x64xbf16>
    %cst_35 = arith.constant dense<0.000000e+00> : vector<8x64xf32>
    %107 = tpu.matmul %105, %106, %cst_35 {dimension_numbers = #tpu.dot_dimension_numbers<[1], [0], [0], [1], [0, 0, 1, 1], [], []>} : vector<8x8xbf16>, vector<8x64xbf16>, vector<8x64xf32> -> vector<8x64xf32>
    %108 = arith.truncf %107 : vector<8x64xf32> to vector<8x64xbf16>
    %109 = vector.extract_strided_slice %3 {offsets = [256, 0], sizes = [64, 384], strides = [1, 1]} : vector<384x384xbf16> to vector<64x384xbf16>
    %cst_36 = arith.constant dense<0.000000e+00> : vector<8x384xf32>
    %110 = tpu.matmul %108, %109, %cst_36 {dimension_numbers = #tpu.dot_dimension_numbers<[1], [0], [0], [1], [0, 0, 1, 1], [], []>} : vector<8x64xbf16>, vector<64x384xbf16>, vector<8x384xf32> -> vector<8x384xf32>
    %111 = arith.addf %104, %110 : vector<8x384xf32>
    %112 = vector.extract_strided_slice %75 {offsets = [40, 0], sizes = [8, 8], strides = [1, 1]} : vector<96x8xbf16> to vector<8x8xbf16>
    %113 = vector.extract_strided_slice %6 {offsets = [0, 1088], sizes = [8, 64], strides = [1, 1]} : vector<16x1152xbf16> to vector<8x64xbf16>
    %cst_37 = arith.constant dense<0.000000e+00> : vector<8x64xf32>
    %114 = tpu.matmul %112, %113, %cst_37 {dimension_numbers = #tpu.dot_dimension_numbers<[1], [0], [0], [1], [0, 0, 1, 1], [], []>} : vector<8x8xbf16>, vector<8x64xbf16>, vector<8x64xf32> -> vector<8x64xf32>
    %115 = arith.truncf %114 : vector<8x64xf32> to vector<8x64xbf16>
    %116 = vector.extract_strided_slice %3 {offsets = [320, 0], sizes = [64, 384], strides = [1, 1]} : vector<384x384xbf16> to vector<64x384xbf16>
    %cst_38 = arith.constant dense<0.000000e+00> : vector<8x384xf32>
    %117 = tpu.matmul %115, %116, %cst_38 {dimension_numbers = #tpu.dot_dimension_numbers<[1], [0], [0], [1], [0, 0, 1, 1], [], []>} : vector<8x64xbf16>, vector<64x384xbf16>, vector<8x384xf32> -> vector<8x384xf32>
    %118 = arith.addf %111, %117 : vector<8x384xf32>
    %119 = vector.broadcast %4 : vector<1x384xf32> to vector<8x384xf32>
    %120 = arith.addf %118, %119 : vector<8x384xf32>
    %c0_39 = arith.constant 0 : index
    %c0_40 = arith.constant 0 : index
    %c0_41 = arith.constant 0 : index
    %121 = vector.load %arg5[%c0_39, %c0_40, %c0_41] : memref<2x8x384xf32, #tpu.memory_space<vmem>>, vector<1x8x384xf32>
    %122 = vector.shape_cast %121 : vector<1x8x384xf32> to vector<8x384xf32>
    %123 = vector.shape_cast %120 : vector<8x384xf32> to vector<1x8x384xf32>
    tpu.vector_store %arg5[%c0_39, %c0_40, %c0_41], %123 {strides = array<i32>} : memref<2x8x384xf32, #tpu.memory_space<vmem>>, vector<1x8x384xf32>,
    %cst_42 = arith.constant 0.000000e+00 : f32
    %124 = vector.broadcast %cst_42 : f32 to vector<8x384xf32>
    %125 = vector.extract_strided_slice %75 {offsets = [48, 0], sizes = [8, 8], strides = [1, 1]} : vector<96x8xbf16> to vector<8x8xbf16>
    %126 = vector.extract_strided_slice %6 {offsets = [8, 768], sizes = [8, 64], strides = [1, 1]} : vector<16x1152xbf16> to vector<8x64xbf16>
    %cst_43 = arith.constant dense<0.000000e+00> : vector<8x64xf32>
    %127 = tpu.matmul %125, %126, %cst_43 {dimension_numbers = #tpu.dot_dimension_numbers<[1], [0], [0], [1], [0, 0, 1, 1], [], []>} : vector<8x8xbf16>, vector<8x64xbf16>, vector<8x64xf32> -> vector<8x64xf32>
    %128 = arith.truncf %127 : vector<8x64xf32> to vector<8x64xbf16>
    %129 = vector.extract_strided_slice %3 {offsets = [0, 0], sizes = [64, 384], strides = [1, 1]} : vector<384x384xbf16> to vector<64x384xbf16>
    %cst_44 = arith.constant dense<0.000000e+00> : vector<8x384xf32>
    %130 = tpu.matmul %128, %129, %cst_44 {dimension_numbers = #tpu.dot_dimension_numbers<[1], [0], [0], [1], [0, 0, 1, 1], [], []>} : vector<8x64xbf16>, vector<64x384xbf16>, vector<8x384xf32> -> vector<8x384xf32>
    %131 = arith.addf %124, %130 : vector<8x384xf32>
    %132 = vector.extract_strided_slice %75 {offsets = [56, 0], sizes = [8, 8], strides = [1, 1]} : vector<96x8xbf16> to vector<8x8xbf16>
    %133 = vector.extract_strided_slice %6 {offsets = [8, 832], sizes = [8, 64], strides = [1, 1]} : vector<16x1152xbf16> to vector<8x64xbf16>
    %cst_45 = arith.constant dense<0.000000e+00> : vector<8x64xf32>
    %134 = tpu.matmul %132, %133, %cst_45 {dimension_numbers = #tpu.dot_dimension_numbers<[1], [0], [0], [1], [0, 0, 1, 1], [], []>} : vector<8x8xbf16>, vector<8x64xbf16>, vector<8x64xf32> -> vector<8x64xf32>
    %135 = arith.truncf %134 : vector<8x64xf32> to vector<8x64xbf16>
    %136 = vector.extract_strided_slice %3 {offsets = [64, 0], sizes = [64, 384], strides = [1, 1]} : vector<384x384xbf16> to vector<64x384xbf16>
    %cst_46 = arith.constant dense<0.000000e+00> : vector<8x384xf32>
    %137 = tpu.matmul %135, %136, %cst_46 {dimension_numbers = #tpu.dot_dimension_numbers<[1], [0], [0], [1], [0, 0, 1, 1], [], []>} : vector<8x64xbf16>, vector<64x384xbf16>, vector<8x384xf32> -> vector<8x384xf32>
    %138 = arith.addf %131, %137 : vector<8x384xf32>
    %139 = vector.extract_strided_slice %75 {offsets = [64, 0], sizes = [8, 8], strides = [1, 1]} : vector<96x8xbf16> to vector<8x8xbf16>
    %140 = vector.extract_strided_slice %6 {offsets = [8, 896], sizes = [8, 64], strides = [1, 1]} : vector<16x1152xbf16> to vector<8x64xbf16>
    %cst_47 = arith.constant dense<0.000000e+00> : vector<8x64xf32>
    %141 = tpu.matmul %139, %140, %cst_47 {dimension_numbers = #tpu.dot_dimension_numbers<[1], [0], [0], [1], [0, 0, 1, 1], [], []>} : vector<8x8xbf16>, vector<8x64xbf16>, vector<8x64xf32> -> vector<8x64xf32>
    %142 = arith.truncf %141 : vector<8x64xf32> to vector<8x64xbf16>
    %143 = vector.extract_strided_slice %3 {offsets = [128, 0], sizes = [64, 384], strides = [1, 1]} : vector<384x384xbf16> to vector<64x384xbf16>
    %cst_48 = arith.constant dense<0.000000e+00> : vector<8x384xf32>
    %144 = tpu.matmul %142, %143, %cst_48 {dimension_numbers = #tpu.dot_dimension_numbers<[1], [0], [0], [1], [0, 0, 1, 1], [], []>} : vector<8x64xbf16>, vector<64x384xbf16>, vector<8x384xf32> -> vector<8x384xf32>
    %145 = arith.addf %138, %144 : vector<8x384xf32>
    %146 = vector.extract_strided_slice %75 {offsets = [72, 0], sizes = [8, 8], strides = [1, 1]} : vector<96x8xbf16> to vector<8x8xbf16>
    %147 = vector.extract_strided_slice %6 {offsets = [8, 960], sizes = [8, 64], strides = [1, 1]} : vector<16x1152xbf16> to vector<8x64xbf16>
    %cst_49 = arith.constant dense<0.000000e+00> : vector<8x64xf32>
    %148 = tpu.matmul %146, %147, %cst_49 {dimension_numbers = #tpu.dot_dimension_numbers<[1], [0], [0], [1], [0, 0, 1, 1], [], []>} : vector<8x8xbf16>, vector<8x64xbf16>, vector<8x64xf32> -> vector<8x64xf32>
    %149 = arith.truncf %148 : vector<8x64xf32> to vector<8x64xbf16>
    %150 = vector.extract_strided_slice %3 {offsets = [192, 0], sizes = [64, 384], strides = [1, 1]} : vector<384x384xbf16> to vector<64x384xbf16>
    %cst_50 = arith.constant dense<0.000000e+00> : vector<8x384xf32>
    %151 = tpu.matmul %149, %150, %cst_50 {dimension_numbers = #tpu.dot_dimension_numbers<[1], [0], [0], [1], [0, 0, 1, 1], [], []>} : vector<8x64xbf16>, vector<64x384xbf16>, vector<8x384xf32> -> vector<8x384xf32>
    %152 = arith.addf %145, %151 : vector<8x384xf32>
    %153 = vector.extract_strided_slice %75 {offsets = [80, 0], sizes = [8, 8], strides = [1, 1]} : vector<96x8xbf16> to vector<8x8xbf16>
    %154 = vector.extract_strided_slice %6 {offsets = [8, 1024], sizes = [8, 64], strides = [1, 1]} : vector<16x1152xbf16> to vector<8x64xbf16>
    %cst_51 = arith.constant dense<0.000000e+00> : vector<8x64xf32>
    %155 = tpu.matmul %153, %154, %cst_51 {dimension_numbers = #tpu.dot_dimension_numbers<[1], [0], [0], [1], [0, 0, 1, 1], [], []>} : vector<8x8xbf16>, vector<8x64xbf16>, vector<8x64xf32> -> vector<8x64xf32>
    %156 = arith.truncf %155 : vector<8x64xf32> to vector<8x64xbf16>
    %157 = vector.extract_strided_slice %3 {offsets = [256, 0], sizes = [64, 384], strides = [1, 1]} : vector<384x384xbf16> to vector<64x384xbf16>
    %cst_52 = arith.constant dense<0.000000e+00> : vector<8x384xf32>
    %158 = tpu.matmul %156, %157, %cst_52 {dimension_numbers = #tpu.dot_dimension_numbers<[1], [0], [0], [1], [0, 0, 1, 1], [], []>} : vector<8x64xbf16>, vector<64x384xbf16>, vector<8x384xf32> -> vector<8x384xf32>
    %159 = arith.addf %152, %158 : vector<8x384xf32>
    %160 = vector.extract_strided_slice %75 {offsets = [88, 0], sizes = [8, 8], strides = [1, 1]} : vector<96x8xbf16> to vector<8x8xbf16>
    %161 = vector.extract_strided_slice %6 {offsets = [8, 1088], sizes = [8, 64], strides = [1, 1]} : vector<16x1152xbf16> to vector<8x64xbf16>
    %cst_53 = arith.constant dense<0.000000e+00> : vector<8x64xf32>
    %162 = tpu.matmul %160, %161, %cst_53 {dimension_numbers = #tpu.dot_dimension_numbers<[1], [0], [0], [1], [0, 0, 1, 1], [], []>} : vector<8x8xbf16>, vector<8x64xbf16>, vector<8x64xf32> -> vector<8x64xf32>
    %163 = arith.truncf %162 : vector<8x64xf32> to vector<8x64xbf16>
    %164 = vector.extract_strided_slice %3 {offsets = [320, 0], sizes = [64, 384], strides = [1, 1]} : vector<384x384xbf16> to vector<64x384xbf16>
    %cst_54 = arith.constant dense<0.000000e+00> : vector<8x384xf32>
    %165 = tpu.matmul %163, %164, %cst_54 {dimension_numbers = #tpu.dot_dimension_numbers<[1], [0], [0], [1], [0, 0, 1, 1], [], []>} : vector<8x64xbf16>, vector<64x384xbf16>, vector<8x384xf32> -> vector<8x384xf32>
    %166 = arith.addf %159, %165 : vector<8x384xf32>
    %167 = vector.broadcast %4 : vector<1x384xf32> to vector<8x384xf32>
    %168 = arith.addf %166, %167 : vector<8x384xf32>
    %c1 = arith.constant 1 : index
    %c0_55 = arith.constant 0 : index
    %c0_56 = arith.constant 0 : index
    %169 = vector.load %arg5[%c1, %c0_55, %c0_56] : memref<2x8x384xf32, #tpu.memory_space<vmem>>, vector<1x8x384xf32>
    %170 = vector.shape_cast %169 : vector<1x8x384xf32> to vector<8x384xf32>
    %171 = vector.shape_cast %168 : vector<8x384xf32> to vector<1x8x384xf32>
    tpu.vector_store %arg5[%c1, %c0_55, %c0_56], %171 {strides = array<i32>} : memref<2x8x384xf32, #tpu.memory_space<vmem>>, vector<1x8x384xf32>,
    return
  }
  func.func @transform_0(%arg0: i32) -> (i32, i32, i32) {
    %c0_i32 = arith.constant 0 : i32
    %c0_i32_0 = arith.constant 0 : i32
    %c0_i32_1 = arith.constant 0 : i32
    %c0_i32_2 = arith.constant 0 : i32
    return %c0_i32, %c0_i32_0, %c0_i32_1 : i32, i32, i32
  }
  func.func @transform_1(%arg0: i32) -> (i32, i32) {
    %c0_i32 = arith.constant 0 : i32
    %c0_i32_0 = arith.constant 0 : i32
    %c0_i32_1 = arith.constant 0 : i32
    return %c0_i32, %c0_i32_0 : i32, i32
  }
  func.func @transform_2(%arg0: i32) -> (i32, i32) {
    %c0_i32 = arith.constant 0 : i32
    %c0_i32_0 = arith.constant 0 : i32
    %c0_i32_1 = arith.constant 0 : i32
    return %c0_i32, %c0_i32_0 : i32, i32
  }
  func.func @transform_3(%arg0: i32) -> (i32, i32) {
    %c0_i32 = arith.constant 0 : i32
    %c0_i32_0 = arith.constant 0 : i32
    %c0_i32_1 = arith.constant 0 : i32
    return %c0_i32, %c0_i32_0 : i32, i32
  }
  func.func @transform_4(%arg0: i32) -> (i32, i32, i32) {
    %c0_i32 = arith.constant 0 : i32
    %c0_i32_0 = arith.constant 0 : i32
    %c0_i32_1 = arith.constant 0 : i32
    %c0_i32_2 = arith.constant 0 : i32
    return %c0_i32, %c0_i32_0, %c0_i32_1 : i32, i32, i32
  }
}

</mosaic_0001>

<llo_original>
// kernel: tpu_custom_call.1
$region0: #{tpu_custom_call.1}
  #allocation0 [shape = 'u32[]', space=smem, size = 0x4, offset = 0x4, fixed_abs, tag = 'smem constant byte address 0x4 - core index']
  #allocation1 [shape = 'u32[144,128]{1,0:T(1,128)}', space=vmem, size = 0x12000, scoped, tag = 'internal scratch']
  %s0 = inlined_call_operand.hbm [shape: bf16[2,8,384], index: 0, kind: input, shape index: {}]
  %s1 = inlined_call_operand.hbm [shape: bf16[384,1152], index: 1, kind: input, shape index: {}]
  %s2 = inlined_call_operand.hbm [shape: bf16[384,384], index: 2, kind: input, shape index: {}]
  %s3 = inlined_call_operand.vmem [shape: f32[1,384], index: 3, kind: input, shape index: {}]
  %s4 = inlined_call_operand.hbm [shape: f32[2,8,384], index: 4, kind: output, shape index: {}]
  %s5 = sld [smem:[#allocation0]]
  $region38: #{tpu_custom_call.1} parent=0
    _
  %s7 = ssub.s32 1, %s5
  %s8 = scalar_select 0, %s7, %s5
  $region1: #{tpu_custom_call.1} parent=0
    #allocation2 [shape = 'u8[12288]{0}', space=vmem, size = 0x3000, scoped, tag = 'input window, operand 0, single buffered']
    #allocation3 [shape = 's32[1]{0}', space=sflag, size = 0x4, scoped, tag = 'scoped memory for tpu_custom_call.1']
    #allocation4 [shape = 's32[1]{0}', space=sflag, size = 0x4, scoped, tag = 'scoped memory for tpu_custom_call.1']
    #allocation5 [shape = 'u8[884736]{0}', space=vmem, size = 0xd8000, scoped, tag = 'input window, operand 1, single buffered']
    #allocation6 [shape = 's32[1]{0}', space=sflag, size = 0x4, scoped, tag = 'scoped memory for tpu_custom_call.1']
    #allocation7 [shape = 'u8[294912]{0}', space=vmem, size = 0x48000, scoped, tag = 'input window, operand 2, single buffered']
    #allocation8 [shape = 'u8[24576]{0}', space=vmem, size = 0x6000, scoped, tag = 'output window, operand 0, single buffered']
    %9 = vsyncpa [#allocation3], 0
    %10 = vsyncpa [#allocation6], 0
    %11 = vsyncpa [#allocation4], 0
    // Predicated region
    $region2: #{tpu_custom_call.1} parent=1 // pred_check
      _
    $region3: #{tpu_custom_call.1} parent=1 // pred_check_branch
      %13 = sbr.rel (0) target = $region5
    $region4: #{tpu_custom_call.1} parent=1 // pred_region
      %s15 = ssub.s32 384, 384
      %16 = vsyncadd [#allocation3], %s15
      %s17 = sshll.u32 [#allocation2], 4
      %s18 = int_to_ptr.vmem [resolvable:$true] %s17
      %23 = dma.hbm_to_vmem [thread:$0]  %s0, 384, %s18, [#allocation3], 192, 192, 12
    $region5: #{tpu_custom_call.1} parent=1 // pred_fallthru
      _
    // Predicated region
    $region6: #{tpu_custom_call.1} parent=1 // pred_check
      _
    $region7: #{tpu_custom_call.1} parent=1 // pred_check_branch
      %25 = sbr.rel (0) target = $region9
    $region8: #{tpu_custom_call.1} parent=1 // pred_region
      %s27 = ssub.s32 27648, 27648
      %28 = vsyncadd [#allocation6], %s27
      %s29 = sshll.u32 [#allocation5], 4
      %s30 = int_to_ptr.vmem [resolvable:$true] %s29
      %35 = dma.hbm_to_vmem [thread:$0]  %s1, 27648, %s30, [#allocation6], 576, 576, 36
    $region9: #{tpu_custom_call.1} parent=1 // pred_fallthru
      _
    // Predicated region
    $region10: #{tpu_custom_call.1} parent=1 // pred_check
      _
    $region11: #{tpu_custom_call.1} parent=1 // pred_check_branch
      %37 = sbr.rel (0) target = $region13
    $region12: #{tpu_custom_call.1} parent=1 // pred_region
      %s39 = ssub.s32 9216, 9216
      %40 = vsyncadd [#allocation6], %s39
      %s41 = sshll.u32 [#allocation7], 4
      %s42 = int_to_ptr.vmem [resolvable:$true] %s41
      %47 = dma.hbm_to_vmem [thread:$0]  %s2, 9216, %s42, [#allocation6], 192, 192, 12
    $region13: #{tpu_custom_call.1} parent=1 // pred_fallthru
      _
    // Predicated region
    $region14: #{tpu_custom_call.1} parent=1 // pred_check
      _
    $region15: #{tpu_custom_call.1} parent=1 // pred_check_branch
      %49 = sbr.rel (0) target = $region17
    $region16: #{tpu_custom_call.1} parent=1 // pred_region
      _
    $region17: #{tpu_custom_call.1} parent=1 // pred_fallthru
      _
    // Predicated region
    $region18: #{tpu_custom_call.1} parent=1 // pred_check
      _
    $region19: #{tpu_custom_call.1} parent=1 // pred_check_branch
      %51 = sbr.rel (0) target = $region21
    $region20: #{tpu_custom_call.1} parent=1 // pred_region
      %52 = dma.done [#allocation3], 384
    $region21: #{tpu_custom_call.1} parent=1 // pred_fallthru
      _
    // Predicated region
    $region22: #{tpu_custom_call.1} parent=1 // pred_check
      _
    $region23: #{tpu_custom_call.1} parent=1 // pred_check_branch
      %54 = sbr.rel (0) target = $region25
    $region24: #{tpu_custom_call.1} parent=1 // pred_region
      %55 = dma.done [#allocation6], 27648
    $region25: #{tpu_custom_call.1} parent=1 // pred_fallthru
      _
    // Predicated region
    $region26: #{tpu_custom_call.1} parent=1 // pred_check
      _
    $region27: #{tpu_custom_call.1} parent=1 // pred_check_branch
      %57 = sbr.rel (0) target = $region29
    $region28: #{tpu_custom_call.1} parent=1 // pred_region
      %58 = dma.done [#allocation6], 9216
    $region29: #{tpu_custom_call.1} parent=1 // pred_fallthru
      _
    %v60 = vld [vmem:[#allocation2] sm:$0xff]
    %v61 = vld [vmem:[#allocation2 + $0x8] sm:$0xf]
    %v62 = vld [vmem:[#allocation2 + $0xc] sm:$0xff]
    %v63 = vld [vmem:[#allocation2 + $0x14] sm:$0xf]
    %v64 = vld [vmem:[#allocation5] sm:$0xff]
    %v65 = vld [vmem:[#allocation5 + $0x8] sm:$0xff]
    %v66 = vld [vmem:[#allocation5 + $0x10] sm:$0xff]
    %v67 = vld [vmem:[#allocation5 + $0x18] sm:$0xff]
    %v68 = vld [vmem:[#allocation5 + $0x20] sm:$0xf]
    %v69 = vld [vmem:[#allocation5 + $0x24] sm:$0xff]
    %v70 = vld [vmem:[#allocation5 + $0x2c] sm:$0xff]
    %v71 = vld [vmem:[#allocation5 + $0x34] sm:$0xff]
    %v72 = vld [vmem:[#allocation5 + $0x3c] sm:$0xff]
    %v73 = vld [vmem:[#allocation5 + $0x44] sm:$0xf]
    %v74 = vld [vmem:[#allocation5 + $0x48] sm:$0xff]
    %v75 = vld [vmem:[#allocation5 + $0x50] sm:$0xff]
    %v76 = vld [vmem:[#allocation5 + $0x58] sm:$0xff]
    %v77 = vld [vmem:[#allocation5 + $0x60] sm:$0xff]
    %v78 = vld [vmem:[#allocation5 + $0x68] sm:$0xf]
    %v79 = vld [vmem:[#allocation5 + $0x6c] sm:$0xff]
    %v80 = vld [vmem:[#allocation5 + $0x74] sm:$0xff]
    %v81 = vld [vmem:[#allocation5 + $0x7c] sm:$0xff]
    %v82 = vld [vmem:[#allocation5 + $0x84] sm:$0xff]
    %v83 = vld [vmem:[#allocation5 + $0x8c] sm:$0xf]
    %v84 = vld [vmem:[#allocation5 + $0x90] sm:$0xff]
    %v85 = vld [vmem:[#allocation5 + $0x98] sm:$0xff]
    %v86 = vld [vmem:[#allocation5 + $0xa0] sm:$0xff]
    %v87 = vld [vmem:[#allocation5 + $0xa8] sm:$0xff]
    %v88 = vld [vmem:[#allocation5 + $0xb0] sm:$0xf]
    %v89 = vld [vmem:[#allocation5 + $0xb4] sm:$0xff]
    %v90 = vld [vmem:[#allocation5 + $0xbc] sm:$0xff]
    %v91 = vld [vmem:[#allocation5 + $0xc4] sm:$0xff]
    %v92 = vld [vmem:[#allocation5 + $0xcc] sm:$0xff]
    %v93 = vld [vmem:[#allocation5 + $0xd4] sm:$0xf]
    %v94 = vld [vmem:[#allocation5 + $0xd8] sm:$0xff]
    %v95 = vld [vmem:[#allocation5 + $0xe0] sm:$0xff]
    %v96 = vld [vmem:[#allocation5 + $0xe8] sm:$0xff]
    %v97 = vld [vmem:[#allocation5 + $0xf0] sm:$0xff]
    %v98 = vld [vmem:[#allocation5 + $0xf8] sm:$0xf]
    %v99 = vld [vmem:[#allocation5 + $0xfc] sm:$0xff]
    %v100 = vld [vmem:[#allocation5 + $0x104] sm:$0xff]
    %v101 = vld [vmem:[#allocation5 + $0x10c] sm:$0xff]
    %v102 = vld [vmem:[#allocation5 + $0x114] sm:$0xff]
    %v103 = vld [vmem:[#allocation5 + $0x11c] sm:$0xf]
    %v104 = vld [vmem:[#allocation5 + $0x120] sm:$0xff]
    %v105 = vld [vmem:[#allocation5 + $0x128] sm:$0xff]
    %v106 = vld [vmem:[#allocation5 + $0x130] sm:$0xff]
    %v107 = vld [vmem:[#allocation5 + $0x138] sm:$0xff]
    %v108 = vld [vmem:[#allocation5 + $0x140] sm:$0xf]
    %v109 = vld [vmem:[#allocation5 + $0x144] sm:$0xff]
    %v110 = vld [vmem:[#allocation5 + $0x14c] sm:$0xff]
    %v111 = vld [vmem:[#allocation5 + $0x154] sm:$0xff]
    %v112 = vld [vmem:[#allocation5 + $0x15c] sm:$0xff]
    %v113 = vld [vmem:[#allocation5 + $0x164] sm:$0xf]
    %v114 = vld [vmem:[#allocation5 + $0x168] sm:$0xff]
    %v115 = vld [vmem:[#allocation5 + $0x170] sm:$0xff]
    %v116 = vld [vmem:[#allocation5 + $0x178] sm:$0xff]
    %v117 = vld [vmem:[#allocation5 + $0x180] sm:$0xff]
    %v118 = vld [vmem:[#allocation5 + $0x188] sm:$0xf]
    %v119 = vld [vmem:[#allocation5 + $0x18c] sm:$0xff]
    %v120 = vld [vmem:[#allocation5 + $0x194] sm:$0xff]
    %v121 = vld [vmem:[#allocation5 + $0x19c] sm:$0xff]
    %v122 = vld [vmem:[#allocation5 + $0x1a4] sm:$0xff]
    %v123 = vld [vmem:[#allocation5 + $0x1ac] sm:$0xf]
    %v124 = vld [vmem:[#allocation5 + $0x1b0] sm:$0xff]
    %v125 = vld [vmem:[#allocation5 + $0x1b8] sm:$0xff]
    %v126 = vld [vmem:[#allocation5 + $0x1c0] sm:$0xff]
    %v127 = vld [vmem:[#allocation5 + $0x1c8] sm:$0xff]
    %v128 = vld [vmem:[#allocation5 + $0x1d0] sm:$0xf]
    %v129 = vld [vmem:[#allocation5 + $0x1d4] sm:$0xff]
    %v130 = vld [vmem:[#allocation5 + $0x1dc] sm:$0xff]
    %v131 = vld [vmem:[#allocation5 + $0x1e4] sm:$0xff]
    %v132 = vld [vmem:[#allocation5 + $0x1ec] sm:$0xff]
    %v133 = vld [vmem:[#allocation5 + $0x1f4] sm:$0xf]
    %v134 = vld [vmem:[#allocation5 + $0x1f8] sm:$0xff]
    %v135 = vld [vmem:[#allocation5 + $0x200] sm:$0xff]
    %v136 = vld [vmem:[#allocation5 + $0x208] sm:$0xff]
    %v137 = vld [vmem:[#allocation5 + $0x210] sm:$0xff]
    %v138 = vld [vmem:[#allocation5 + $0x218] sm:$0xf]
    %v139 = vld [vmem:[#allocation5 + $0x21c] sm:$0xff]
    %v140 = vld [vmem:[#allocation5 + $0x224] sm:$0xff]
    %v141 = vld [vmem:[#allocation5 + $0x22c] sm:$0xff]
    %v142 = vld [vmem:[#allocation5 + $0x234] sm:$0xff]
    %v143 = vld [vmem:[#allocation5 + $0x23c] sm:$0xf]
    %v144 = vld [vmem:[#allocation5 + $0x240] sm:$0xff]
    %v145 = vld [vmem:[#allocation5 + $0x248] sm:$0xff]
    %v146 = vld [vmem:[#allocation5 + $0x250] sm:$0xff]
    %v147 = vld [vmem:[#allocation5 + $0x258] sm:$0xff]
    %v148 = vld [vmem:[#allocation5 + $0x260] sm:$0xf]
    %v149 = vld [vmem:[#allocation5 + $0x264] sm:$0xff]
    %v150 = vld [vmem:[#allocation5 + $0x26c] sm:$0xff]
    %v151 = vld [vmem:[#allocation5 + $0x274] sm:$0xff]
    %v152 = vld [vmem:[#allocation5 + $0x27c] sm:$0xff]
    %v153 = vld [vmem:[#allocation5 + $0x284] sm:$0xf]
    %v154 = vld [vmem:[#allocation5 + $0x288] sm:$0xff]
    %v155 = vld [vmem:[#allocation5 + $0x290] sm:$0xff]
    %v156 = vld [vmem:[#allocation5 + $0x298] sm:$0xff]
    %v157 = vld [vmem:[#allocation5 + $0x2a0] sm:$0xff]
    %v158 = vld [vmem:[#allocation5 + $0x2a8] sm:$0xf]
    %v159 = vld [vmem:[#allocation5 + $0x2ac] sm:$0xff]
    %v160 = vld [vmem:[#allocation5 + $0x2b4] sm:$0xff]
    %v161 = vld [vmem:[#allocation5 + $0x2bc] sm:$0xff]
    %v162 = vld [vmem:[#allocation5 + $0x2c4] sm:$0xff]
    %v163 = vld [vmem:[#allocation5 + $0x2cc] sm:$0xf]
    %v164 = vld [vmem:[#allocation5 + $0x2d0] sm:$0xff]
    %v165 = vld [vmem:[#allocation5 + $0x2d8] sm:$0xff]
    %v166 = vld [vmem:[#allocation5 + $0x2e0] sm:$0xff]
    %v167 = vld [vmem:[#allocation5 + $0x2e8] sm:$0xff]
    %v168 = vld [vmem:[#allocation5 + $0x2f0] sm:$0xf]
    %v169 = vld [vmem:[#allocation5 + $0x2f4] sm:$0xff]
    %v170 = vld [vmem:[#allocation5 + $0x2fc] sm:$0xff]
    %v171 = vld [vmem:[#allocation5 + $0x304] sm:$0xff]
    %v172 = vld [vmem:[#allocation5 + $0x30c] sm:$0xff]
    %v173 = vld [vmem:[#allocation5 + $0x314] sm:$0xf]
    %v174 = vld [vmem:[#allocation5 + $0x318] sm:$0xff]
    %v175 = vld [vmem:[#allocation5 + $0x320] sm:$0xff]
    %v176 = vld [vmem:[#allocation5 + $0x328] sm:$0xff]
    %v177 = vld [vmem:[#allocation5 + $0x330] sm:$0xff]
    %v178 = vld [vmem:[#allocation5 + $0x338] sm:$0xf]
    %v179 = vld [vmem:[#allocation5 + $0x33c] sm:$0xff]
    %v180 = vld [vmem:[#allocation5 + $0x344] sm:$0xff]
    %v181 = vld [vmem:[#allocation5 + $0x34c] sm:$0xff]
    %v182 = vld [vmem:[#allocation5 + $0x354] sm:$0xff]
    %v183 = vld [vmem:[#allocation5 + $0x35c] sm:$0xf]
    %v184 = vld [vmem:[#allocation5 + $0x360] sm:$0xff]
    %v185 = vld [vmem:[#allocation5 + $0x368] sm:$0xff]
    %v186 = vld [vmem:[#allocation5 + $0x370] sm:$0xff]
    %v187 = vld [vmem:[#allocation5 + $0x378] sm:$0xff]
    %v188 = vld [vmem:[#allocation5 + $0x380] sm:$0xf]
    %v189 = vld [vmem:[#allocation5 + $0x384] sm:$0xff]
    %v190 = vld [vmem:[#allocation5 + $0x38c] sm:$0xff]
    %v191 = vld [vmem:[#allocation5 + $0x394] sm:$0xff]
    %v192 = vld [vmem:[#allocation5 + $0x39c] sm:$0xff]
    %v193 = vld [vmem:[#allocation5 + $0x3a4] sm:$0xf]
    %v194 = vld [vmem:[#allocation5 + $0x3a8] sm:$0xff]
    %v195 = vld [vmem:[#allocation5 + $0x3b0] sm:$0xff]
    %v196 = vld [vmem:[#allocation5 + $0x3b8] sm:$0xff]
    %v197 = vld [vmem:[#allocation5 + $0x3c0] sm:$0xff]
    %v198 = vld [vmem:[#allocation5 + $0x3c8] sm:$0xf]
    %v199 = vld [vmem:[#allocation5 + $0x3cc] sm:$0xff]
    %v200 = vld [vmem:[#allocation5 + $0x3d4] sm:$0xff]
    %v201 = vld [vmem:[#allocation5 + $0x3dc] sm:$0xff]
    %v202 = vld [vmem:[#allocation5 + $0x3e4] sm:$0xff]
    %v203 = vld [vmem:[#allocation5 + $0x3ec] sm:$0xf]
    %v204 = vld [vmem:[#allocation5 + $0x3f0] sm:$0xff]
    %v205 = vld [vmem:[#allocation5 + $0x3f8] sm:$0xff]
    %v206 = vld [vmem:[#allocation5 + $0x400] sm:$0xff]
    %v207 = vld [vmem:[#allocation5 + $0x408] sm:$0xff]
    %v208 = vld [vmem:[#allocation5 + $0x410] sm:$0xf]
    %v209 = vld [vmem:[#allocation5 + $0x414] sm:$0xff]
    %v210 = vld [vmem:[#allocation5 + $0x41c] sm:$0xff]
    %v211 = vld [vmem:[#allocation5 + $0x424] sm:$0xff]
    %v212 = vld [vmem:[#allocation5 + $0x42c] sm:$0xff]
    %v213 = vld [vmem:[#allocation5 + $0x434] sm:$0xf]
    %v214 = vld [vmem:[#allocation5 + $0x438] sm:$0xff]
    %v215 = vld [vmem:[#allocation5 + $0x440] sm:$0xff]
    %v216 = vld [vmem:[#allocation5 + $0x448] sm:$0xff]
    %v217 = vld [vmem:[#allocation5 + $0x450] sm:$0xff]
    %v218 = vld [vmem:[#allocation5 + $0x458] sm:$0xf]
    %v219 = vld [vmem:[#allocation5 + $0x45c] sm:$0xff]
    %v220 = vld [vmem:[#allocation5 + $0x464] sm:$0xff]
    %v221 = vld [vmem:[#allocation5 + $0x46c] sm:$0xff]
    %v222 = vld [vmem:[#allocation5 + $0x474] sm:$0xff]
    %v223 = vld [vmem:[#allocation5 + $0x47c] sm:$0xf]
    %v224 = vld [vmem:[#allocation5 + $0x480] sm:$0xff]
    %v225 = vld [vmem:[#allocation5 + $0x488] sm:$0xff]
    %v226 = vld [vmem:[#allocation5 + $0x490] sm:$0xff]
    %v227 = vld [vmem:[#allocation5 + $0x498] sm:$0xff]
    %v228 = vld [vmem:[#allocation5 + $0x4a0] sm:$0xf]
    %v229 = vld [vmem:[#allocation5 + $0x4a4] sm:$0xff]
    %v230 = vld [vmem:[#allocation5 + $0x4ac] sm:$0xff]
    %v231 = vld [vmem:[#allocation5 + $0x4b4] sm:$0xff]
    %v232 = vld [vmem:[#allocation5 + $0x4bc] sm:$0xff]
    %v233 = vld [vmem:[#allocation5 + $0x4c4] sm:$0xf]
    %v234 = vld [vmem:[#allocation5 + $0x4c8] sm:$0xff]
    %v235 = vld [vmem:[#allocation5 + $0x4d0] sm:$0xff]
    %v236 = vld [vmem:[#allocation5 + $0x4d8] sm:$0xff]
    %v237 = vld [vmem:[#allocation5 + $0x4e0] sm:$0xff]
    %v238 = vld [vmem:[#allocation5 + $0x4e8] sm:$0xf]
    %v239 = vld [vmem:[#allocation5 + $0x4ec] sm:$0xff]
    %v240 = vld [vmem:[#allocation5 + $0x4f4] sm:$0xff]
    %v241 = vld [vmem:[#allocation5 + $0x4fc] sm:$0xff]
    %v242 = vld [vmem:[#allocation5 + $0x504] sm:$0xff]
    %v243 = vld [vmem:[#allocation5 + $0x50c] sm:$0xf]
    %v244 = vld [vmem:[#allocation5 + $0x510] sm:$0xff]
    %v245 = vld [vmem:[#allocation5 + $0x518] sm:$0xff]
    %v246 = vld [vmem:[#allocation5 + $0x520] sm:$0xff]
    %v247 = vld [vmem:[#allocation5 + $0x528] sm:$0xff]
    %v248 = vld [vmem:[#allocation5 + $0x530] sm:$0xf]
    %v249 = vld [vmem:[#allocation5 + $0x534] sm:$0xff]
    %v250 = vld [vmem:[#allocation5 + $0x53c] sm:$0xff]
    %v251 = vld [vmem:[#allocation5 + $0x544] sm:$0xff]
    %v252 = vld [vmem:[#allocation5 + $0x54c] sm:$0xff]
    %v253 = vld [vmem:[#allocation5 + $0x554] sm:$0xf]
    %v254 = vld [vmem:[#allocation5 + $0x558] sm:$0xff]
    %v255 = vld [vmem:[#allocation5 + $0x560] sm:$0xff]
    %v256 = vld [vmem:[#allocation5 + $0x568] sm:$0xff]
    %v257 = vld [vmem:[#allocation5 + $0x570] sm:$0xff]
    %v258 = vld [vmem:[#allocation5 + $0x578] sm:$0xf]
    %v259 = vld [vmem:[#allocation5 + $0x57c] sm:$0xff]
    %v260 = vld [vmem:[#allocation5 + $0x584] sm:$0xff]
    %v261 = vld [vmem:[#allocation5 + $0x58c] sm:$0xff]
    %v262 = vld [vmem:[#allocation5 + $0x594] sm:$0xff]
    %v263 = vld [vmem:[#allocation5 + $0x59c] sm:$0xf]
    %v264 = vld [vmem:[#allocation5 + $0x5a0] sm:$0xff]
    %v265 = vld [vmem:[#allocation5 + $0x5a8] sm:$0xff]
    %v266 = vld [vmem:[#allocation5 + $0x5b0] sm:$0xff]
    %v267 = vld [vmem:[#allocation5 + $0x5b8] sm:$0xff]
    %v268 = vld [vmem:[#allocation5 + $0x5c0] sm:$0xf]
    %v269 = vld [vmem:[#allocation5 + $0x5c4] sm:$0xff]
    %v270 = vld [vmem:[#allocation5 + $0x5cc] sm:$0xff]
    %v271 = vld [vmem:[#allocation5 + $0x5d4] sm:$0xff]
    %v272 = vld [vmem:[#allocation5 + $0x5dc] sm:$0xff]
    %v273 = vld [vmem:[#allocation5 + $0x5e4] sm:$0xf]
    %v274 = vld [vmem:[#allocation5 + $0x5e8] sm:$0xff]
    %v275 = vld [vmem:[#allocation5 + $0x5f0] sm:$0xff]
    %v276 = vld [vmem:[#allocation5 + $0x5f8] sm:$0xff]
    %v277 = vld [vmem:[#allocation5 + $0x600] sm:$0xff]
    %v278 = vld [vmem:[#allocation5 + $0x608] sm:$0xf]
    %v279 = vld [vmem:[#allocation5 + $0x60c] sm:$0xff]
    %v280 = vld [vmem:[#allocation5 + $0x614] sm:$0xff]
    %v281 = vld [vmem:[#allocation5 + $0x61c] sm:$0xff]
    %v282 = vld [vmem:[#allocation5 + $0x624] sm:$0xff]
    %v283 = vld [vmem:[#allocation5 + $0x62c] sm:$0xf]
    %v284 = vld [vmem:[#allocation5 + $0x630] sm:$0xff]
    %v285 = vld [vmem:[#allocation5 + $0x638] sm:$0xff]
    %v286 = vld [vmem:[#allocation5 + $0x640] sm:$0xff]
    %v287 = vld [vmem:[#allocation5 + $0x648] sm:$0xff]
    %v288 = vld [vmem:[#allocation5 + $0x650] sm:$0xf]
    %v289 = vld [vmem:[#allocation5 + $0x654] sm:$0xff]
    %v290 = vld [vmem:[#allocation5 + $0x65c] sm:$0xff]
    %v291 = vld [vmem:[#allocation5 + $0x664] sm:$0xff]
    %v292 = vld [vmem:[#allocation5 + $0x66c] sm:$0xff]
    %v293 = vld [vmem:[#allocation5 + $0x674] sm:$0xf]
    %v294 = vld [vmem:[#allocation5 + $0x678] sm:$0xff]
    %v295 = vld [vmem:[#allocation5 + $0x680] sm:$0xff]
    %v296 = vld [vmem:[#allocation5 + $0x688] sm:$0xff]
    %v297 = vld [vmem:[#allocation5 + $0x690] sm:$0xff]
    %v298 = vld [vmem:[#allocation5 + $0x698] sm:$0xf]
    %v299 = vld [vmem:[#allocation5 + $0x69c] sm:$0xff]
    %v300 = vld [vmem:[#allocation5 + $0x6a4] sm:$0xff]
    %v301 = vld [vmem:[#allocation5 + $0x6ac] sm:$0xff]
    %v302 = vld [vmem:[#allocation5 + $0x6b4] sm:$0xff]
    %v303 = vld [vmem:[#allocation5 + $0x6bc] sm:$0xf]
    %v304 = vld [vmem:[#allocation7] sm:$0xff]
    %v305 = vld [vmem:[#allocation7 + $0x8] sm:$0xf]
    %v306 = vld [vmem:[#allocation7 + $0xc] sm:$0xff]
    %v307 = vld [vmem:[#allocation7 + $0x14] sm:$0xf]
    %v308 = vld [vmem:[#allocation7 + $0x18] sm:$0xff]
    %v309 = vld [vmem:[#allocation7 + $0x20] sm:$0xf]
    %v310 = vld [vmem:[#allocation7 + $0x24] sm:$0xff]
    %v311 = vld [vmem:[#allocation7 + $0x2c] sm:$0xf]
    %v312 = vld [vmem:[#allocation7 + $0x30] sm:$0xff]
    %v313 = vld [vmem:[#allocation7 + $0x38] sm:$0xf]
    %v314 = vld [vmem:[#allocation7 + $0x3c] sm:$0xff]
    %v315 = vld [vmem:[#allocation7 + $0x44] sm:$0xf]
    %v316 = vld [vmem:[#allocation7 + $0x48] sm:$0xff]
    %v317 = vld [vmem:[#allocation7 + $0x50] sm:$0xf]
    %v318 = vld [vmem:[#allocation7 + $0x54] sm:$0xff]
    %v319 = vld [vmem:[#allocation7 + $0x5c] sm:$0xf]
    %v320 = vld [vmem:[#allocation7 + $0x60] sm:$0xff]
    %v321 = vld [vmem:[#allocation7 + $0x68] sm:$0xf]
    %v322 = vld [vmem:[#allocation7 + $0x6c] sm:$0xff]
    %v323 = vld [vmem:[#allocation7 + $0x74] sm:$0xf]
    %v324 = vld [vmem:[#allocation7 + $0x78] sm:$0xff]
    %v325 = vld [vmem:[#allocation7 + $0x80] sm:$0xf]
    %v326 = vld [vmem:[#allocation7 + $0x84] sm:$0xff]
    %v327 = vld [vmem:[#allocation7 + $0x8c] sm:$0xf]
    %v328 = vld [vmem:[#allocation7 + $0x90] sm:$0xff]
    %v329 = vld [vmem:[#allocation7 + $0x98] sm:$0xf]
    %v330 = vld [vmem:[#allocation7 + $0x9c] sm:$0xff]
    %v331 = vld [vmem:[#allocation7 + $0xa4] sm:$0xf]
    %v332 = vld [vmem:[#allocation7 + $0xa8] sm:$0xff]
    %v333 = vld [vmem:[#allocation7 + $0xb0] sm:$0xf]
    %v334 = vld [vmem:[#allocation7 + $0xb4] sm:$0xff]
    %v335 = vld [vmem:[#allocation7 + $0xbc] sm:$0xf]
    %v336 = vld [vmem:[#allocation7 + $0xc0] sm:$0xff]
    %v337 = vld [vmem:[#allocation7 + $0xc8] sm:$0xf]
    %v338 = vld [vmem:[#allocation7 + $0xcc] sm:$0xff]
    %v339 = vld [vmem:[#allocation7 + $0xd4] sm:$0xf]
    %v340 = vld [vmem:[#allocation7 + $0xd8] sm:$0xff]
    %v341 = vld [vmem:[#allocation7 + $0xe0] sm:$0xf]
    %v342 = vld [vmem:[#allocation7 + $0xe4] sm:$0xff]
    %v343 = vld [vmem:[#allocation7 + $0xec] sm:$0xf]
    %v344 = vld [vmem:[#allocation7 + $0xf0] sm:$0xff]
    %v345 = vld [vmem:[#allocation7 + $0xf8] sm:$0xf]
    %v346 = vld [vmem:[#allocation7 + $0xfc] sm:$0xff]
    %v347 = vld [vmem:[#allocation7 + $0x104] sm:$0xf]
    %v348 = vld [vmem:[#allocation7 + $0x108] sm:$0xff]
    %v349 = vld [vmem:[#allocation7 + $0x110] sm:$0xf]
    %v350 = vld [vmem:[#allocation7 + $0x114] sm:$0xff]
    %v351 = vld [vmem:[#allocation7 + $0x11c] sm:$0xf]
    %v352 = vld [vmem:[#allocation7 + $0x120] sm:$0xff]
    %v353 = vld [vmem:[#allocation7 + $0x128] sm:$0xf]
    %v354 = vld [vmem:[#allocation7 + $0x12c] sm:$0xff]
    %v355 = vld [vmem:[#allocation7 + $0x134] sm:$0xf]
    %v356 = vld [vmem:[#allocation7 + $0x138] sm:$0xff]
    %v357 = vld [vmem:[#allocation7 + $0x140] sm:$0xf]
    %v358 = vld [vmem:[#allocation7 + $0x144] sm:$0xff]
    %v359 = vld [vmem:[#allocation7 + $0x14c] sm:$0xf]
    %v360 = vld [vmem:[#allocation7 + $0x150] sm:$0xff]
    %v361 = vld [vmem:[#allocation7 + $0x158] sm:$0xf]
    %v362 = vld [vmem:[#allocation7 + $0x15c] sm:$0xff]
    %v363 = vld [vmem:[#allocation7 + $0x164] sm:$0xf]
    %v364 = vld [vmem:[#allocation7 + $0x168] sm:$0xff]
    %v365 = vld [vmem:[#allocation7 + $0x170] sm:$0xf]
    %v366 = vld [vmem:[#allocation7 + $0x174] sm:$0xff]
    %v367 = vld [vmem:[#allocation7 + $0x17c] sm:$0xf]
    %v368 = vld [vmem:[#allocation7 + $0x180] sm:$0xff]
    %v369 = vld [vmem:[#allocation7 + $0x188] sm:$0xf]
    %v370 = vld [vmem:[#allocation7 + $0x18c] sm:$0xff]
    %v371 = vld [vmem:[#allocation7 + $0x194] sm:$0xf]
    %v372 = vld [vmem:[#allocation7 + $0x198] sm:$0xff]
    %v373 = vld [vmem:[#allocation7 + $0x1a0] sm:$0xf]
    %v374 = vld [vmem:[#allocation7 + $0x1a4] sm:$0xff]
    %v375 = vld [vmem:[#allocation7 + $0x1ac] sm:$0xf]
    %v376 = vld [vmem:[#allocation7 + $0x1b0] sm:$0xff]
    %v377 = vld [vmem:[#allocation7 + $0x1b8] sm:$0xf]
    %v378 = vld [vmem:[#allocation7 + $0x1bc] sm:$0xff]
    %v379 = vld [vmem:[#allocation7 + $0x1c4] sm:$0xf]
    %v380 = vld [vmem:[#allocation7 + $0x1c8] sm:$0xff]
    %v381 = vld [vmem:[#allocation7 + $0x1d0] sm:$0xf]
    %v382 = vld [vmem:[#allocation7 + $0x1d4] sm:$0xff]
    %v383 = vld [vmem:[#allocation7 + $0x1dc] sm:$0xf]
    %v384 = vld [vmem:[#allocation7 + $0x1e0] sm:$0xff]
    %v385 = vld [vmem:[#allocation7 + $0x1e8] sm:$0xf]
    %v386 = vld [vmem:[#allocation7 + $0x1ec] sm:$0xff]
    %v387 = vld [vmem:[#allocation7 + $0x1f4] sm:$0xf]
    %v388 = vld [vmem:[#allocation7 + $0x1f8] sm:$0xff]
    %v389 = vld [vmem:[#allocation7 + $0x200] sm:$0xf]
    %v390 = vld [vmem:[#allocation7 + $0x204] sm:$0xff]
    %v391 = vld [vmem:[#allocation7 + $0x20c] sm:$0xf]
    %v392 = vld [vmem:[#allocation7 + $0x210] sm:$0xff]
    %v393 = vld [vmem:[#allocation7 + $0x218] sm:$0xf]
    %v394 = vld [vmem:[#allocation7 + $0x21c] sm:$0xff]
    %v395 = vld [vmem:[#allocation7 + $0x224] sm:$0xf]
    %v396 = vld [vmem:[#allocation7 + $0x228] sm:$0xff]
    %v397 = vld [vmem:[#allocation7 + $0x230] sm:$0xf]
    %v398 = vld [vmem:[#allocation7 + $0x234] sm:$0xff]
    %v399 = vld [vmem:[#allocation7 + $0x23c] sm:$0xf]
    %v400 = vld [vmem:[%s3] sm:$0x7]
    %v405 = vunpack.c.l.b16 %v60
    %v406 = vunpack.c.h.b16 %v60
    %v407 = vunpack.c.l.b16 %v61
    %v408 = vunpack.c.l.b16 %v62
    %v409 = vunpack.c.h.b16 %v62
    %v410 = vunpack.c.l.b16 %v63
    %v411 = vpack.c.b16 %v408, %v405
    %v412 = vpack.c.b16 %v409, %v406
    %v413 = vpack.c.b16 %v410, %v407
    %v657 = vunpack.c.l.b16 %v64
    %v658 = vunpack.c.h.b16 %v64
    %v659 = vunpack.c.l.b16 %v65
    %v660 = vunpack.c.h.b16 %v65
    %v661 = vunpack.c.l.b16 %v66
    %v662 = vunpack.c.h.b16 %v66
    %v663 = vunpack.c.l.b16 %v67
    %v664 = vunpack.c.h.b16 %v67
    %v665 = vunpack.c.l.b16 %v68
    %v666 = vunpack.c.l.b16 %v69
    %v667 = vunpack.c.h.b16 %v69
    %v668 = vunpack.c.l.b16 %v70
    %v669 = vunpack.c.h.b16 %v70
    %v670 = vunpack.c.l.b16 %v71
    %v671 = vunpack.c.h.b16 %v71
    %v672 = vunpack.c.l.b16 %v72
    %v673 = vunpack.c.h.b16 %v72
    %v674 = vunpack.c.l.b16 %v73
    %v675 = vunpack.c.l.b16 %v74
    %v676 = vunpack.c.h.b16 %v74
    %v677 = vunpack.c.l.b16 %v75
    %v678 = vunpack.c.h.b16 %v75
    %v679 = vunpack.c.l.b16 %v76
    %v680 = vunpack.c.h.b16 %v76
    %v681 = vunpack.c.l.b16 %v77
    %v682 = vunpack.c.h.b16 %v77
    %v683 = vunpack.c.l.b16 %v78
    %v684 = vunpack.c.l.b16 %v79
    %v685 = vunpack.c.h.b16 %v79
    %v686 = vunpack.c.l.b16 %v80
    %v687 = vunpack.c.h.b16 %v80
    %v688 = vunpack.c.l.b16 %v81
    %v689 = vunpack.c.h.b16 %v81
    %v690 = vunpack.c.l.b16 %v82
    %v691 = vunpack.c.h.b16 %v82
    %v692 = vunpack.c.l.b16 %v83
    %v693 = vunpack.c.l.b16 %v84
    %v694 = vunpack.c.h.b16 %v84
    %v695 = vunpack.c.l.b16 %v85
    %v696 = vunpack.c.h.b16 %v85
    %v697 = vunpack.c.l.b16 %v86
    %v698 = vunpack.c.h.b16 %v86
    %v699 = vunpack.c.l.b16 %v87
    %v700 = vunpack.c.h.b16 %v87
    %v701 = vunpack.c.l.b16 %v88
    %v702 = vunpack.c.l.b16 %v89
    %v703 = vunpack.c.h.b16 %v89
    %v704 = vunpack.c.l.b16 %v90
    %v705 = vunpack.c.h.b16 %v90
    %v706 = vunpack.c.l.b16 %v91
    %v707 = vunpack.c.h.b16 %v91
    %v708 = vunpack.c.l.b16 %v92
    %v709 = vunpack.c.h.b16 %v92
    %v710 = vunpack.c.l.b16 %v93
    %v711 = vunpack.c.l.b16 %v94
    %v712 = vunpack.c.h.b16 %v94
    %v713 = vunpack.c.l.b16 %v95
    %v714 = vunpack.c.h.b16 %v95
    %v715 = vunpack.c.l.b16 %v96
    %v716 = vunpack.c.h.b16 %v96
    %v717 = vunpack.c.l.b16 %v97
    %v718 = vunpack.c.h.b16 %v97
    %v719 = vunpack.c.l.b16 %v98
    %v720 = vunpack.c.l.b16 %v99
    %v721 = vunpack.c.h.b16 %v99
    %v722 = vunpack.c.l.b16 %v100
    %v723 = vunpack.c.h.b16 %v100
    %v724 = vunpack.c.l.b16 %v101
    %v725 = vunpack.c.h.b16 %v101
    %v726 = vunpack.c.l.b16 %v102
    %v727 = vunpack.c.h.b16 %v102
    %v728 = vunpack.c.l.b16 %v103
    %v729 = vunpack.c.l.b16 %v104
    %v730 = vunpack.c.h.b16 %v104
    %v731 = vunpack.c.l.b16 %v105
    %v732 = vunpack.c.h.b16 %v105
    %v733 = vunpack.c.l.b16 %v106
    %v734 = vunpack.c.h.b16 %v106
    %v735 = vunpack.c.l.b16 %v107
    %v736 = vunpack.c.h.b16 %v107
    %v737 = vunpack.c.l.b16 %v108
    %v738 = vunpack.c.l.b16 %v109
    %v739 = vunpack.c.h.b16 %v109
    %v740 = vunpack.c.l.b16 %v110
    %v741 = vunpack.c.h.b16 %v110
    %v742 = vunpack.c.l.b16 %v111
    %v743 = vunpack.c.h.b16 %v111
    %v744 = vunpack.c.l.b16 %v112
    %v745 = vunpack.c.h.b16 %v112
    %v746 = vunpack.c.l.b16 %v113
    %v747 = vunpack.c.l.b16 %v114
    %v748 = vunpack.c.h.b16 %v114
    %v749 = vunpack.c.l.b16 %v115
    %v750 = vunpack.c.h.b16 %v115
    %v751 = vunpack.c.l.b16 %v116
    %v752 = vunpack.c.h.b16 %v116
    %v753 = vunpack.c.l.b16 %v117
    %v754 = vunpack.c.h.b16 %v117
    %v755 = vunpack.c.l.b16 %v118
    %v756 = vunpack.c.l.b16 %v119
    %v757 = vunpack.c.h.b16 %v119
    %v758 = vunpack.c.l.b16 %v120
    %v759 = vunpack.c.h.b16 %v120
    %v760 = vunpack.c.l.b16 %v121
    %v761 = vunpack.c.h.b16 %v121
    %v762 = vunpack.c.l.b16 %v122
    %v763 = vunpack.c.h.b16 %v122
    %v764 = vunpack.c.l.b16 %v123
    %v765 = vunpack.c.l.b16 %v124
    %v766 = vunpack.c.h.b16 %v124
    %v767 = vunpack.c.l.b16 %v125
    %v768 = vunpack.c.h.b16 %v125
    %v769 = vunpack.c.l.b16 %v126
    %v770 = vunpack.c.h.b16 %v126
    %v771 = vunpack.c.l.b16 %v127
    %v772 = vunpack.c.h.b16 %v127
    %v773 = vunpack.c.l.b16 %v128
    %v774 = vunpack.c.l.b16 %v129
    %v775 = vunpack.c.h.b16 %v129
    %v776 = vunpack.c.l.b16 %v130
    %v777 = vunpack.c.h.b16 %v130
    %v778 = vunpack.c.l.b16 %v131
    %v779 = vunpack.c.h.b16 %v131
    %v780 = vunpack.c.l.b16 %v132
    %v781 = vunpack.c.h.b16 %v132
    %v782 = vunpack.c.l.b16 %v133
    %v783 = vunpack.c.l.b16 %v134
    %v784 = vunpack.c.h.b16 %v134
    %v785 = vunpack.c.l.b16 %v135
    %v786 = vunpack.c.h.b16 %v135
    %v787 = vunpack.c.l.b16 %v136
    %v788 = vunpack.c.h.b16 %v136
    %v789 = vunpack.c.l.b16 %v137
    %v790 = vunpack.c.h.b16 %v137
    %v791 = vunpack.c.l.b16 %v138
    %v792 = vunpack.c.l.b16 %v139
    %v793 = vunpack.c.h.b16 %v139
    %v794 = vunpack.c.l.b16 %v140
    %v795 = vunpack.c.h.b16 %v140
    %v796 = vunpack.c.l.b16 %v141
    %v797 = vunpack.c.h.b16 %v141
    %v798 = vunpack.c.l.b16 %v142
    %v799 = vunpack.c.h.b16 %v142
    %v800 = vunpack.c.l.b16 %v143
    %v801 = vunpack.c.l.b16 %v144
    %v802 = vunpack.c.h.b16 %v144
    %v803 = vunpack.c.l.b16 %v145
    %v804 = vunpack.c.h.b16 %v145
    %v805 = vunpack.c.l.b16 %v146
    %v806 = vunpack.c.h.b16 %v146
    %v807 = vunpack.c.l.b16 %v147
    %v808 = vunpack.c.h.b16 %v147
    %v809 = vunpack.c.l.b16 %v148
    %v810 = vunpack.c.l.b16 %v149
    %v811 = vunpack.c.h.b16 %v149
    %v812 = vunpack.c.l.b16 %v150
    %v813 = vunpack.c.h.b16 %v150
    %v814 = vunpack.c.l.b16 %v151
    %v815 = vunpack.c.h.b16 %v151
    %v816 = vunpack.c.l.b16 %v152
    %v817 = vunpack.c.h.b16 %v152
    %v818 = vunpack.c.l.b16 %v153
    %v819 = vunpack.c.l.b16 %v154
    %v820 = vunpack.c.h.b16 %v154
    %v821 = vunpack.c.l.b16 %v155
    %v822 = vunpack.c.h.b16 %v155
    %v823 = vunpack.c.l.b16 %v156
    %v824 = vunpack.c.h.b16 %v156
    %v825 = vunpack.c.l.b16 %v157
    %v826 = vunpack.c.h.b16 %v157
    %v827 = vunpack.c.l.b16 %v158
    %v828 = vunpack.c.l.b16 %v159
    %v829 = vunpack.c.h.b16 %v159
    %v830 = vunpack.c.l.b16 %v160
    %v831 = vunpack.c.h.b16 %v160
    %v832 = vunpack.c.l.b16 %v161
    %v833 = vunpack.c.h.b16 %v161
    %v834 = vunpack.c.l.b16 %v162
    %v835 = vunpack.c.h.b16 %v162
    %v836 = vunpack.c.l.b16 %v163
    %v837 = vunpack.c.l.b16 %v164
    %v838 = vunpack.c.h.b16 %v164
    %v839 = vunpack.c.l.b16 %v165
    %v840 = vunpack.c.h.b16 %v165
    %v841 = vunpack.c.l.b16 %v166
    %v842 = vunpack.c.h.b16 %v166
    %v843 = vunpack.c.l.b16 %v167
    %v844 = vunpack.c.h.b16 %v167
    %v845 = vunpack.c.l.b16 %v168
    %v846 = vunpack.c.l.b16 %v169
    %v847 = vunpack.c.h.b16 %v169
    %v848 = vunpack.c.l.b16 %v170
    %v849 = vunpack.c.h.b16 %v170
    %v850 = vunpack.c.l.b16 %v171
    %v851 = vunpack.c.h.b16 %v171
    %v852 = vunpack.c.l.b16 %v172
    %v853 = vunpack.c.h.b16 %v172
    %v854 = vunpack.c.l.b16 %v173
    %v855 = vunpack.c.l.b16 %v174
    %v856 = vunpack.c.h.b16 %v174
    %v857 = vunpack.c.l.b16 %v175
    %v858 = vunpack.c.h.b16 %v175
    %v859 = vunpack.c.l.b16 %v176
    %v860 = vunpack.c.h.b16 %v176
    %v861 = vunpack.c.l.b16 %v177
    %v862 = vunpack.c.h.b16 %v177
    %v863 = vunpack.c.l.b16 %v178
    %v864 = vunpack.c.l.b16 %v179
    %v865 = vunpack.c.h.b16 %v179
    %v866 = vunpack.c.l.b16 %v180
    %v867 = vunpack.c.h.b16 %v180
    %v868 = vunpack.c.l.b16 %v181
    %v869 = vunpack.c.h.b16 %v181
    %v870 = vunpack.c.l.b16 %v182
    %v871 = vunpack.c.h.b16 %v182
    %v872 = vunpack.c.l.b16 %v183
    %v873 = vunpack.c.l.b16 %v184
    %v874 = vunpack.c.h.b16 %v184
    %v875 = vunpack.c.l.b16 %v185
    %v876 = vunpack.c.h.b16 %v185
    %v877 = vunpack.c.l.b16 %v186
    %v878 = vunpack.c.h.b16 %v186
    %v879 = vunpack.c.l.b16 %v187
    %v880 = vunpack.c.h.b16 %v187
    %v881 = vunpack.c.l.b16 %v188
    %v882 = vunpack.c.l.b16 %v189
    %v883 = vunpack.c.h.b16 %v189
    %v884 = vunpack.c.l.b16 %v190
    %v885 = vunpack.c.h.b16 %v190
    %v886 = vunpack.c.l.b16 %v191
    %v887 = vunpack.c.h.b16 %v191
    %v888 = vunpack.c.l.b16 %v192
    %v889 = vunpack.c.h.b16 %v192
    %v890 = vunpack.c.l.b16 %v193
    %v891 = vunpack.c.l.b16 %v194
    %v892 = vunpack.c.h.b16 %v194
    %v893 = vunpack.c.l.b16 %v195
    %v894 = vunpack.c.h.b16 %v195
    %v895 = vunpack.c.l.b16 %v196
    %v896 = vunpack.c.h.b16 %v196
    %v897 = vunpack.c.l.b16 %v197
    %v898 = vunpack.c.h.b16 %v197
    %v899 = vunpack.c.l.b16 %v198
    %v900 = vunpack.c.l.b16 %v199
    %v901 = vunpack.c.h.b16 %v199
    %v902 = vunpack.c.l.b16 %v200
    %v903 = vunpack.c.h.b16 %v200
    %v904 = vunpack.c.l.b16 %v201
    %v905 = vunpack.c.h.b16 %v201
    %v906 = vunpack.c.l.b16 %v202
    %v907 = vunpack.c.h.b16 %v202
    %v908 = vunpack.c.l.b16 %v203
    %v909 = vunpack.c.l.b16 %v204
    %v910 = vunpack.c.h.b16 %v204
    %v911 = vunpack.c.l.b16 %v205
    %v912 = vunpack.c.h.b16 %v205
    %v913 = vunpack.c.l.b16 %v206
    %v914 = vunpack.c.h.b16 %v206
    %v915 = vunpack.c.l.b16 %v207
    %v916 = vunpack.c.h.b16 %v207
    %v917 = vunpack.c.l.b16 %v208
    %v918 = vunpack.c.l.b16 %v209
    %v919 = vunpack.c.h.b16 %v209
    %v920 = vunpack.c.l.b16 %v210
    %v921 = vunpack.c.h.b16 %v210
    %v922 = vunpack.c.l.b16 %v211
    %v923 = vunpack.c.h.b16 %v211
    %v924 = vunpack.c.l.b16 %v212
    %v925 = vunpack.c.h.b16 %v212
    %v926 = vunpack.c.l.b16 %v213
    %v927 = vunpack.c.l.b16 %v214
    %v928 = vunpack.c.h.b16 %v214
    %v929 = vunpack.c.l.b16 %v215
    %v930 = vunpack.c.h.b16 %v215
    %v931 = vunpack.c.l.b16 %v216
    %v932 = vunpack.c.h.b16 %v216
    %v933 = vunpack.c.l.b16 %v217
    %v934 = vunpack.c.h.b16 %v217
    %v935 = vunpack.c.l.b16 %v218
    %v936 = vunpack.c.l.b16 %v219
    %v937 = vunpack.c.h.b16 %v219
    %v938 = vunpack.c.l.b16 %v220
    %v939 = vunpack.c.h.b16 %v220
    %v940 = vunpack.c.l.b16 %v221
    %v941 = vunpack.c.h.b16 %v221
    %v942 = vunpack.c.l.b16 %v222
    %v943 = vunpack.c.h.b16 %v222
    %v944 = vunpack.c.l.b16 %v223
    %v945 = vunpack.c.l.b16 %v224
    %v946 = vunpack.c.h.b16 %v224
    %v947 = vunpack.c.l.b16 %v225
    %v948 = vunpack.c.h.b16 %v225
    %v949 = vunpack.c.l.b16 %v226
    %v950 = vunpack.c.h.b16 %v226
    %v951 = vunpack.c.l.b16 %v227
    %v952 = vunpack.c.h.b16 %v227
    %v953 = vunpack.c.l.b16 %v228
    %v954 = vunpack.c.l.b16 %v229
    %v955 = vunpack.c.h.b16 %v229
    %v956 = vunpack.c.l.b16 %v230
    %v957 = vunpack.c.h.b16 %v230
    %v958 = vunpack.c.l.b16 %v231
    %v959 = vunpack.c.h.b16 %v231
    %v960 = vunpack.c.l.b16 %v232
    %v961 = vunpack.c.h.b16 %v232
    %v962 = vunpack.c.l.b16 %v233
    %v963 = vunpack.c.l.b16 %v234
    %v964 = vunpack.c.h.b16 %v234
    %v965 = vunpack.c.l.b16 %v235
    %v966 = vunpack.c.h.b16 %v235
    %v967 = vunpack.c.l.b16 %v236
    %v968 = vunpack.c.h.b16 %v236
    %v969 = vunpack.c.l.b16 %v237
    %v970 = vunpack.c.h.b16 %v237
    %v971 = vunpack.c.l.b16 %v238
    %v972 = vunpack.c.l.b16 %v239
    %v973 = vunpack.c.h.b16 %v239
    %v974 = vunpack.c.l.b16 %v240
    %v975 = vunpack.c.h.b16 %v240
    %v976 = vunpack.c.l.b16 %v241
    %v977 = vunpack.c.h.b16 %v241
    %v978 = vunpack.c.l.b16 %v242
    %v979 = vunpack.c.h.b16 %v242
    %v980 = vunpack.c.l.b16 %v243
    %v981 = vunpack.c.l.b16 %v244
    %v982 = vunpack.c.h.b16 %v244
    %v983 = vunpack.c.l.b16 %v245
    %v984 = vunpack.c.h.b16 %v245
    %v985 = vunpack.c.l.b16 %v246
    %v986 = vunpack.c.h.b16 %v246
    %v987 = vunpack.c.l.b16 %v247
    %v988 = vunpack.c.h.b16 %v247
    %v989 = vunpack.c.l.b16 %v248
    %v990 = vunpack.c.l.b16 %v249
    %v991 = vunpack.c.h.b16 %v249
    %v992 = vunpack.c.l.b16 %v250
    %v993 = vunpack.c.h.b16 %v250
    %v994 = vunpack.c.l.b16 %v251
    %v995 = vunpack.c.h.b16 %v251
    %v996 = vunpack.c.l.b16 %v252
    %v997 = vunpack.c.h.b16 %v252
    %v998 = vunpack.c.l.b16 %v253
    %v999 = vunpack.c.l.b16 %v254
    %v1000 = vunpack.c.h.b16 %v254
    %v1001 = vunpack.c.l.b16 %v255
    %v1002 = vunpack.c.h.b16 %v255
    %v1003 = vunpack.c.l.b16 %v256
    %v1004 = vunpack.c.h.b16 %v256
    %v1005 = vunpack.c.l.b16 %v257
    %v1006 = vunpack.c.h.b16 %v257
    %v1007 = vunpack.c.l.b16 %v258
    %v1008 = vunpack.c.l.b16 %v259
    %v1009 = vunpack.c.h.b16 %v259
    %v1010 = vunpack.c.l.b16 %v260
    %v1011 = vunpack.c.h.b16 %v260
    %v1012 = vunpack.c.l.b16 %v261
    %v1013 = vunpack.c.h.b16 %v261
    %v1014 = vunpack.c.l.b16 %v262
    %v1015 = vunpack.c.h.b16 %v262
    %v1016 = vunpack.c.l.b16 %v263
    %v1017 = vunpack.c.l.b16 %v264
    %v1018 = vunpack.c.h.b16 %v264
    %v1019 = vunpack.c.l.b16 %v265
    %v1020 = vunpack.c.h.b16 %v265
    %v1021 = vunpack.c.l.b16 %v266
    %v1022 = vunpack.c.h.b16 %v266
    %v1023 = vunpack.c.l.b16 %v267
    %v1024 = vunpack.c.h.b16 %v267
    %v1025 = vunpack.c.l.b16 %v268
    %v1026 = vunpack.c.l.b16 %v269
    %v1027 = vunpack.c.h.b16 %v269
    %v1028 = vunpack.c.l.b16 %v270
    %v1029 = vunpack.c.h.b16 %v270
    %v1030 = vunpack.c.l.b16 %v271
    %v1031 = vunpack.c.h.b16 %v271
    %v1032 = vunpack.c.l.b16 %v272
    %v1033 = vunpack.c.h.b16 %v272
    %v1034 = vunpack.c.l.b16 %v273
    %v1035 = vunpack.c.l.b16 %v274
    %v1036 = vunpack.c.h.b16 %v274
    %v1037 = vunpack.c.l.b16 %v275
    %v1038 = vunpack.c.h.b16 %v275
    %v1039 = vunpack.c.l.b16 %v276
    %v1040 = vunpack.c.h.b16 %v276
    %v1041 = vunpack.c.l.b16 %v277
    %v1042 = vunpack.c.h.b16 %v277
    %v1043 = vunpack.c.l.b16 %v278
    %v1044 = vunpack.c.l.b16 %v279
    %v1045 = vunpack.c.h.b16 %v279
    %v1046 = vunpack.c.l.b16 %v280
    %v1047 = vunpack.c.h.b16 %v280
    %v1048 = vunpack.c.l.b16 %v281
    %v1049 = vunpack.c.h.b16 %v281
    %v1050 = vunpack.c.l.b16 %v282
    %v1051 = vunpack.c.h.b16 %v282
    %v1052 = vunpack.c.l.b16 %v283
    %v1053 = vunpack.c.l.b16 %v284
    %v1054 = vunpack.c.h.b16 %v284
    %v1055 = vunpack.c.l.b16 %v285
    %v1056 = vunpack.c.h.b16 %v285
    %v1057 = vunpack.c.l.b16 %v286
    %v1058 = vunpack.c.h.b16 %v286
    %v1059 = vunpack.c.l.b16 %v287
    %v1060 = vunpack.c.h.b16 %v287
    %v1061 = vunpack.c.l.b16 %v288
    %v1062 = vunpack.c.l.b16 %v289
    %v1063 = vunpack.c.h.b16 %v289
    %v1064 = vunpack.c.l.b16 %v290
    %v1065 = vunpack.c.h.b16 %v290
    %v1066 = vunpack.c.l.b16 %v291
    %v1067 = vunpack.c.h.b16 %v291
    %v1068 = vunpack.c.l.b16 %v292
    %v1069 = vunpack.c.h.b16 %v292
    %v1070 = vunpack.c.l.b16 %v293
    %v1071 = vunpack.c.l.b16 %v294
    %v1072 = vunpack.c.h.b16 %v294
    %v1073 = vunpack.c.l.b16 %v295
    %v1074 = vunpack.c.h.b16 %v295
    %v1075 = vunpack.c.l.b16 %v296
    %v1076 = vunpack.c.h.b16 %v296
    %v1077 = vunpack.c.l.b16 %v297
    %v1078 = vunpack.c.h.b16 %v297
    %v1079 = vunpack.c.l.b16 %v298
    %v1080 = vunpack.c.l.b16 %v299
    %v1081 = vunpack.c.h.b16 %v299
    %v1082 = vunpack.c.l.b16 %v300
    %v1083 = vunpack.c.h.b16 %v300
    %v1084 = vunpack.c.l.b16 %v301
    %v1085 = vunpack.c.h.b16 %v301
    %v1086 = vunpack.c.l.b16 %v302
    %v1087 = vunpack.c.h.b16 %v302
    %v1088 = vunpack.c.l.b16 %v303
    %v1089 = vpack.c.b16 %v666, %v657
    %v1090 = vpack.c.b16 %v667, %v658
    %v1091 = vpack.c.b16 %v668, %v659
    %v1092 = vpack.c.b16 %v669, %v660
    %v1093 = vpack.c.b16 %v670, %v661
    %v1094 = vpack.c.b16 %v671, %v662
    %v1095 = vpack.c.b16 %v672, %v663
    %v1096 = vpack.c.b16 %v673, %v664
    %v1097 = vpack.c.b16 %v674, %v665
    %v1098 = vpack.c.b16 %v684, %v675
    %v1099 = vpack.c.b16 %v685, %v676
    %v1100 = vpack.c.b16 %v686, %v677
    %v1101 = vpack.c.b16 %v687, %v678
    %v1102 = vpack.c.b16 %v688, %v679
    %v1103 = vpack.c.b16 %v689, %v680
    %v1104 = vpack.c.b16 %v690, %v681
    %v1105 = vpack.c.b16 %v691, %v682
    %v1106 = vpack.c.b16 %v692, %v683
    %v1107 = vpack.c.b16 %v702, %v693
    %v1108 = vpack.c.b16 %v703, %v694
    %v1109 = vpack.c.b16 %v704, %v695
    %v1110 = vpack.c.b16 %v705, %v696
    %v1111 = vpack.c.b16 %v706, %v697
    %v1112 = vpack.c.b16 %v707, %v698
    %v1113 = vpack.c.b16 %v708, %v699
    %v1114 = vpack.c.b16 %v709, %v700
    %v1115 = vpack.c.b16 %v710, %v701
    %v1116 = vpack.c.b16 %v720, %v711
    %v1117 = vpack.c.b16 %v721, %v712
    %v1118 = vpack.c.b16 %v722, %v713
    %v1119 = vpack.c.b16 %v723, %v714
    %v1120 = vpack.c.b16 %v724, %v715
    %v1121 = vpack.c.b16 %v725, %v716
    %v1122 = vpack.c.b16 %v726, %v717
    %v1123 = vpack.c.b16 %v727, %v718
    %v1124 = vpack.c.b16 %v728, %v719
    %v1125 = vpack.c.b16 %v738, %v729
    %v1126 = vpack.c.b16 %v739, %v730
    %v1127 = vpack.c.b16 %v740, %v731
    %v1128 = vpack.c.b16 %v741, %v732
    %v1129 = vpack.c.b16 %v742, %v733
    %v1130 = vpack.c.b16 %v743, %v734
    %v1131 = vpack.c.b16 %v744, %v735
    %v1132 = vpack.c.b16 %v745, %v736
    %v1133 = vpack.c.b16 %v746, %v737
    %v1134 = vpack.c.b16 %v756, %v747
    %v1135 = vpack.c.b16 %v757, %v748
    %v1136 = vpack.c.b16 %v758, %v749
    %v1137 = vpack.c.b16 %v759, %v750
    %v1138 = vpack.c.b16 %v760, %v751
    %v1139 = vpack.c.b16 %v761, %v752
    %v1140 = vpack.c.b16 %v762, %v753
    %v1141 = vpack.c.b16 %v763, %v754
    %v1142 = vpack.c.b16 %v764, %v755
    %v1143 = vpack.c.b16 %v774, %v765
    %v1144 = vpack.c.b16 %v775, %v766
    %v1145 = vpack.c.b16 %v776, %v767
    %v1146 = vpack.c.b16 %v777, %v768
    %v1147 = vpack.c.b16 %v778, %v769
    %v1148 = vpack.c.b16 %v779, %v770
    %v1149 = vpack.c.b16 %v780, %v771
    %v1150 = vpack.c.b16 %v781, %v772
    %v1151 = vpack.c.b16 %v782, %v773
    %v1152 = vpack.c.b16 %v792, %v783
    %v1153 = vpack.c.b16 %v793, %v784
    %v1154 = vpack.c.b16 %v794, %v785
    %v1155 = vpack.c.b16 %v795, %v786
    %v1156 = vpack.c.b16 %v796, %v787
    %v1157 = vpack.c.b16 %v797, %v788
    %v1158 = vpack.c.b16 %v798, %v789
    %v1159 = vpack.c.b16 %v799, %v790
    %v1160 = vpack.c.b16 %v800, %v791
    %v1161 = vpack.c.b16 %v810, %v801
    %v1162 = vpack.c.b16 %v811, %v802
    %v1163 = vpack.c.b16 %v812, %v803
    %v1164 = vpack.c.b16 %v813, %v804
    %v1165 = vpack.c.b16 %v814, %v805
    %v1166 = vpack.c.b16 %v815, %v806
    %v1167 = vpack.c.b16 %v816, %v807
    %v1168 = vpack.c.b16 %v817, %v808
    %v1169 = vpack.c.b16 %v818, %v809
    %v1170 = vpack.c.b16 %v828, %v819
    %v1171 = vpack.c.b16 %v829, %v820
    %v1172 = vpack.c.b16 %v830, %v821
    %v1173 = vpack.c.b16 %v831, %v822
    %v1174 = vpack.c.b16 %v832, %v823
    %v1175 = vpack.c.b16 %v833, %v824
    %v1176 = vpack.c.b16 %v834, %v825
    %v1177 = vpack.c.b16 %v835, %v826
    %v1178 = vpack.c.b16 %v836, %v827
    %v1179 = vpack.c.b16 %v846, %v837
    %v1180 = vpack.c.b16 %v847, %v838
    %v1181 = vpack.c.b16 %v848, %v839
    %v1182 = vpack.c.b16 %v849, %v840
    %v1183 = vpack.c.b16 %v850, %v841
    %v1184 = vpack.c.b16 %v851, %v842
    %v1185 = vpack.c.b16 %v852, %v843
    %v1186 = vpack.c.b16 %v853, %v844
    %v1187 = vpack.c.b16 %v854, %v845
    %v1188 = vpack.c.b16 %v864, %v855
    %v1189 = vpack.c.b16 %v865, %v856
    %v1190 = vpack.c.b16 %v866, %v857
    %v1191 = vpack.c.b16 %v867, %v858
    %v1192 = vpack.c.b16 %v868, %v859
    %v1193 = vpack.c.b16 %v869, %v860
    %v1194 = vpack.c.b16 %v870, %v861
    %v1195 = vpack.c.b16 %v871, %v862
    %v1196 = vpack.c.b16 %v872, %v863
    %v1197 = vpack.c.b16 %v882, %v873
    %v1198 = vpack.c.b16 %v883, %v874
    %v1199 = vpack.c.b16 %v884, %v875
    %v1200 = vpack.c.b16 %v885, %v876
    %v1201 = vpack.c.b16 %v886, %v877
    %v1202 = vpack.c.b16 %v887, %v878
    %v1203 = vpack.c.b16 %v888, %v879
    %v1204 = vpack.c.b16 %v889, %v880
    %v1205 = vpack.c.b16 %v890, %v881
    %v1206 = vpack.c.b16 %v900, %v891
    %v1207 = vpack.c.b16 %v901, %v892
    %v1208 = vpack.c.b16 %v902, %v893
    %v1209 = vpack.c.b16 %v903, %v894
    %v1210 = vpack.c.b16 %v904, %v895
    %v1211 = vpack.c.b16 %v905, %v896
    %v1212 = vpack.c.b16 %v906, %v897
    %v1213 = vpack.c.b16 %v907, %v898
    %v1214 = vpack.c.b16 %v908, %v899
    %v1215 = vpack.c.b16 %v918, %v909
    %v1216 = vpack.c.b16 %v919, %v910
    %v1217 = vpack.c.b16 %v920, %v911
    %v1218 = vpack.c.b16 %v921, %v912
    %v1219 = vpack.c.b16 %v922, %v913
    %v1220 = vpack.c.b16 %v923, %v914
    %v1221 = vpack.c.b16 %v924, %v915
    %v1222 = vpack.c.b16 %v925, %v916
    %v1223 = vpack.c.b16 %v926, %v917
    %v1224 = vpack.c.b16 %v936, %v927
    %v1225 = vpack.c.b16 %v937, %v928
    %v1226 = vpack.c.b16 %v938, %v929
    %v1227 = vpack.c.b16 %v939, %v930
    %v1228 = vpack.c.b16 %v940, %v931
    %v1229 = vpack.c.b16 %v941, %v932
    %v1230 = vpack.c.b16 %v942, %v933
    %v1231 = vpack.c.b16 %v943, %v934
    %v1232 = vpack.c.b16 %v944, %v935
    %v1233 = vpack.c.b16 %v954, %v945
    %v1234 = vpack.c.b16 %v955, %v946
    %v1235 = vpack.c.b16 %v956, %v947
    %v1236 = vpack.c.b16 %v957, %v948
    %v1237 = vpack.c.b16 %v958, %v949
    %v1238 = vpack.c.b16 %v959, %v950
    %v1239 = vpack.c.b16 %v960, %v951
    %v1240 = vpack.c.b16 %v961, %v952
    %v1241 = vpack.c.b16 %v962, %v953
    %v1242 = vpack.c.b16 %v972, %v963
    %v1243 = vpack.c.b16 %v973, %v964
    %v1244 = vpack.c.b16 %v974, %v965
    %v1245 = vpack.c.b16 %v975, %v966
    %v1246 = vpack.c.b16 %v976, %v967
    %v1247 = vpack.c.b16 %v977, %v968
    %v1248 = vpack.c.b16 %v978, %v969
    %v1249 = vpack.c.b16 %v979, %v970
    %v1250 = vpack.c.b16 %v980, %v971
    %v1251 = vpack.c.b16 %v990, %v981
    %v1252 = vpack.c.b16 %v991, %v982
    %v1253 = vpack.c.b16 %v992, %v983
    %v1254 = vpack.c.b16 %v993, %v984
    %v1255 = vpack.c.b16 %v994, %v985
    %v1256 = vpack.c.b16 %v995, %v986
    %v1257 = vpack.c.b16 %v996, %v987
    %v1258 = vpack.c.b16 %v997, %v988
    %v1259 = vpack.c.b16 %v998, %v989
    %v1260 = vpack.c.b16 %v1008, %v999
    %v1261 = vpack.c.b16 %v1009, %v1000
    %v1262 = vpack.c.b16 %v1010, %v1001
    %v1263 = vpack.c.b16 %v1011, %v1002
    %v1264 = vpack.c.b16 %v1012, %v1003
    %v1265 = vpack.c.b16 %v1013, %v1004
    %v1266 = vpack.c.b16 %v1014, %v1005
    %v1267 = vpack.c.b16 %v1015, %v1006
    %v1268 = vpack.c.b16 %v1016, %v1007
    %v1269 = vpack.c.b16 %v1026, %v1017
    %v1270 = vpack.c.b16 %v1027, %v1018
    %v1271 = vpack.c.b16 %v1028, %v1019
    %v1272 = vpack.c.b16 %v1029, %v1020
    %v1273 = vpack.c.b16 %v1030, %v1021
    %v1274 = vpack.c.b16 %v1031, %v1022
    %v1275 = vpack.c.b16 %v1032, %v1023
    %v1276 = vpack.c.b16 %v1033, %v1024
    %v1277 = vpack.c.b16 %v1034, %v1025
    %v1278 = vpack.c.b16 %v1044, %v1035
    %v1279 = vpack.c.b16 %v1045, %v1036
    %v1280 = vpack.c.b16 %v1046, %v1037
    %v1281 = vpack.c.b16 %v1047, %v1038
    %v1282 = vpack.c.b16 %v1048, %v1039
    %v1283 = vpack.c.b16 %v1049, %v1040
    %v1284 = vpack.c.b16 %v1050, %v1041
    %v1285 = vpack.c.b16 %v1051, %v1042
    %v1286 = vpack.c.b16 %v1052, %v1043
    %v1287 = vpack.c.b16 %v1062, %v1053
    %v1288 = vpack.c.b16 %v1063, %v1054
    %v1289 = vpack.c.b16 %v1064, %v1055
    %v1290 = vpack.c.b16 %v1065, %v1056
    %v1291 = vpack.c.b16 %v1066, %v1057
    %v1292 = vpack.c.b16 %v1067, %v1058
    %v1293 = vpack.c.b16 %v1068, %v1059
    %v1294 = vpack.c.b16 %v1069, %v1060
    %v1295 = vpack.c.b16 %v1070, %v1061
    %v1296 = vpack.c.b16 %v1080, %v1071
    %v1297 = vpack.c.b16 %v1081, %v1072
    %v1298 = vpack.c.b16 %v1082, %v1073
    %v1299 = vpack.c.b16 %v1083, %v1074
    %v1300 = vpack.c.b16 %v1084, %v1075
    %v1301 = vpack.c.b16 %v1085, %v1076
    %v1302 = vpack.c.b16 %v1086, %v1077
    %v1303 = vpack.c.b16 %v1087, %v1078
    %v1304 = vpack.c.b16 %v1088, %v1079
    %1521 = vmatprep.subr.bf16.mxu0 %v1090
    %1522 = vmatpush1.bf16.msra.mxu0 %v1089
    %1523 = vmatprep.subr.bf16.mxu0 %v1099
    %1524 = vmatpush1.bf16.msra.mxu0 %v1098
    %1525 = vmatprep.subr.bf16.mxu0 %v1108
    %1526 = vmatpush1.bf16.msra.mxu0 %v1107
    %1527 = vmatprep.subr.bf16.mxu0 %v1117
    %1528 = vmatpush1.bf16.msra.mxu0 %v1116
    %1529 = vmatprep.subr.bf16.mxu0 %v1126
    %1530 = vmatpush1.bf16.msra.mxu0 %v1125
    %1531 = vmatprep.subr.bf16.mxu0 %v1135
    %1532 = vmatpush1.bf16.msra.mxu0 %v1134
    %1533 = vmatprep.subr.bf16.mxu0 %v1144
    %1534 = vmatpush1.bf16.msra.mxu0 %v1143
    %1535 = vmatprep.subr.bf16.mxu0 %v1153
    %1536 = vmatpush1.bf16.msra.mxu0 %v1152
    %1537 = vmatprep.subr.bf16.mxu0 %v1162
    %1538 = vmatpush1.bf16.msra.mxu0 %v1161
    %1539 = vmatprep.subr.bf16.mxu0 %v1171
    %1540 = vmatpush1.bf16.msra.mxu0 %v1170
    %1541 = vmatprep.subr.bf16.mxu0 %v1180
    %1542 = vmatpush1.bf16.msra.mxu0 %v1179
    %1543 = vmatprep.subr.bf16.mxu0 %v1189
    %1544 = vmatpush1.bf16.msra.mxu0 %v1188
    %1545 = vmatprep.subr.bf16.mxu0 %v1198
    %1546 = vmatpush1.bf16.msra.mxu0 %v1197
    %1547 = vmatprep.subr.bf16.mxu0 %v1207
    %1548 = vmatpush1.bf16.msra.mxu0 %v1206
    %1549 = vmatprep.subr.bf16.mxu0 %v1216
    %1550 = vmatpush1.bf16.msra.mxu0 %v1215
    %1551 = vmatprep.subr.bf16.mxu0 %v1225
    %1552 = vmatpush1.bf16.msra.mxu0 %v1224
    %1553 = vmatprep.mubr.bf16.mxu0 %v412
    %1554 = vmatmul.mubr.bf16.gmra.mrb[0].mxu0 %v411
    %v1555 = vpop.f32.mrb[0].mxu0
    %v1556 = vadd.f32 0.0, %v1555
    %v1557 = vpop.f32.mrb[0].mxu0
    %v1558 = vadd.f32 0.0, %v1557
    %v1559 = vpop.f32.mrb[0].mxu0
    %v1560 = vadd.f32 0.0, %v1559
    %v1561 = vpop.f32.mrb[0].mxu0
    %v1562 = vadd.f32 0.0, %v1561
    %1563 = vdwg.mxu0
    %1564 = vmatprep.subr.bf16.mxu0 %v1234
    %1565 = vmatpush1.bf16.msra.mxu0 %v1233
    %1566 = vmatprep.subr.bf16.mxu0 %v1243
    %1567 = vmatpush1.bf16.msra.mxu0 %v1242
    %1568 = vmatprep.subr.bf16.mxu0 %v1252
    %1569 = vmatpush1.bf16.msra.mxu0 %v1251
    %1570 = vmatprep.subr.bf16.mxu0 %v1261
    %1571 = vmatpush1.bf16.msra.mxu0 %v1260
    %1572 = vmatprep.subr.bf16.mxu0 %v1270
    %1573 = vmatpush1.bf16.msra.mxu0 %v1269
    %1574 = vmatprep.subr.bf16.mxu0 %v1279
    %1575 = vmatpush1.bf16.msra.mxu0 %v1278
    %1576 = vmatprep.subr.bf16.mxu0 %v1288
    %1577 = vmatpush1.bf16.msra.mxu0 %v1287
    %1578 = vmatprep.subr.bf16.mxu0 %v1297
    %1579 = vmatpush1.bf16.msra.mxu0 %v1296
    %1580 = vmatprep.subr.bf16.mxu0 0
    %1581 = vmatpush1.bf16.msra.mxu0 0
    %1582 = vmatprep.subr.bf16.mxu0 0
    %1583 = vmatpush1.bf16.msra.mxu0 0
    %1584 = vmatprep.subr.bf16.mxu0 0
    %1585 = vmatpush1.bf16.msra.mxu0 0
    %1586 = vmatprep.subr.bf16.mxu0 0
    %1587 = vmatpush1.bf16.msra.mxu0 0
    %1588 = vmatprep.subr.bf16.mxu0 0
    %1589 = vmatpush1.bf16.msra.mxu0 0
    %1590 = vmatprep.subr.bf16.mxu0 0
    %1591 = vmatpush1.bf16.msra.mxu0 0
    %1592 = vmatprep.subr.bf16.mxu0 0
    %1593 = vmatpush1.bf16.msra.mxu0 0
    %1594 = vmatprep.subr.bf16.mxu0 0
    %1595 = vmatpush1.bf16.msra.mxu0 0
    %1596 = vmatprep.mubr.bf16.mxu0 0
    %1597 = vmatmul.mubr.bf16.gmra.mrb[0].mxu0 %v413
    %v1598 = vpop.f32.mrb[0].mxu0
    %v1599 = vadd.f32 %v1556, %v1598
    %v1600 = vpop.f32.mrb[0].mxu0
    %v1601 = vadd.f32 %v1558, %v1600
    %v1602 = vpop.f32.mrb[0].mxu0
    %v1603 = vadd.f32 %v1560, %v1602
    %v1604 = vpop.f32.mrb[0].mxu0
    %v1605 = vadd.f32 %v1562, %v1604
    %1606 = vdwg.mxu0
    %1607 = vmatprep.subr.bf16.mxu0 %v1092
    %1608 = vmatpush1.bf16.msra.mxu0 %v1091
    %1609 = vmatprep.subr.bf16.mxu0 %v1101
    %1610 = vmatpush1.bf16.msra.mxu0 %v1100
    %1611 = vmatprep.subr.bf16.mxu0 %v1110
    %1612 = vmatpush1.bf16.msra.mxu0 %v1109
    %1613 = vmatprep.subr.bf16.mxu0 %v1119
    %1614 = vmatpush1.bf16.msra.mxu0 %v1118
    %1615 = vmatprep.subr.bf16.mxu0 %v1128
    %1616 = vmatpush1.bf16.msra.mxu0 %v1127
    %1617 = vmatprep.subr.bf16.mxu0 %v1137
    %1618 = vmatpush1.bf16.msra.mxu0 %v1136
    %1619 = vmatprep.subr.bf16.mxu0 %v1146
    %1620 = vmatpush1.bf16.msra.mxu0 %v1145
    %1621 = vmatprep.subr.bf16.mxu0 %v1155
    %1622 = vmatpush1.bf16.msra.mxu0 %v1154
    %1623 = vmatprep.subr.bf16.mxu0 %v1164
    %1624 = vmatpush1.bf16.msra.mxu0 %v1163
    %1625 = vmatprep.subr.bf16.mxu0 %v1173
    %1626 = vmatpush1.bf16.msra.mxu0 %v1172
    %1627 = vmatprep.subr.bf16.mxu0 %v1182
    %1628 = vmatpush1.bf16.msra.mxu0 %v1181
    %1629 = vmatprep.subr.bf16.mxu0 %v1191
    %1630 = vmatpush1.bf16.msra.mxu0 %v1190
    %1631 = vmatprep.subr.bf16.mxu0 %v1200
    %1632 = vmatpush1.bf16.msra.mxu0 %v1199
    %1633 = vmatprep.subr.bf16.mxu0 %v1209
    %1634 = vmatpush1.bf16.msra.mxu0 %v1208
    %1635 = vmatprep.subr.bf16.mxu0 %v1218
    %1636 = vmatpush1.bf16.msra.mxu0 %v1217
    %1637 = vmatprep.subr.bf16.mxu0 %v1227
    %1638 = vmatpush1.bf16.msra.mxu0 %v1226
    %1639 = vmatprep.mubr.bf16.mxu0 %v412
    %1640 = vmatmul.mubr.bf16.gmra.mrb[0].mxu0 %v411
    %v1641 = vpop.f32.mrb[0].mxu0
    %v1642 = vadd.f32 0.0, %v1641
    %v1643 = vpop.f32.mrb[0].mxu0
    %v1644 = vadd.f32 0.0, %v1643
    %v1645 = vpop.f32.mrb[0].mxu0
    %v1646 = vadd.f32 0.0, %v1645
    %v1647 = vpop.f32.mrb[0].mxu0
    %v1648 = vadd.f32 0.0, %v1647
    %1649 = vdwg.mxu0
    %1650 = vmatprep.subr.bf16.mxu0 %v1236
    %1651 = vmatpush1.bf16.msra.mxu0 %v1235
    %1652 = vmatprep.subr.bf16.mxu0 %v1245
    %1653 = vmatpush1.bf16.msra.mxu0 %v1244
    %1654 = vmatprep.subr.bf16.mxu0 %v1254
    %1655 = vmatpush1.bf16.msra.mxu0 %v1253
    %1656 = vmatprep.subr.bf16.mxu0 %v1263
    %1657 = vmatpush1.bf16.msra.mxu0 %v1262
    %1658 = vmatprep.subr.bf16.mxu0 %v1272
    %1659 = vmatpush1.bf16.msra.mxu0 %v1271
    %1660 = vmatprep.subr.bf16.mxu0 %v1281
    %1661 = vmatpush1.bf16.msra.mxu0 %v1280
    %1662 = vmatprep.subr.bf16.mxu0 %v1290
    %1663 = vmatpush1.bf16.msra.mxu0 %v1289
    %1664 = vmatprep.subr.bf16.mxu0 %v1299
    %1665 = vmatpush1.bf16.msra.mxu0 %v1298
    %1666 = vmatprep.subr.bf16.mxu0 0
    %1667 = vmatpush1.bf16.msra.mxu0 0
    %1668 = vmatprep.subr.bf16.mxu0 0
    %1669 = vmatpush1.bf16.msra.mxu0 0
    %1670 = vmatprep.subr.bf16.mxu0 0
    %1671 = vmatpush1.bf16.msra.mxu0 0
    %1672 = vmatprep.subr.bf16.mxu0 0
    %1673 = vmatpush1.bf16.msra.mxu0 0
    %1674 = vmatprep.subr.bf16.mxu0 0
    %1675 = vmatpush1.bf16.msra.mxu0 0
    %1676 = vmatprep.subr.bf16.mxu0 0
    %1677 = vmatpush1.bf16.msra.mxu0 0
    %1678 = vmatprep.subr.bf16.mxu0 0
    %1679 = vmatpush1.bf16.msra.mxu0 0
    %1680 = vmatprep.subr.bf16.mxu0 0
    %1681 = vmatpush1.bf16.msra.mxu0 0
    %1682 = vmatprep.mubr.bf16.mxu0 0
    %1683 = vmatmul.mubr.bf16.gmra.mrb[0].mxu0 %v413
    %v1684 = vpop.f32.mrb[0].mxu0
    %v1685 = vadd.f32 %v1642, %v1684
    %v1686 = vpop.f32.mrb[0].mxu0
    %v1687 = vadd.f32 %v1644, %v1686
    %v1688 = vpop.f32.mrb[0].mxu0
    %v1689 = vadd.f32 %v1646, %v1688
    %v1690 = vpop.f32.mrb[0].mxu0
    %v1691 = vadd.f32 %v1648, %v1690
    %1692 = vdwg.mxu0
    %1693 = vmatprep.subr.bf16.mxu0 %v1094
    %1694 = vmatpush1.bf16.msra.mxu0 %v1093
    %1695 = vmatprep.subr.bf16.mxu0 %v1103
    %1696 = vmatpush1.bf16.msra.mxu0 %v1102
    %1697 = vmatprep.subr.bf16.mxu0 %v1112
    %1698 = vmatpush1.bf16.msra.mxu0 %v1111
    %1699 = vmatprep.subr.bf16.mxu0 %v1121
    %1700 = vmatpush1.bf16.msra.mxu0 %v1120
    %1701 = vmatprep.subr.bf16.mxu0 %v1130
    %1702 = vmatpush1.bf16.msra.mxu0 %v1129
    %1703 = vmatprep.subr.bf16.mxu0 %v1139
    %1704 = vmatpush1.bf16.msra.mxu0 %v1138
    %1705 = vmatprep.subr.bf16.mxu0 %v1148
    %1706 = vmatpush1.bf16.msra.mxu0 %v1147
    %1707 = vmatprep.subr.bf16.mxu0 %v1157
    %1708 = vmatpush1.bf16.msra.mxu0 %v1156
    %1709 = vmatprep.subr.bf16.mxu0 %v1166
    %1710 = vmatpush1.bf16.msra.mxu0 %v1165
    %1711 = vmatprep.subr.bf16.mxu0 %v1175
    %1712 = vmatpush1.bf16.msra.mxu0 %v1174
    %1713 = vmatprep.subr.bf16.mxu0 %v1184
    %1714 = vmatpush1.bf16.msra.mxu0 %v1183
    %1715 = vmatprep.subr.bf16.mxu0 %v1193
    %1716 = vmatpush1.bf16.msra.mxu0 %v1192
    %1717 = vmatprep.subr.bf16.mxu0 %v1202
    %1718 = vmatpush1.bf16.msra.mxu0 %v1201
    %1719 = vmatprep.subr.bf16.mxu0 %v1211
    %1720 = vmatpush1.bf16.msra.mxu0 %v1210
    %1721 = vmatprep.subr.bf16.mxu0 %v1220
    %1722 = vmatpush1.bf16.msra.mxu0 %v1219
    %1723 = vmatprep.subr.bf16.mxu0 %v1229
    %1724 = vmatpush1.bf16.msra.mxu0 %v1228
    %1725 = vmatprep.mubr.bf16.mxu0 %v412
    %1726 = vmatmul.mubr.bf16.gmra.mrb[0].mxu0 %v411
    %v1727 = vpop.f32.mrb[0].mxu0
    %v1728 = vadd.f32 0.0, %v1727
    %v1729 = vpop.f32.mrb[0].mxu0
    %v1730 = vadd.f32 0.0, %v1729
    %v1731 = vpop.f32.mrb[0].mxu0
    %v1732 = vadd.f32 0.0, %v1731
    %v1733 = vpop.f32.mrb[0].mxu0
    %v1734 = vadd.f32 0.0, %v1733
    %1735 = vdwg.mxu0
    %1736 = vmatprep.subr.bf16.mxu0 %v1238
    %1737 = vmatpush1.bf16.msra.mxu0 %v1237
    %1738 = vmatprep.subr.bf16.mxu0 %v1247
    %1739 = vmatpush1.bf16.msra.mxu0 %v1246
    %1740 = vmatprep.subr.bf16.mxu0 %v1256
    %1741 = vmatpush1.bf16.msra.mxu0 %v1255
    %1742 = vmatprep.subr.bf16.mxu0 %v1265
    %1743 = vmatpush1.bf16.msra.mxu0 %v1264
    %1744 = vmatprep.subr.bf16.mxu0 %v1274
    %1745 = vmatpush1.bf16.msra.mxu0 %v1273
    %1746 = vmatprep.subr.bf16.mxu0 %v1283
    %1747 = vmatpush1.bf16.msra.mxu0 %v1282
    %1748 = vmatprep.subr.bf16.mxu0 %v1292
    %1749 = vmatpush1.bf16.msra.mxu0 %v1291
    %1750 = vmatprep.subr.bf16.mxu0 %v1301
    %1751 = vmatpush1.bf16.msra.mxu0 %v1300
    %1752 = vmatprep.subr.bf16.mxu0 0
    %1753 = vmatpush1.bf16.msra.mxu0 0
    %1754 = vmatprep.subr.bf16.mxu0 0
    %1755 = vmatpush1.bf16.msra.mxu0 0
    %1756 = vmatprep.subr.bf16.mxu0 0
    %1757 = vmatpush1.bf16.msra.mxu0 0
    %1758 = vmatprep.subr.bf16.mxu0 0
    %1759 = vmatpush1.bf16.msra.mxu0 0
    %1760 = vmatprep.subr.bf16.mxu0 0
    %1761 = vmatpush1.bf16.msra.mxu0 0
    %1762 = vmatprep.subr.bf16.mxu0 0
    %1763 = vmatpush1.bf16.msra.mxu0 0
    %1764 = vmatprep.subr.bf16.mxu0 0
    %1765 = vmatpush1.bf16.msra.mxu0 0
    %1766 = vmatprep.subr.bf16.mxu0 0
    %1767 = vmatpush1.bf16.msra.mxu0 0
    %1768 = vmatprep.mubr.bf16.mxu0 0
    %1769 = vmatmul.mubr.bf16.gmra.mrb[0].mxu0 %v413
    %v1770 = vpop.f32.mrb[0].mxu0
    %v1771 = vadd.f32 %v1728, %v1770
    %v1772 = vpop.f32.mrb[0].mxu0
    %v1773 = vadd.f32 %v1730, %v1772
    %v1774 = vpop.f32.mrb[0].mxu0
    %v1775 = vadd.f32 %v1732, %v1774
    %v1776 = vpop.f32.mrb[0].mxu0
    %v1777 = vadd.f32 %v1734, %v1776
    %1778 = vdwg.mxu0
    %1779 = vmatprep.subr.bf16.mxu0 %v1096
    %1780 = vmatpush1.bf16.msra.mxu0 %v1095
    %1781 = vmatprep.subr.bf16.mxu0 %v1105
    %1782 = vmatpush1.bf16.msra.mxu0 %v1104
    %1783 = vmatprep.subr.bf16.mxu0 %v1114
    %1784 = vmatpush1.bf16.msra.mxu0 %v1113
    %1785 = vmatprep.subr.bf16.mxu0 %v1123
    %1786 = vmatpush1.bf16.msra.mxu0 %v1122
    %1787 = vmatprep.subr.bf16.mxu0 %v1132
    %1788 = vmatpush1.bf16.msra.mxu0 %v1131
    %1789 = vmatprep.subr.bf16.mxu0 %v1141
    %1790 = vmatpush1.bf16.msra.mxu0 %v1140
    %1791 = vmatprep.subr.bf16.mxu0 %v1150
    %1792 = vmatpush1.bf16.msra.mxu0 %v1149
    %1793 = vmatprep.subr.bf16.mxu0 %v1159
    %1794 = vmatpush1.bf16.msra.mxu0 %v1158
    %1795 = vmatprep.subr.bf16.mxu0 %v1168
    %1796 = vmatpush1.bf16.msra.mxu0 %v1167
    %1797 = vmatprep.subr.bf16.mxu0 %v1177
    %1798 = vmatpush1.bf16.msra.mxu0 %v1176
    %1799 = vmatprep.subr.bf16.mxu0 %v1186
    %1800 = vmatpush1.bf16.msra.mxu0 %v1185
    %1801 = vmatprep.subr.bf16.mxu0 %v1195
    %1802 = vmatpush1.bf16.msra.mxu0 %v1194
    %1803 = vmatprep.subr.bf16.mxu0 %v1204
    %1804 = vmatpush1.bf16.msra.mxu0 %v1203
    %1805 = vmatprep.subr.bf16.mxu0 %v1213
    %1806 = vmatpush1.bf16.msra.mxu0 %v1212
    %1807 = vmatprep.subr.bf16.mxu0 %v1222
    %1808 = vmatpush1.bf16.msra.mxu0 %v1221
    %1809 = vmatprep.subr.bf16.mxu0 %v1231
    %1810 = vmatpush1.bf16.msra.mxu0 %v1230
    %1811 = vmatprep.mubr.bf16.mxu0 %v412
    %1812 = vmatmul.mubr.bf16.gmra.mrb[0].mxu0 %v411
    %v1813 = vpop.f32.mrb[0].mxu0
    %v1814 = vadd.f32 0.0, %v1813
    %v1815 = vpop.f32.mrb[0].mxu0
    %v1816 = vadd.f32 0.0, %v1815
    %v1817 = vpop.f32.mrb[0].mxu0
    %v1818 = vadd.f32 0.0, %v1817
    %v1819 = vpop.f32.mrb[0].mxu0
    %v1820 = vadd.f32 0.0, %v1819
    %1821 = vdwg.mxu0
    %1822 = vmatprep.subr.bf16.mxu0 %v1240
    %1823 = vmatpush1.bf16.msra.mxu0 %v1239
    %1824 = vmatprep.subr.bf16.mxu0 %v1249
    %1825 = vmatpush1.bf16.msra.mxu0 %v1248
    %1826 = vmatprep.subr.bf16.mxu0 %v1258
    %1827 = vmatpush1.bf16.msra.mxu0 %v1257
    %1828 = vmatprep.subr.bf16.mxu0 %v1267
    %1829 = vmatpush1.bf16.msra.mxu0 %v1266
    %1830 = vmatprep.subr.bf16.mxu0 %v1276
    %1831 = vmatpush1.bf16.msra.mxu0 %v1275
    %1832 = vmatprep.subr.bf16.mxu0 %v1285
    %1833 = vmatpush1.bf16.msra.mxu0 %v1284
    %1834 = vmatprep.subr.bf16.mxu0 %v1294
    %1835 = vmatpush1.bf16.msra.mxu0 %v1293
    %1836 = vmatprep.subr.bf16.mxu0 %v1303
    %1837 = vmatpush1.bf16.msra.mxu0 %v1302
    %1838 = vmatprep.subr.bf16.mxu0 0
    %1839 = vmatpush1.bf16.msra.mxu0 0
    %1840 = vmatprep.subr.bf16.mxu0 0
    %1841 = vmatpush1.bf16.msra.mxu0 0
    %1842 = vmatprep.subr.bf16.mxu0 0
    %1843 = vmatpush1.bf16.msra.mxu0 0
    %1844 = vmatprep.subr.bf16.mxu0 0
    %1845 = vmatpush1.bf16.msra.mxu0 0
    %1846 = vmatprep.subr.bf16.mxu0 0
    %1847 = vmatpush1.bf16.msra.mxu0 0
    %1848 = vmatprep.subr.bf16.mxu0 0
    %1849 = vmatpush1.bf16.msra.mxu0 0
    %1850 = vmatprep.subr.bf16.mxu0 0
    %1851 = vmatpush1.bf16.msra.mxu0 0
    %1852 = vmatprep.subr.bf16.mxu0 0
    %1853 = vmatpush1.bf16.msra.mxu0 0
    %1854 = vmatprep.mubr.bf16.mxu0 0
    %1855 = vmatmul.mubr.bf16.gmra.mrb[0].mxu0 %v413
    %v1856 = vpop.f32.mrb[0].mxu0
    %v1857 = vadd.f32 %v1814, %v1856
    %v1858 = vpop.f32.mrb[0].mxu0
    %v1859 = vadd.f32 %v1816, %v1858
    %v1860 = vpop.f32.mrb[0].mxu0
    %v1861 = vadd.f32 %v1818, %v1860
    %v1862 = vpop.f32.mrb[0].mxu0
    %v1863 = vadd.f32 %v1820, %v1862
    %1864 = vdwg.mxu0
    %1865 = vmatprep.subr.bf16.mxu0 0
    %1866 = vmatpush1.bf16.msra.mxu0 %v1097
    %1867 = vmatprep.subr.bf16.mxu0 0
    %1868 = vmatpush1.bf16.msra.mxu0 %v1106
    %1869 = vmatprep.subr.bf16.mxu0 0
    %1870 = vmatpush1.bf16.msra.mxu0 %v1115
    %1871 = vmatprep.subr.bf16.mxu0 0
    %1872 = vmatpush1.bf16.msra.mxu0 %v1124
    %1873 = vmatprep.subr.bf16.mxu0 0
    %1874 = vmatpush1.bf16.msra.mxu0 %v1133
    %1875 = vmatprep.subr.bf16.mxu0 0
    %1876 = vmatpush1.bf16.msra.mxu0 %v1142
    %1877 = vmatprep.subr.bf16.mxu0 0
    %1878 = vmatpush1.bf16.msra.mxu0 %v1151
    %1879 = vmatprep.subr.bf16.mxu0 0
    %1880 = vmatpush1.bf16.msra.mxu0 %v1160
    %1881 = vmatprep.subr.bf16.mxu0 0
    %1882 = vmatpush1.bf16.msra.mxu0 %v1169
    %1883 = vmatprep.subr.bf16.mxu0 0
    %1884 = vmatpush1.bf16.msra.mxu0 %v1178
    %1885 = vmatprep.subr.bf16.mxu0 0
    %1886 = vmatpush1.bf16.msra.mxu0 %v1187
    %1887 = vmatprep.subr.bf16.mxu0 0
    %1888 = vmatpush1.bf16.msra.mxu0 %v1196
    %1889 = vmatprep.subr.bf16.mxu0 0
    %1890 = vmatpush1.bf16.msra.mxu0 %v1205
    %1891 = vmatprep.subr.bf16.mxu0 0
    %1892 = vmatpush1.bf16.msra.mxu0 %v1214
    %1893 = vmatprep.subr.bf16.mxu0 0
    %1894 = vmatpush1.bf16.msra.mxu0 %v1223
    %1895 = vmatprep.subr.bf16.mxu0 0
    %1896 = vmatpush1.bf16.msra.mxu0 %v1232
    %1897 = vmatprep.mubr.bf16.mxu0 %v412
    %1898 = vmatmul.mubr.bf16.gmra.mrb[0].mxu0 %v411
    %v1899 = vpop.f32.mrb[0].mxu0
    %v1900 = vadd.f32 0.0, %v1899
    %v1901 = vpop.f32.mrb[0].mxu0
    %v1902 = vpop.f32.mrb[0].mxu0
    %v1903 = vadd.f32 0.0, %v1902
    %v1904 = vpop.f32.mrb[0].mxu0
    %1905 = vdwg.mxu0
    %1906 = vmatprep.subr.bf16.mxu0 0
    %1907 = vmatpush1.bf16.msra.mxu0 %v1241
    %1908 = vmatprep.subr.bf16.mxu0 0
    %1909 = vmatpush1.bf16.msra.mxu0 %v1250
    %1910 = vmatprep.subr.bf16.mxu0 0
    %1911 = vmatpush1.bf16.msra.mxu0 %v1259
    %1912 = vmatprep.subr.bf16.mxu0 0
    %1913 = vmatpush1.bf16.msra.mxu0 %v1268
    %1914 = vmatprep.subr.bf16.mxu0 0
    %1915 = vmatpush1.bf16.msra.mxu0 %v1277
    %1916 = vmatprep.subr.bf16.mxu0 0
    %1917 = vmatpush1.bf16.msra.mxu0 %v1286
    %1918 = vmatprep.subr.bf16.mxu0 0
    %1919 = vmatpush1.bf16.msra.mxu0 %v1295
    %1920 = vmatprep.subr.bf16.mxu0 0
    %1921 = vmatpush1.bf16.msra.mxu0 %v1304
    %1922 = vmatprep.subr.bf16.mxu0 0
    %1923 = vmatpush1.bf16.msra.mxu0 0
    %1924 = vmatprep.subr.bf16.mxu0 0
    %1925 = vmatpush1.bf16.msra.mxu0 0
    %1926 = vmatprep.subr.bf16.mxu0 0
    %1927 = vmatpush1.bf16.msra.mxu0 0
    %1928 = vmatprep.subr.bf16.mxu0 0
    %1929 = vmatpush1.bf16.msra.mxu0 0
    %1930 = vmatprep.subr.bf16.mxu0 0
    %1931 = vmatpush1.bf16.msra.mxu0 0
    %1932 = vmatprep.subr.bf16.mxu0 0
    %1933 = vmatpush1.bf16.msra.mxu0 0
    %1934 = vmatprep.subr.bf16.mxu0 0
    %1935 = vmatpush1.bf16.msra.mxu0 0
    %1936 = vmatprep.subr.bf16.mxu0 0
    %1937 = vmatpush1.bf16.msra.mxu0 0
    %1938 = vmatprep.mubr.bf16.mxu0 0
    %1939 = vmatmul.mubr.bf16.gmra.mrb[0].mxu0 %v413
    %v1940 = vpop.f32.mrb[0].mxu0
    %v1941 = vadd.f32 %v1900, %v1940
    %v1942 = vpop.f32.mrb[0].mxu0
    %v1943 = vpop.f32.mrb[0].mxu0
    %v1944 = vadd.f32 %v1903, %v1943
    %v1945 = vpop.f32.mrb[0].mxu0
    %1946 = vdwg.mxu0
    %v1947 = vpack.c.bf16 %v1603, %v1599
    %v1948 = vpack.c.bf16 %v1605, %v1601
    %v1949 = vpack.c.bf16 %v1689, %v1685
    %v1950 = vpack.c.bf16 %v1691, %v1687
    %v1951 = vpack.c.bf16 %v1775, %v1771
    %v1952 = vpack.c.bf16 %v1777, %v1773
    %v1953 = vpack.c.bf16 %v1861, %v1857
    %v1954 = vpack.c.bf16 %v1863, %v1859
    %v1955 = vpack.c.bf16 %v1944, %v1941
    %vm1956 = vcmask 523264
    %v1958 = vsel %vm1956, %v1947, 0
    %v1961 = vsel %vm1956, %v1950, 0
    %1963 = vmatprep.subr.bf16.mxu0 0
    %1964 = vmatpush1.bf16.xpose.msra.mxu0 %v1961
    %1965 = vmatprep.subr.bf16.mxu0 0
    %1966 = vmatpush1.bf16.xpose.msra.mxu0 0
    %1967 = vmatprep.subr.bf16.mxu0 0
    %1968 = vmatpush1.bf16.xpose.msra.mxu0 0
    %1969 = vmatprep.subr.bf16.mxu0 0
    %1970 = vmatpush1.bf16.xpose.msra.mxu0 0
    %1971 = vmatprep.subr.bf16.mxu0 0
    %1972 = vmatpush1.bf16.xpose.msra.mxu0 0
    %1973 = vmatprep.subr.bf16.mxu0 0
    %1974 = vmatpush1.bf16.xpose.msra.mxu0 0
    %1975 = vmatprep.subr.bf16.mxu0 0
    %1976 = vmatpush1.bf16.xpose.msra.mxu0 0
    %1977 = vmatprep.subr.bf16.mxu0 0
    %1978 = vmatpush1.bf16.xpose.msra.mxu0 0
    %1979 = vmatprep.subr.bf16.mxu0 0
    %1980 = vmatpush1.bf16.xpose.msra.mxu0 0
    %1981 = vmatprep.subr.bf16.mxu0 0
    %1982 = vmatpush1.bf16.xpose.msra.mxu0 0
    %1983 = vmatprep.subr.bf16.mxu0 0
    %1984 = vmatpush1.bf16.xpose.msra.mxu0 0
    %1985 = vmatprep.subr.bf16.mxu0 0
    %1986 = vmatpush1.bf16.xpose.msra.mxu0 0
    %1987 = vmatprep.subr.bf16.mxu0 0
    %1988 = vmatpush1.bf16.xpose.msra.mxu0 0
    %1989 = vmatprep.subr.bf16.mxu0 0
    %1990 = vmatpush1.bf16.xpose.msra.mxu0 0
    %1991 = vmatprep.subr.bf16.mxu0 0
    %1992 = vmatpush1.bf16.xpose.msra.mxu0 0
    %1993 = vmatprep.subr.bf16.mxu0 0
    %1994 = vmatpush1.bf16.xpose.msra.mxu0 0
    %1995 = vmatprep.mubr.bf16.mxu0 0
    %1996 = vmatmul.mubr.bf16.gmra.mrb[0].mxu0 %v1958
    %v1997 = vpop.f32.mrb[0].mxu0
    %v1998 = vadd.f32 0.0, %v1997
    %v1999 = vpop.f32.mrb[0].mxu0
    %v2000 = vpop.f32.mrb[0].mxu0
    %v2001 = vpop.f32.mrb[0].mxu0
    %2002 = vdwg.mxu0
    %2004 = vrot.lane.b32.xlu0 %v1947, 64
    %v2005 = vpop.permute.xlu0 %2004
    %2007 = vrot.lane.b32.xlu0 %v1950, 64
    %v2008 = vpop.permute.xlu0 %2007
    %v2010 = vsel %vm1956, %v2005, 0
    %v2013 = vsel %vm1956, %v2008, 0
    %2015 = vmatprep.subr.bf16.mxu0 0
    %2016 = vmatpush1.bf16.xpose.msra.mxu0 %v2013
    %2017 = vmatprep.subr.bf16.mxu0 0
    %2018 = vmatpush1.bf16.xpose.msra.mxu0 0
    %2019 = vmatprep.subr.bf16.mxu0 0
    %2020 = vmatpush1.bf16.xpose.msra.mxu0 0
    %2021 = vmatprep.subr.bf16.mxu0 0
    %2022 = vmatpush1.bf16.xpose.msra.mxu0 0
    %2023 = vmatprep.subr.bf16.mxu0 0
    %2024 = vmatpush1.bf16.xpose.msra.mxu0 0
    %2025 = vmatprep.subr.bf16.mxu0 0
    %2026 = vmatpush1.bf16.xpose.msra.mxu0 0
    %2027 = vmatprep.subr.bf16.mxu0 0
    %2028 = vmatpush1.bf16.xpose.msra.mxu0 0
    %2029 = vmatprep.subr.bf16.mxu0 0
    %2030 = vmatpush1.bf16.xpose.msra.mxu0 0
    %2031 = vmatprep.subr.bf16.mxu0 0
    %2032 = vmatpush1.bf16.xpose.msra.mxu0 0
    %2033 = vmatprep.subr.bf16.mxu0 0
    %2034 = vmatpush1.bf16.xpose.msra.mxu0 0
    %2035 = vmatprep.subr.bf16.mxu0 0
    %2036 = vmatpush1.bf16.xpose.msra.mxu0 0
    %2037 = vmatprep.subr.bf16.mxu0 0
    %2038 = vmatpush1.bf16.xpose.msra.mxu0 0
    %2039 = vmatprep.subr.bf16.mxu0 0
    %2040 = vmatpush1.bf16.xpose.msra.mxu0 0
    %2041 = vmatprep.subr.bf16.mxu0 0
    %2042 = vmatpush1.bf16.xpose.msra.mxu0 0
    %2043 = vmatprep.subr.bf16.mxu0 0
    %2044 = vmatpush1.bf16.xpose.msra.mxu0 0
    %2045 = vmatprep.subr.bf16.mxu0 0
    %2046 = vmatpush1.bf16.xpose.msra.mxu0 0
    %2047 = vmatprep.mubr.bf16.mxu0 0
    %2048 = vmatmul.mubr.bf16.gmra.mrb[0].mxu0 %v2010
    %v2049 = vpop.f32.mrb[0].mxu0
    %v2050 = vadd.f32 0.0, %v2049
    %v2051 = vpop.f32.mrb[0].mxu0
    %v2052 = vpop.f32.mrb[0].mxu0
    %v2053 = vpop.f32.mrb[0].mxu0
    %2054 = vdwg.mxu0
    %v2056 = vsel %vm1956, %v1948, 0
    %v2059 = vsel %vm1956, %v1951, 0
    %2061 = vmatprep.subr.bf16.mxu0 0
    %2062 = vmatpush1.bf16.xpose.msra.mxu0 %v2059
    %2063 = vmatprep.subr.bf16.mxu0 0
    %2064 = vmatpush1.bf16.xpose.msra.mxu0 0
    %2065 = vmatprep.subr.bf16.mxu0 0
    %2066 = vmatpush1.bf16.xpose.msra.mxu0 0
    %2067 = vmatprep.subr.bf16.mxu0 0
    %2068 = vmatpush1.bf16.xpose.msra.mxu0 0
    %2069 = vmatprep.subr.bf16.mxu0 0
    %2070 = vmatpush1.bf16.xpose.msra.mxu0 0
    %2071 = vmatprep.subr.bf16.mxu0 0
    %2072 = vmatpush1.bf16.xpose.msra.mxu0 0
    %2073 = vmatprep.subr.bf16.mxu0 0
    %2074 = vmatpush1.bf16.xpose.msra.mxu0 0
    %2075 = vmatprep.subr.bf16.mxu0 0
    %2076 = vmatpush1.bf16.xpose.msra.mxu0 0
    %2077 = vmatprep.subr.bf16.mxu0 0
    %2078 = vmatpush1.bf16.xpose.msra.mxu0 0
    %2079 = vmatprep.subr.bf16.mxu0 0
    %2080 = vmatpush1.bf16.xpose.msra.mxu0 0
    %2081 = vmatprep.subr.bf16.mxu0 0
    %2082 = vmatpush1.bf16.xpose.msra.mxu0 0
    %2083 = vmatprep.subr.bf16.mxu0 0
    %2084 = vmatpush1.bf16.xpose.msra.mxu0 0
    %2085 = vmatprep.subr.bf16.mxu0 0
    %2086 = vmatpush1.bf16.xpose.msra.mxu0 0
    %2087 = vmatprep.subr.bf16.mxu0 0
    %2088 = vmatpush1.bf16.xpose.msra.mxu0 0
    %2089 = vmatprep.subr.bf16.mxu0 0
    %2090 = vmatpush1.bf16.xpose.msra.mxu0 0
    %2091 = vmatprep.subr.bf16.mxu0 0
    %2092 = vmatpush1.bf16.xpose.msra.mxu0 0
    %2093 = vmatprep.mubr.bf16.mxu0 0
    %2094 = vmatmul.mubr.bf16.gmra.mrb[0].mxu0 %v2056
    %v2095 = vpop.f32.mrb[0].mxu0
    %v2096 = vadd.f32 0.0, %v2095
    %v2097 = vpop.f32.mrb[0].mxu0
    %v2098 = vpop.f32.mrb[0].mxu0
    %v2099 = vpop.f32.mrb[0].mxu0
    %2100 = vdwg.mxu0
    %2102 = vrot.lane.b32.xlu0 %v1948, 64
    %v2103 = vpop.permute.xlu0 %2102
    %2105 = vrot.lane.b32.xlu0 %v1951, 64
    %v2106 = vpop.permute.xlu0 %2105
    %v2108 = vsel %vm1956, %v2103, 0
    %v2111 = vsel %vm1956, %v2106, 0
    %2113 = vmatprep.subr.bf16.mxu0 0
    %2114 = vmatpush1.bf16.xpose.msra.mxu0 %v2111
    %2115 = vmatprep.subr.bf16.mxu0 0
    %2116 = vmatpush1.bf16.xpose.msra.mxu0 0
    %2117 = vmatprep.subr.bf16.mxu0 0
    %2118 = vmatpush1.bf16.xpose.msra.mxu0 0
    %2119 = vmatprep.subr.bf16.mxu0 0
    %2120 = vmatpush1.bf16.xpose.msra.mxu0 0
    %2121 = vmatprep.subr.bf16.mxu0 0
    %2122 = vmatpush1.bf16.xpose.msra.mxu0 0
    %2123 = vmatprep.subr.bf16.mxu0 0
    %2124 = vmatpush1.bf16.xpose.msra.mxu0 0
    %2125 = vmatprep.subr.bf16.mxu0 0
    %2126 = vmatpush1.bf16.xpose.msra.mxu0 0
    %2127 = vmatprep.subr.bf16.mxu0 0
    %2128 = vmatpush1.bf16.xpose.msra.mxu0 0
    %2129 = vmatprep.subr.bf16.mxu0 0
    %2130 = vmatpush1.bf16.xpose.msra.mxu0 0
    %2131 = vmatprep.subr.bf16.mxu0 0
    %2132 = vmatpush1.bf16.xpose.msra.mxu0 0
    %2133 = vmatprep.subr.bf16.mxu0 0
    %2134 = vmatpush1.bf16.xpose.msra.mxu0 0
    %2135 = vmatprep.subr.bf16.mxu0 0
    %2136 = vmatpush1.bf16.xpose.msra.mxu0 0
    %2137 = vmatprep.subr.bf16.mxu0 0
    %2138 = vmatpush1.bf16.xpose.msra.mxu0 0
    %2139 = vmatprep.subr.bf16.mxu0 0
    %2140 = vmatpush1.bf16.xpose.msra.mxu0 0
    %2141 = vmatprep.subr.bf16.mxu0 0
    %2142 = vmatpush1.bf16.xpose.msra.mxu0 0
    %2143 = vmatprep.subr.bf16.mxu0 0
    %2144 = vmatpush1.bf16.xpose.msra.mxu0 0
    %2145 = vmatprep.mubr.bf16.mxu0 0
    %2146 = vmatmul.mubr.bf16.gmra.mrb[0].mxu0 %v2108
    %v2147 = vpop.f32.mrb[0].mxu0
    %v2148 = vadd.f32 0.0, %v2147
    %v2149 = vpop.f32.mrb[0].mxu0
    %v2150 = vpop.f32.mrb[0].mxu0
    %v2151 = vpop.f32.mrb[0].mxu0
    %2152 = vdwg.mxu0
    %v2154 = vsel %vm1956, %v1949, 0
    %v2157 = vsel %vm1956, %v1952, 0
    %2159 = vmatprep.subr.bf16.mxu0 0
    %2160 = vmatpush1.bf16.xpose.msra.mxu0 %v2157
    %2161 = vmatprep.subr.bf16.mxu0 0
    %2162 = vmatpush1.bf16.xpose.msra.mxu0 0
    %2163 = vmatprep.subr.bf16.mxu0 0
    %2164 = vmatpush1.bf16.xpose.msra.mxu0 0
    %2165 = vmatprep.subr.bf16.mxu0 0
    %2166 = vmatpush1.bf16.xpose.msra.mxu0 0
    %2167 = vmatprep.subr.bf16.mxu0 0
    %2168 = vmatpush1.bf16.xpose.msra.mxu0 0
    %2169 = vmatprep.subr.bf16.mxu0 0
    %2170 = vmatpush1.bf16.xpose.msra.mxu0 0
    %2171 = vmatprep.subr.bf16.mxu0 0
    %2172 = vmatpush1.bf16.xpose.msra.mxu0 0
    %2173 = vmatprep.subr.bf16.mxu0 0
    %2174 = vmatpush1.bf16.xpose.msra.mxu0 0
    %2175 = vmatprep.subr.bf16.mxu0 0
    %2176 = vmatpush1.bf16.xpose.msra.mxu0 0
    %2177 = vmatprep.subr.bf16.mxu0 0
    %2178 = vmatpush1.bf16.xpose.msra.mxu0 0
    %2179 = vmatprep.subr.bf16.mxu0 0
    %2180 = vmatpush1.bf16.xpose.msra.mxu0 0
    %2181 = vmatprep.subr.bf16.mxu0 0
    %2182 = vmatpush1.bf16.xpose.msra.mxu0 0
    %2183 = vmatprep.subr.bf16.mxu0 0
    %2184 = vmatpush1.bf16.xpose.msra.mxu0 0
    %2185 = vmatprep.subr.bf16.mxu0 0
    %2186 = vmatpush1.bf16.xpose.msra.mxu0 0
    %2187 = vmatprep.subr.bf16.mxu0 0
    %2188 = vmatpush1.bf16.xpose.msra.mxu0 0
    %2189 = vmatprep.subr.bf16.mxu0 0
    %2190 = vmatpush1.bf16.xpose.msra.mxu0 0
    %2191 = vmatprep.mubr.bf16.mxu0 0
    %2192 = vmatmul.mubr.bf16.gmra.mrb[0].mxu0 %v2154
    %v2193 = vpop.f32.mrb[0].mxu0
    %v2194 = vadd.f32 0.0, %v2193
    %v2195 = vpop.f32.mrb[0].mxu0
    %v2196 = vpop.f32.mrb[0].mxu0
    %v2197 = vpop.f32.mrb[0].mxu0
    %2198 = vdwg.mxu0
    %2200 = vrot.lane.b32.xlu0 %v1949, 64
    %v2201 = vpop.permute.xlu0 %2200
    %2203 = vrot.lane.b32.xlu0 %v1952, 64
    %v2204 = vpop.permute.xlu0 %2203
    %v2206 = vsel %vm1956, %v2201, 0
    %v2209 = vsel %vm1956, %v2204, 0
    %2211 = vmatprep.subr.bf16.mxu0 0
    %2212 = vmatpush1.bf16.xpose.msra.mxu0 %v2209
    %2213 = vmatprep.subr.bf16.mxu0 0
    %2214 = vmatpush1.bf16.xpose.msra.mxu0 0
    %2215 = vmatprep.subr.bf16.mxu0 0
    %2216 = vmatpush1.bf16.xpose.msra.mxu0 0
    %2217 = vmatprep.subr.bf16.mxu0 0
    %2218 = vmatpush1.bf16.xpose.msra.mxu0 0
    %2219 = vmatprep.subr.bf16.mxu0 0
    %2220 = vmatpush1.bf16.xpose.msra.mxu0 0
    %2221 = vmatprep.subr.bf16.mxu0 0
    %2222 = vmatpush1.bf16.xpose.msra.mxu0 0
    %2223 = vmatprep.subr.bf16.mxu0 0
    %2224 = vmatpush1.bf16.xpose.msra.mxu0 0
    %2225 = vmatprep.subr.bf16.mxu0 0
    %2226 = vmatpush1.bf16.xpose.msra.mxu0 0
    %2227 = vmatprep.subr.bf16.mxu0 0
    %2228 = vmatpush1.bf16.xpose.msra.mxu0 0
    %2229 = vmatprep.subr.bf16.mxu0 0
    %2230 = vmatpush1.bf16.xpose.msra.mxu0 0
    %2231 = vmatprep.subr.bf16.mxu0 0
    %2232 = vmatpush1.bf16.xpose.msra.mxu0 0
    %2233 = vmatprep.subr.bf16.mxu0 0
    %2234 = vmatpush1.bf16.xpose.msra.mxu0 0
    %2235 = vmatprep.subr.bf16.mxu0 0
    %2236 = vmatpush1.bf16.xpose.msra.mxu0 0
    %2237 = vmatprep.subr.bf16.mxu0 0
    %2238 = vmatpush1.bf16.xpose.msra.mxu0 0
    %2239 = vmatprep.subr.bf16.mxu0 0
    %2240 = vmatpush1.bf16.xpose.msra.mxu0 0
    %2241 = vmatprep.subr.bf16.mxu0 0
    %2242 = vmatpush1.bf16.xpose.msra.mxu0 0
    %2243 = vmatprep.mubr.bf16.mxu0 0
    %2244 = vmatmul.mubr.bf16.gmra.mrb[0].mxu0 %v2206
    %v2245 = vpop.f32.mrb[0].mxu0
    %v2246 = vadd.f32 0.0, %v2245
    %v2247 = vpop.f32.mrb[0].mxu0
    %v2248 = vpop.f32.mrb[0].mxu0
    %v2249 = vpop.f32.mrb[0].mxu0
    %2250 = vdwg.mxu0
    %v2251 = vrot.slane %v1947, 4
    %v2252 = vrot.slane %v1950, 4
    %v2254 = vsel %vm1956, %v2251, 0
    %v2257 = vsel %vm1956, %v2252, 0
    %2259 = vmatprep.subr.bf16.mxu0 0
    %2260 = vmatpush1.bf16.xpose.msra.mxu0 %v2257
    %2261 = vmatprep.subr.bf16.mxu0 0
    %2262 = vmatpush1.bf16.xpose.msra.mxu0 0
    %2263 = vmatprep.subr.bf16.mxu0 0
    %2264 = vmatpush1.bf16.xpose.msra.mxu0 0
    %2265 = vmatprep.subr.bf16.mxu0 0
    %2266 = vmatpush1.bf16.xpose.msra.mxu0 0
    %2267 = vmatprep.subr.bf16.mxu0 0
    %2268 = vmatpush1.bf16.xpose.msra.mxu0 0
    %2269 = vmatprep.subr.bf16.mxu0 0
    %2270 = vmatpush1.bf16.xpose.msra.mxu0 0
    %2271 = vmatprep.subr.bf16.mxu0 0
    %2272 = vmatpush1.bf16.xpose.msra.mxu0 0
    %2273 = vmatprep.subr.bf16.mxu0 0
    %2274 = vmatpush1.bf16.xpose.msra.mxu0 0
    %2275 = vmatprep.subr.bf16.mxu0 0
    %2276 = vmatpush1.bf16.xpose.msra.mxu0 0
    %2277 = vmatprep.subr.bf16.mxu0 0
    %2278 = vmatpush1.bf16.xpose.msra.mxu0 0
    %2279 = vmatprep.subr.bf16.mxu0 0
    %2280 = vmatpush1.bf16.xpose.msra.mxu0 0
    %2281 = vmatprep.subr.bf16.mxu0 0
    %2282 = vmatpush1.bf16.xpose.msra.mxu0 0
    %2283 = vmatprep.subr.bf16.mxu0 0
    %2284 = vmatpush1.bf16.xpose.msra.mxu0 0
    %2285 = vmatprep.subr.bf16.mxu0 0
    %2286 = vmatpush1.bf16.xpose.msra.mxu0 0
    %2287 = vmatprep.subr.bf16.mxu0 0
    %2288 = vmatpush1.bf16.xpose.msra.mxu0 0
    %2289 = vmatprep.subr.bf16.mxu0 0
    %2290 = vmatpush1.bf16.xpose.msra.mxu0 0
    %2291 = vmatprep.mubr.bf16.mxu0 0
    %2292 = vmatmul.mubr.bf16.gmra.mrb[0].mxu0 %v2254
    %v2293 = vpop.f32.mrb[0].mxu0
    %v2294 = vadd.f32 0.0, %v2293
    %v2295 = vpop.f32.mrb[0].mxu0
    %v2296 = vpop.f32.mrb[0].mxu0
    %v2297 = vpop.f32.mrb[0].mxu0
    %2298 = vdwg.mxu0
    %2299 = vrot.lane.b32.xlu0 %v2251, 64
    %v2300 = vpop.permute.xlu0 %2299
    %2301 = vrot.lane.b32.xlu0 %v2252, 64
    %v2302 = vpop.permute.xlu0 %2301
    %v2304 = vsel %vm1956, %v2300, 0
    %v2307 = vsel %vm1956, %v2302, 0
    %2309 = vmatprep.subr.bf16.mxu0 0
    %2310 = vmatpush1.bf16.xpose.msra.mxu0 %v2307
    %2311 = vmatprep.subr.bf16.mxu0 0
    %2312 = vmatpush1.bf16.xpose.msra.mxu0 0
    %2313 = vmatprep.subr.bf16.mxu0 0
    %2314 = vmatpush1.bf16.xpose.msra.mxu0 0
    %2315 = vmatprep.subr.bf16.mxu0 0
    %2316 = vmatpush1.bf16.xpose.msra.mxu0 0
    %2317 = vmatprep.subr.bf16.mxu0 0
    %2318 = vmatpush1.bf16.xpose.msra.mxu0 0
    %2319 = vmatprep.subr.bf16.mxu0 0
    %2320 = vmatpush1.bf16.xpose.msra.mxu0 0
    %2321 = vmatprep.subr.bf16.mxu0 0
    %2322 = vmatpush1.bf16.xpose.msra.mxu0 0
    %2323 = vmatprep.subr.bf16.mxu0 0
    %2324 = vmatpush1.bf16.xpose.msra.mxu0 0
    %2325 = vmatprep.subr.bf16.mxu0 0
    %2326 = vmatpush1.bf16.xpose.msra.mxu0 0
    %2327 = vmatprep.subr.bf16.mxu0 0
    %2328 = vmatpush1.bf16.xpose.msra.mxu0 0
    %2329 = vmatprep.subr.bf16.mxu0 0
    %2330 = vmatpush1.bf16.xpose.msra.mxu0 0
    %2331 = vmatprep.subr.bf16.mxu0 0
    %2332 = vmatpush1.bf16.xpose.msra.mxu0 0
    %2333 = vmatprep.subr.bf16.mxu0 0
    %2334 = vmatpush1.bf16.xpose.msra.mxu0 0
    %2335 = vmatprep.subr.bf16.mxu0 0
    %2336 = vmatpush1.bf16.xpose.msra.mxu0 0
    %2337 = vmatprep.subr.bf16.mxu0 0
    %2338 = vmatpush1.bf16.xpose.msra.mxu0 0
    %2339 = vmatprep.subr.bf16.mxu0 0
    %2340 = vmatpush1.bf16.xpose.msra.mxu0 0
    %2341 = vmatprep.mubr.bf16.mxu0 0
    %2342 = vmatmul.mubr.bf16.gmra.mrb[0].mxu0 %v2304
    %v2343 = vpop.f32.mrb[0].mxu0
    %v2344 = vadd.f32 0.0, %v2343
    %v2345 = vpop.f32.mrb[0].mxu0
    %v2346 = vpop.f32.mrb[0].mxu0
    %v2347 = vpop.f32.mrb[0].mxu0
    %2348 = vdwg.mxu0
    %v2349 = vrot.slane %v1948, 4
    %v2350 = vrot.slane %v1951, 4
    %v2352 = vsel %vm1956, %v2349, 0
    %v2355 = vsel %vm1956, %v2350, 0
    %2357 = vmatprep.subr.bf16.mxu0 0
    %2358 = vmatpush1.bf16.xpose.msra.mxu0 %v2355
    %2359 = vmatprep.subr.bf16.mxu0 0
    %2360 = vmatpush1.bf16.xpose.msra.mxu0 0
    %2361 = vmatprep.subr.bf16.mxu0 0
    %2362 = vmatpush1.bf16.xpose.msra.mxu0 0
    %2363 = vmatprep.subr.bf16.mxu0 0
    %2364 = vmatpush1.bf16.xpose.msra.mxu0 0
    %2365 = vmatprep.subr.bf16.mxu0 0
    %2366 = vmatpush1.bf16.xpose.msra.mxu0 0
    %2367 = vmatprep.subr.bf16.mxu0 0
    %2368 = vmatpush1.bf16.xpose.msra.mxu0 0
    %2369 = vmatprep.subr.bf16.mxu0 0
    %2370 = vmatpush1.bf16.xpose.msra.mxu0 0
    %2371 = vmatprep.subr.bf16.mxu0 0
    %2372 = vmatpush1.bf16.xpose.msra.mxu0 0
    %2373 = vmatprep.subr.bf16.mxu0 0
    %2374 = vmatpush1.bf16.xpose.msra.mxu0 0
    %2375 = vmatprep.subr.bf16.mxu0 0
    %2376 = vmatpush1.bf16.xpose.msra.mxu0 0
    %2377 = vmatprep.subr.bf16.mxu0 0
    %2378 = vmatpush1.bf16.xpose.msra.mxu0 0
    %2379 = vmatprep.subr.bf16.mxu0 0
    %2380 = vmatpush1.bf16.xpose.msra.mxu0 0
    %2381 = vmatprep.subr.bf16.mxu0 0
    %2382 = vmatpush1.bf16.xpose.msra.mxu0 0
    %2383 = vmatprep.subr.bf16.mxu0 0
    %2384 = vmatpush1.bf16.xpose.msra.mxu0 0
    %2385 = vmatprep.subr.bf16.mxu0 0
    %2386 = vmatpush1.bf16.xpose.msra.mxu0 0
    %2387 = vmatprep.subr.bf16.mxu0 0
    %2388 = vmatpush1.bf16.xpose.msra.mxu0 0
    %2389 = vmatprep.mubr.bf16.mxu0 0
    %2390 = vmatmul.mubr.bf16.gmra.mrb[0].mxu0 %v2352
    %v2391 = vpop.f32.mrb[0].mxu0
    %v2392 = vadd.f32 0.0, %v2391
    %v2393 = vpop.f32.mrb[0].mxu0
    %v2394 = vpop.f32.mrb[0].mxu0
    %v2395 = vpop.f32.mrb[0].mxu0
    %2396 = vdwg.mxu0
    %2397 = vrot.lane.b32.xlu0 %v2349, 64
    %v2398 = vpop.permute.xlu0 %2397
    %2399 = vrot.lane.b32.xlu0 %v2350, 64
    %v2400 = vpop.permute.xlu0 %2399
    %v2402 = vsel %vm1956, %v2398, 0
    %v2405 = vsel %vm1956, %v2400, 0
    %2407 = vmatprep.subr.bf16.mxu0 0
    %2408 = vmatpush1.bf16.xpose.msra.mxu0 %v2405
    %2409 = vmatprep.subr.bf16.mxu0 0
    %2410 = vmatpush1.bf16.xpose.msra.mxu0 0
    %2411 = vmatprep.subr.bf16.mxu0 0
    %2412 = vmatpush1.bf16.xpose.msra.mxu0 0
    %2413 = vmatprep.subr.bf16.mxu0 0
    %2414 = vmatpush1.bf16.xpose.msra.mxu0 0
    %2415 = vmatprep.subr.bf16.mxu0 0
    %2416 = vmatpush1.bf16.xpose.msra.mxu0 0
    %2417 = vmatprep.subr.bf16.mxu0 0
    %2418 = vmatpush1.bf16.xpose.msra.mxu0 0
    %2419 = vmatprep.subr.bf16.mxu0 0
    %2420 = vmatpush1.bf16.xpose.msra.mxu0 0
    %2421 = vmatprep.subr.bf16.mxu0 0
    %2422 = vmatpush1.bf16.xpose.msra.mxu0 0
    %2423 = vmatprep.subr.bf16.mxu0 0
    %2424 = vmatpush1.bf16.xpose.msra.mxu0 0
    %2425 = vmatprep.subr.bf16.mxu0 0
    %2426 = vmatpush1.bf16.xpose.msra.mxu0 0
    %2427 = vmatprep.subr.bf16.mxu0 0
    %2428 = vmatpush1.bf16.xpose.msra.mxu0 0
    %2429 = vmatprep.subr.bf16.mxu0 0
    %2430 = vmatpush1.bf16.xpose.msra.mxu0 0
    %2431 = vmatprep.subr.bf16.mxu0 0
    %2432 = vmatpush1.bf16.xpose.msra.mxu0 0
    %2433 = vmatprep.subr.bf16.mxu0 0
    %2434 = vmatpush1.bf16.xpose.msra.mxu0 0
    %2435 = vmatprep.subr.bf16.mxu0 0
    %2436 = vmatpush1.bf16.xpose.msra.mxu0 0
    %2437 = vmatprep.subr.bf16.mxu0 0
    %2438 = vmatpush1.bf16.xpose.msra.mxu0 0
    %2439 = vmatprep.mubr.bf16.mxu0 0
    %2440 = vmatmul.mubr.bf16.gmra.mrb[0].mxu0 %v2402
    %v2441 = vpop.f32.mrb[0].mxu0
    %v2442 = vadd.f32 0.0, %v2441
    %v2443 = vpop.f32.mrb[0].mxu0
    %v2444 = vpop.f32.mrb[0].mxu0
    %v2445 = vpop.f32.mrb[0].mxu0
    %2446 = vdwg.mxu0
    %v2447 = vrot.slane %v1949, 4
    %v2448 = vrot.slane %v1952, 4
    %v2450 = vsel %vm1956, %v2447, 0
    %v2453 = vsel %vm1956, %v2448, 0
    %2455 = vmatprep.subr.bf16.mxu0 0
    %2456 = vmatpush1.bf16.xpose.msra.mxu0 %v2453
    %2457 = vmatprep.subr.bf16.mxu0 0
    %2458 = vmatpush1.bf16.xpose.msra.mxu0 0
    %2459 = vmatprep.subr.bf16.mxu0 0
    %2460 = vmatpush1.bf16.xpose.msra.mxu0 0
    %2461 = vmatprep.subr.bf16.mxu0 0
    %2462 = vmatpush1.bf16.xpose.msra.mxu0 0
    %2463 = vmatprep.subr.bf16.mxu0 0
    %2464 = vmatpush1.bf16.xpose.msra.mxu0 0
    %2465 = vmatprep.subr.bf16.mxu0 0
    %2466 = vmatpush1.bf16.xpose.msra.mxu0 0
    %2467 = vmatprep.subr.bf16.mxu0 0
    %2468 = vmatpush1.bf16.xpose.msra.mxu0 0
    %2469 = vmatprep.subr.bf16.mxu0 0
    %2470 = vmatpush1.bf16.xpose.msra.mxu0 0
    %2471 = vmatprep.subr.bf16.mxu0 0
    %2472 = vmatpush1.bf16.xpose.msra.mxu0 0
    %2473 = vmatprep.subr.bf16.mxu0 0
    %2474 = vmatpush1.bf16.xpose.msra.mxu0 0
    %2475 = vmatprep.subr.bf16.mxu0 0
    %2476 = vmatpush1.bf16.xpose.msra.mxu0 0
    %2477 = vmatprep.subr.bf16.mxu0 0
    %2478 = vmatpush1.bf16.xpose.msra.mxu0 0
    %2479 = vmatprep.subr.bf16.mxu0 0
    %2480 = vmatpush1.bf16.xpose.msra.mxu0 0
    %2481 = vmatprep.subr.bf16.mxu0 0
    %2482 = vmatpush1.bf16.xpose.msra.mxu0 0
    %2483 = vmatprep.subr.bf16.mxu0 0
    %2484 = vmatpush1.bf16.xpose.msra.mxu0 0
    %2485 = vmatprep.subr.bf16.mxu0 0
    %2486 = vmatpush1.bf16.xpose.msra.mxu0 0
    %2487 = vmatprep.mubr.bf16.mxu0 0
    %2488 = vmatmul.mubr.bf16.gmra.mrb[0].mxu0 %v2450
    %v2489 = vpop.f32.mrb[0].mxu0
    %v2490 = vadd.f32 0.0, %v2489
    %v2491 = vpop.f32.mrb[0].mxu0
    %v2492 = vpop.f32.mrb[0].mxu0
    %v2493 = vpop.f32.mrb[0].mxu0
    %2494 = vdwg.mxu0
    %2495 = vrot.lane.b32.xlu0 %v2447, 64
    %v2496 = vpop.permute.xlu0 %2495
    %2497 = vrot.lane.b32.xlu0 %v2448, 64
    %v2498 = vpop.permute.xlu0 %2497
    %v2500 = vsel %vm1956, %v2496, 0
    %v2503 = vsel %vm1956, %v2498, 0
    %2505 = vmatprep.subr.bf16.mxu0 0
    %2506 = vmatpush1.bf16.xpose.msra.mxu0 %v2503
    %2507 = vmatprep.subr.bf16.mxu0 0
    %2508 = vmatpush1.bf16.xpose.msra.mxu0 0
    %2509 = vmatprep.subr.bf16.mxu0 0
    %2510 = vmatpush1.bf16.xpose.msra.mxu0 0
    %2511 = vmatprep.subr.bf16.mxu0 0
    %2512 = vmatpush1.bf16.xpose.msra.mxu0 0
    %2513 = vmatprep.subr.bf16.mxu0 0
    %2514 = vmatpush1.bf16.xpose.msra.mxu0 0
    %2515 = vmatprep.subr.bf16.mxu0 0
    %2516 = vmatpush1.bf16.xpose.msra.mxu0 0
    %2517 = vmatprep.subr.bf16.mxu0 0
    %2518 = vmatpush1.bf16.xpose.msra.mxu0 0
    %2519 = vmatprep.subr.bf16.mxu0 0
    %2520 = vmatpush1.bf16.xpose.msra.mxu0 0
    %2521 = vmatprep.subr.bf16.mxu0 0
    %2522 = vmatpush1.bf16.xpose.msra.mxu0 0
    %2523 = vmatprep.subr.bf16.mxu0 0
    %2524 = vmatpush1.bf16.xpose.msra.mxu0 0
    %2525 = vmatprep.subr.bf16.mxu0 0
    %2526 = vmatpush1.bf16.xpose.msra.mxu0 0
    %2527 = vmatprep.subr.bf16.mxu0 0
    %2528 = vmatpush1.bf16.xpose.msra.mxu0 0
    %2529 = vmatprep.subr.bf16.mxu0 0
    %2530 = vmatpush1.bf16.xpose.msra.mxu0 0
    %2531 = vmatprep.subr.bf16.mxu0 0
    %2532 = vmatpush1.bf16.xpose.msra.mxu0 0
    %2533 = vmatprep.subr.bf16.mxu0 0
    %2534 = vmatpush1.bf16.xpose.msra.mxu0 0
    %2535 = vmatprep.subr.bf16.mxu0 0
    %2536 = vmatpush1.bf16.xpose.msra.mxu0 0
    %2537 = vmatprep.mubr.bf16.mxu0 0
    %2538 = vmatmul.mubr.bf16.gmra.mrb[0].mxu0 %v2500
    %v2539 = vpop.f32.mrb[0].mxu0
    %v2540 = vadd.f32 0.0, %v2539
    %v2541 = vpop.f32.mrb[0].mxu0
    %v2542 = vpop.f32.mrb[0].mxu0
    %v2543 = vpop.f32.mrb[0].mxu0
    %2544 = vdwg.mxu0
    %v2545 = vlaneseq
    %v2546 = vshrl.u32 %v2545, 7
    %v2547 = vadd.s32 %v2546, 8
    %v2548 = vadd.s32 %v2546, 16
    %v2549 = vadd.s32 %v2546, 24
    %v2550 = vadd.s32 %v2546, 32
    %v2551 = vadd.s32 %v2546, 40
    %v2552 = vadd.s32 %v2546, 48
    %v2553 = vadd.s32 %v2546, 56
    %v2554 = vadd.s32 %v2546, 64
    %v2555 = vadd.s32 %v2546, 72
    %v2556 = vadd.s32 %v2546, 80
    %v2557 = vadd.s32 %v2546, 88
    %v2558 = vlaneseq
    %v2559 = vand.u32 %v2558, 127
    %vm2560 = vcmp.lt.s32.totalorder %v2546, 0
    %v2561 = vsub.s32 0, %v2546
    %v2562 = vsel %vm2560, %v2561, %v2546
    %v2563 = vshrl.u32 %v2562, 3
    %v2564 = vand.u32 %v2562, 7
    %v2565 = vsub.s32 0, %v2564
    %v2566 = vsel %vm2560, %v2565, %v2564
    %vm2567 = vcmp.lt.s32.totalorder %v2547, 0
    %v2568 = vsub.s32 0, %v2547
    %v2569 = vsel %vm2567, %v2568, %v2547
    %v2570 = vshrl.u32 %v2569, 3
    %v2571 = vand.u32 %v2569, 7
    %v2572 = vsub.s32 0, %v2571
    %v2573 = vsel %vm2567, %v2572, %v2571
    %vm2574 = vcmp.lt.s32.totalorder %v2548, 0
    %v2575 = vsub.s32 0, %v2548
    %v2576 = vsel %vm2574, %v2575, %v2548
    %v2577 = vshrl.u32 %v2576, 3
    %v2578 = vand.u32 %v2576, 7
    %v2579 = vsub.s32 0, %v2578
    %v2580 = vsel %vm2574, %v2579, %v2578
    %vm2581 = vcmp.lt.s32.totalorder %v2549, 0
    %v2582 = vsub.s32 0, %v2549
    %v2583 = vsel %vm2581, %v2582, %v2549
    %v2584 = vshrl.u32 %v2583, 3
    %v2585 = vand.u32 %v2583, 7
    %v2586 = vsub.s32 0, %v2585
    %v2587 = vsel %vm2581, %v2586, %v2585
    %vm2588 = vcmp.lt.s32.totalorder %v2550, 0
    %v2589 = vsub.s32 0, %v2550
    %v2590 = vsel %vm2588, %v2589, %v2550
    %v2591 = vshrl.u32 %v2590, 3
    %v2592 = vand.u32 %v2590, 7
    %v2593 = vsub.s32 0, %v2592
    %v2594 = vsel %vm2588, %v2593, %v2592
    %vm2595 = vcmp.lt.s32.totalorder %v2551, 0
    %v2596 = vsub.s32 0, %v2551
    %v2597 = vsel %vm2595, %v2596, %v2551
    %v2598 = vshrl.u32 %v2597, 3
    %v2599 = vand.u32 %v2597, 7
    %v2600 = vsub.s32 0, %v2599
    %v2601 = vsel %vm2595, %v2600, %v2599
    %vm2602 = vcmp.lt.s32.totalorder %v2552, 0
    %v2603 = vsub.s32 0, %v2552
    %v2604 = vsel %vm2602, %v2603, %v2552
    %v2605 = vshrl.u32 %v2604, 3
    %v2606 = vand.u32 %v2604, 7
    %v2607 = vsub.s32 0, %v2606
    %v2608 = vsel %vm2602, %v2607, %v2606
    %vm2609 = vcmp.lt.s32.totalorder %v2553, 0
    %v2610 = vsub.s32 0, %v2553
    %v2611 = vsel %vm2609, %v2610, %v2553
    %v2612 = vshrl.u32 %v2611, 3
    %v2613 = vand.u32 %v2611, 7
    %v2614 = vsub.s32 0, %v2613
    %v2615 = vsel %vm2609, %v2614, %v2613
    %vm2616 = vcmp.lt.s32.totalorder %v2554, 0
    %v2617 = vsub.s32 0, %v2554
    %v2618 = vsel %vm2616, %v2617, %v2554
    %v2619 = vshrl.u32 %v2618, 3
    %v2620 = vand.u32 %v2618, 7
    %v2621 = vsub.s32 0, %v2620
    %v2622 = vsel %vm2616, %v2621, %v2620
    %vm2623 = vcmp.lt.s32.totalorder %v2555, 0
    %v2624 = vsub.s32 0, %v2555
    %v2625 = vsel %vm2623, %v2624, %v2555
    %v2626 = vshrl.u32 %v2625, 3
    %v2627 = vand.u32 %v2625, 7
    %v2628 = vsub.s32 0, %v2627
    %v2629 = vsel %vm2623, %v2628, %v2627
    %vm2630 = vcmp.lt.s32.totalorder %v2556, 0
    %v2631 = vsub.s32 0, %v2556
    %v2632 = vsel %vm2630, %v2631, %v2556
    %v2633 = vshrl.u32 %v2632, 3
    %v2634 = vand.u32 %v2632, 7
    %v2635 = vsub.s32 0, %v2634
    %v2636 = vsel %vm2630, %v2635, %v2634
    %vm2637 = vcmp.lt.s32.totalorder %v2557, 0
    %v2638 = vsub.s32 0, %v2557
    %v2639 = vsel %vm2637, %v2638, %v2557
    %v2640 = vshrl.u32 %v2639, 3
    %v2641 = vand.u32 %v2639, 7
    %v2642 = vsub.s32 0, %v2641
    %v2643 = vsel %vm2637, %v2642, %v2641
    %vm2644 = vcmp.ne.s32.totalorder %v2566, 0
    %vm2645 = vcmp.ne.s32.totalorder %v2573, 0
    %vm2646 = vcmp.ne.s32.totalorder %v2580, 0
    %vm2647 = vcmp.ne.s32.totalorder %v2587, 0
    %vm2648 = vcmp.ne.s32.totalorder %v2594, 0
    %vm2649 = vcmp.ne.s32.totalorder %v2601, 0
    %vm2650 = vcmp.ne.s32.totalorder %v2608, 0
    %vm2651 = vcmp.ne.s32.totalorder %v2615, 0
    %vm2652 = vcmp.ne.s32.totalorder %v2622, 0
    %vm2653 = vcmp.ne.s32.totalorder %v2629, 0
    %vm2654 = vcmp.ne.s32.totalorder %v2636, 0
    %vm2655 = vcmp.ne.s32.totalorder %v2643, 0
    %vm2656 = vcmp.lt.s32.totalorder %v2566, 0
    %vm2657 = vcmp.lt.s32.totalorder %v2573, 0
    %vm2658 = vcmp.lt.s32.totalorder %v2580, 0
    %vm2659 = vcmp.lt.s32.totalorder %v2587, 0
    %vm2660 = vcmp.lt.s32.totalorder %v2594, 0
    %vm2661 = vcmp.lt.s32.totalorder %v2601, 0
    %vm2662 = vcmp.lt.s32.totalorder %v2608, 0
    %vm2663 = vcmp.lt.s32.totalorder %v2615, 0
    %vm2664 = vcmp.lt.s32.totalorder %v2622, 0
    %vm2665 = vcmp.lt.s32.totalorder %v2629, 0
    %vm2666 = vcmp.lt.s32.totalorder %v2636, 0
    %vm2667 = vcmp.lt.s32.totalorder %v2643, 0
    %vm2668 = vmand %vm2656, %vm2644
    %vm2669 = vmand %vm2657, %vm2645
    %vm2670 = vmand %vm2658, %vm2646
    %vm2671 = vmand %vm2659, %vm2647
    %vm2672 = vmand %vm2660, %vm2648
    %vm2673 = vmand %vm2661, %vm2649
    %vm2674 = vmand %vm2662, %vm2650
    %vm2675 = vmand %vm2663, %vm2651
    %vm2676 = vmand %vm2664, %vm2652
    %vm2677 = vmand %vm2665, %vm2653
    %vm2678 = vmand %vm2666, %vm2654
    %vm2679 = vmand %vm2667, %vm2655
    %v2680 = vadd.s32 %v2566, 8
    %v2681 = vadd.s32 %v2573, 8
    %v2682 = vadd.s32 %v2580, 8
    %v2683 = vadd.s32 %v2587, 8
    %v2684 = vadd.s32 %v2594, 8
    %v2685 = vadd.s32 %v2601, 8
    %v2686 = vadd.s32 %v2608, 8
    %v2687 = vadd.s32 %v2615, 8
    %v2688 = vadd.s32 %v2622, 8
    %v2689 = vadd.s32 %v2629, 8
    %v2690 = vadd.s32 %v2636, 8
    %v2691 = vadd.s32 %v2643, 8
    %v2692 = vsel %vm2668, %v2680, %v2566
    %v2693 = vsel %vm2669, %v2681, %v2573
    %v2694 = vsel %vm2670, %v2682, %v2580
    %v2695 = vsel %vm2671, %v2683, %v2587
    %v2696 = vsel %vm2672, %v2684, %v2594
    %v2697 = vsel %vm2673, %v2685, %v2601
    %v2698 = vsel %vm2674, %v2686, %v2608
    %v2699 = vsel %vm2675, %v2687, %v2615
    %v2700 = vsel %vm2676, %v2688, %v2622
    %v2701 = vsel %vm2677, %v2689, %v2629
    %v2702 = vsel %vm2678, %v2690, %v2636
    %v2703 = vsel %vm2679, %v2691, %v2643
    %vm2704 = vcmp.le.s32.totalorder %v2559, %v2692
    %vm2705 = vcmp.le.s32.totalorder %v2559, %v2693
    %vm2706 = vcmp.le.s32.totalorder %v2559, %v2694
    %vm2707 = vcmp.le.s32.totalorder %v2559, %v2695
    %vm2708 = vcmp.le.s32.totalorder %v2559, %v2696
    %vm2709 = vcmp.le.s32.totalorder %v2559, %v2697
    %vm2710 = vcmp.le.s32.totalorder %v2559, %v2698
    %vm2711 = vcmp.le.s32.totalorder %v2559, %v2699
    %vm2712 = vcmp.le.s32.totalorder %v2559, %v2700
    %vm2713 = vcmp.le.s32.totalorder %v2559, %v2701
    %vm2714 = vcmp.le.s32.totalorder %v2559, %v2702
    %vm2715 = vcmp.le.s32.totalorder %v2559, %v2703
    %v2716 = vsel %vm2704, %v1998, -1e+30
    %v2717 = vsel %vm2705, %v2050, -1e+30
    %v2718 = vsel %vm2706, %v2096, -1e+30
    %v2719 = vsel %vm2707, %v2148, -1e+30
    %v2720 = vsel %vm2708, %v2194, -1e+30
    %v2721 = vsel %vm2709, %v2246, -1e+30
    %v2722 = vsel %vm2710, %v2294, -1e+30
    %v2723 = vsel %vm2711, %v2344, -1e+30
    %v2724 = vsel %vm2712, %v2392, -1e+30
    %v2725 = vsel %vm2713, %v2442, -1e+30
    %v2726 = vsel %vm2714, %v2490, -1e+30
    %v2727 = vsel %vm2715, %v2540, -1e+30
    %vm2728 = vcmask 64512
    %v2729 = vsel %vm2728, %v2716, -inf
    %2730 = vmax.xlane.f32.xlu0 %v2729
    %v2731 = vpop.xlane.xlu0 %2730
    %v2732 = vsel %vm2728, %v2717, -inf
    %2733 = vmax.xlane.f32.xlu0 %v2732
    %v2734 = vpop.xlane.xlu0 %2733
    %v2735 = vsel %vm2728, %v2718, -inf
    %2736 = vmax.xlane.f32.xlu0 %v2735
    %v2737 = vpop.xlane.xlu0 %2736
    %v2738 = vsel %vm2728, %v2719, -inf
    %2739 = vmax.xlane.f32.xlu0 %v2738
    %v2740 = vpop.xlane.xlu0 %2739
    %v2741 = vsel %vm2728, %v2720, -inf
    %2742 = vmax.xlane.f32.xlu0 %v2741
    %v2743 = vpop.xlane.xlu0 %2742
    %v2744 = vsel %vm2728, %v2721, -inf
    %2745 = vmax.xlane.f32.xlu0 %v2744
    %v2746 = vpop.xlane.xlu0 %2745
    %v2747 = vsel %vm2728, %v2722, -inf
    %2748 = vmax.xlane.f32.xlu0 %v2747
    %v2749 = vpop.xlane.xlu0 %2748
    %v2750 = vsel %vm2728, %v2723, -inf
    %2751 = vmax.xlane.f32.xlu0 %v2750
    %v2752 = vpop.xlane.xlu0 %2751
    %v2753 = vsel %vm2728, %v2724, -inf
    %2754 = vmax.xlane.f32.xlu0 %v2753
    %v2755 = vpop.xlane.xlu0 %2754
    %v2756 = vsel %vm2728, %v2725, -inf
    %2757 = vmax.xlane.f32.xlu0 %v2756
    %v2758 = vpop.xlane.xlu0 %2757
    %v2759 = vsel %vm2728, %v2726, -inf
    %2760 = vmax.xlane.f32.xlu0 %v2759
    %v2761 = vpop.xlane.xlu0 %2760
    %v2762 = vsel %vm2728, %v2727, -inf
    %2763 = vmax.xlane.f32.xlu0 %v2762
    %v2764 = vpop.xlane.xlu0 %2763
    %v2765 = vsub.f32 %v2716, %v2731
    %v2766 = vsub.f32 %v2717, %v2734
    %v2767 = vsub.f32 %v2718, %v2737
    %v2768 = vsub.f32 %v2719, %v2740
    %v2769 = vsub.f32 %v2720, %v2743
    %v2770 = vsub.f32 %v2721, %v2746
    %v2771 = vsub.f32 %v2722, %v2749
    %v2772 = vsub.f32 %v2723, %v2752
    %v2773 = vsub.f32 %v2724, %v2755
    %v2774 = vsub.f32 %v2725, %v2758
    %v2775 = vsub.f32 %v2726, %v2761
    %v2776 = vsub.f32 %v2727, %v2764
    %v2777 = vmul.f32 %v2765, 1.442695
    %v2778 = vpow.pop %v2777
    %v2779 = vmul.f32 %v2766, 1.442695
    %v2780 = vpow.pop %v2779
    %v2781 = vmul.f32 %v2767, 1.442695
    %v2782 = vpow.pop %v2781
    %v2783 = vmul.f32 %v2768, 1.442695
    %v2784 = vpow.pop %v2783
    %v2785 = vmul.f32 %v2769, 1.442695
    %v2786 = vpow.pop %v2785
    %v2787 = vmul.f32 %v2770, 1.442695
    %v2788 = vpow.pop %v2787
    %v2789 = vmul.f32 %v2771, 1.442695
    %v2790 = vpow.pop %v2789
    %v2791 = vmul.f32 %v2772, 1.442695
    %v2792 = vpow.pop %v2791
    %v2793 = vmul.f32 %v2773, 1.442695
    %v2794 = vpow.pop %v2793
    %v2795 = vmul.f32 %v2774, 1.442695
    %v2796 = vpow.pop %v2795
    %v2797 = vmul.f32 %v2775, 1.442695
    %v2798 = vpow.pop %v2797
    %v2799 = vmul.f32 %v2776, 1.442695
    %v2800 = vpow.pop %v2799
    %v2801 = vsel %vm2728, %v2778, 0.0
    %2802 = vadd.xlane.f32.xlu0 %v2801
    %v2803 = vpop.xlane.xlu0 %2802
    %v2804 = vsel %vm2728, %v2780, 0.0
    %2805 = vadd.xlane.f32.xlu0 %v2804
    %v2806 = vpop.xlane.xlu0 %2805
    %v2807 = vsel %vm2728, %v2782, 0.0
    %2808 = vadd.xlane.f32.xlu0 %v2807
    %v2809 = vpop.xlane.xlu0 %2808
    %v2810 = vsel %vm2728, %v2784, 0.0
    %2811 = vadd.xlane.f32.xlu0 %v2810
    %v2812 = vpop.xlane.xlu0 %2811
    %v2813 = vsel %vm2728, %v2786, 0.0
    %2814 = vadd.xlane.f32.xlu0 %v2813
    %v2815 = vpop.xlane.xlu0 %2814
    %v2816 = vsel %vm2728, %v2788, 0.0
    %2817 = vadd.xlane.f32.xlu0 %v2816
    %v2818 = vpop.xlane.xlu0 %2817
    %v2819 = vsel %vm2728, %v2790, 0.0
    %2820 = vadd.xlane.f32.xlu0 %v2819
    %v2821 = vpop.xlane.xlu0 %2820
    %v2822 = vsel %vm2728, %v2792, 0.0
    %2823 = vadd.xlane.f32.xlu0 %v2822
    %v2824 = vpop.xlane.xlu0 %2823
    %v2825 = vsel %vm2728, %v2794, 0.0
    %2826 = vadd.xlane.f32.xlu0 %v2825
    %v2827 = vpop.xlane.xlu0 %2826
    %v2828 = vsel %vm2728, %v2796, 0.0
    %2829 = vadd.xlane.f32.xlu0 %v2828
    %v2830 = vpop.xlane.xlu0 %2829
    %v2831 = vsel %vm2728, %v2798, 0.0
    %2832 = vadd.xlane.f32.xlu0 %v2831
    %v2833 = vpop.xlane.xlu0 %2832
    %v2834 = vsel %vm2728, %v2800, 0.0
    %2835 = vadd.xlane.f32.xlu0 %v2834
    %v2836 = vpop.xlane.xlu0 %2835
    %v2837 = vrcp.pop %v2803
    %v2838 = vrcp.pop %v2806
    %v2839 = vrcp.pop %v2809
    %v2840 = vrcp.pop %v2812
    %v2841 = vrcp.pop %v2815
    %v2842 = vrcp.pop %v2818
    %v2843 = vrcp.pop %v2821
    %v2844 = vrcp.pop %v2824
    %v2845 = vrcp.pop %v2827
    %v2846 = vrcp.pop %v2830
    %v2847 = vrcp.pop %v2833
    %v2848 = vrcp.pop %v2836
    %v2849 = vmul.f32 %v2778, %v2837
    %v2850 = vmul.f32 %v2780, %v2838
    %v2851 = vmul.f32 %v2782, %v2839
    %v2852 = vmul.f32 %v2784, %v2840
    %v2853 = vmul.f32 %v2786, %v2841
    %v2854 = vmul.f32 %v2788, %v2842
    %v2855 = vmul.f32 %v2790, %v2843
    %v2856 = vmul.f32 %v2792, %v2844
    %v2857 = vmul.f32 %v2794, %v2845
    %v2858 = vmul.f32 %v2796, %v2846
    %v2859 = vmul.f32 %v2798, %v2847
    %v2860 = vmul.f32 %v2800, %v2848
    %v2861 = vpack.c.bf16 %v2850, %v2849
    %v2862 = vpack.c.bf16 %v2852, %v2851
    %v2863 = vpack.c.bf16 %v2854, %v2853
    %v2864 = vpack.c.bf16 %v2856, %v2855
    %v2865 = vpack.c.bf16 %v2858, %v2857
    %v2866 = vpack.c.bf16 %v2860, %v2859
    %v2868 = vsel %vm2728, %v2861, 0
    %vm2870 = vcmask 1043456
    %v2872 = vsel %vm2870, %v1953, 0
    %2874 = vmatprep.subr.bf16.mxu0 0
    %2875 = vmatpush1.bf16.msra.mxu0 %v2872
    %2876 = vmatprep.subr.bf16.mxu0 0
    %2877 = vmatpush1.bf16.msra.mxu0 0
    %2878 = vmatprep.subr.bf16.mxu0 0
    %2879 = vmatpush1.bf16.msra.mxu0 0
    %2880 = vmatprep.subr.bf16.mxu0 0
    %2881 = vmatpush1.bf16.msra.mxu0 0
    %2882 = vmatprep.subr.bf16.mxu0 0
    %2883 = vmatpush1.bf16.msra.mxu0 0
    %2884 = vmatprep.subr.bf16.mxu0 0
    %2885 = vmatpush1.bf16.msra.mxu0 0
    %2886 = vmatprep.subr.bf16.mxu0 0
    %2887 = vmatpush1.bf16.msra.mxu0 0
    %2888 = vmatprep.subr.bf16.mxu0 0
    %2889 = vmatpush1.bf16.msra.mxu0 0
    %2890 = vmatprep.subr.bf16.mxu0 0
    %2891 = vmatpush1.bf16.msra.mxu0 0
    %2892 = vmatprep.subr.bf16.mxu0 0
    %2893 = vmatpush1.bf16.msra.mxu0 0
    %2894 = vmatprep.subr.bf16.mxu0 0
    %2895 = vmatpush1.bf16.msra.mxu0 0
    %2896 = vmatprep.subr.bf16.mxu0 0
    %2897 = vmatpush1.bf16.msra.mxu0 0
    %2898 = vmatprep.subr.bf16.mxu0 0
    %2899 = vmatpush1.bf16.msra.mxu0 0
    %2900 = vmatprep.subr.bf16.mxu0 0
    %2901 = vmatpush1.bf16.msra.mxu0 0
    %2902 = vmatprep.subr.bf16.mxu0 0
    %2903 = vmatpush1.bf16.msra.mxu0 0
    %2904 = vmatprep.subr.bf16.mxu0 0
    %2905 = vmatpush1.bf16.msra.mxu0 0
    %2906 = vmatprep.mubr.bf16.mxu0 0
    %2907 = vmatmul.mubr.bf16.gmra.mrb[0].mxu0 %v2868
    %v2908 = vpop.f32.mrb[0].mxu0
    %v2909 = vadd.f32 0.0, %v2908
    %v2910 = vpop.f32.mrb[0].mxu0
    %v2911 = vpop.f32.mrb[0].mxu0
    %v2912 = vpop.f32.mrb[0].mxu0
    %2913 = vdwg.mxu0
    %v2914 = vpack.c.bf16 %v2909, %v2909
    %v2916 = vrot.slane %v2861, 4
    %2918 = vrot.lane.b32.xlu0 %v1953, 64
    %v2919 = vpop.permute.xlu0 %2918
    %v2921 = vsel %vm2728, %v2916, 0
    %v2924 = vsel %vm2870, %v2919, 0
    %2926 = vmatprep.subr.bf16.mxu0 0
    %2927 = vmatpush1.bf16.msra.mxu0 %v2924
    %2928 = vmatprep.subr.bf16.mxu0 0
    %2929 = vmatpush1.bf16.msra.mxu0 0
    %2930 = vmatprep.subr.bf16.mxu0 0
    %2931 = vmatpush1.bf16.msra.mxu0 0
    %2932 = vmatprep.subr.bf16.mxu0 0
    %2933 = vmatpush1.bf16.msra.mxu0 0
    %2934 = vmatprep.subr.bf16.mxu0 0
    %2935 = vmatpush1.bf16.msra.mxu0 0
    %2936 = vmatprep.subr.bf16.mxu0 0
    %2937 = vmatpush1.bf16.msra.mxu0 0
    %2938 = vmatprep.subr.bf16.mxu0 0
    %2939 = vmatpush1.bf16.msra.mxu0 0
    %2940 = vmatprep.subr.bf16.mxu0 0
    %2941 = vmatpush1.bf16.msra.mxu0 0
    %2942 = vmatprep.subr.bf16.mxu0 0
    %2943 = vmatpush1.bf16.msra.mxu0 0
    %2944 = vmatprep.subr.bf16.mxu0 0
    %2945 = vmatpush1.bf16.msra.mxu0 0
    %2946 = vmatprep.subr.bf16.mxu0 0
    %2947 = vmatpush1.bf16.msra.mxu0 0
    %2948 = vmatprep.subr.bf16.mxu0 0
    %2949 = vmatpush1.bf16.msra.mxu0 0
    %2950 = vmatprep.subr.bf16.mxu0 0
    %2951 = vmatpush1.bf16.msra.mxu0 0
    %2952 = vmatprep.subr.bf16.mxu0 0
    %2953 = vmatpush1.bf16.msra.mxu0 0
    %2954 = vmatprep.subr.bf16.mxu0 0
    %2955 = vmatpush1.bf16.msra.mxu0 0
    %2956 = vmatprep.subr.bf16.mxu0 0
    %2957 = vmatpush1.bf16.msra.mxu0 0
    %2958 = vmatprep.mubr.bf16.mxu0 0
    %2959 = vmatmul.mubr.bf16.gmra.mrb[0].mxu0 %v2921
    %v2960 = vpop.f32.mrb[0].mxu0
    %v2961 = vadd.f32 0.0, %v2960
    %v2962 = vpop.f32.mrb[0].mxu0
    %v2963 = vpop.f32.mrb[0].mxu0
    %v2964 = vpop.f32.mrb[0].mxu0
    %2965 = vdwg.mxu0
    %v2966 = vpack.c.bf16 %v2961, %v2961
    %v2983 = vunpack.c.l.b16 %v320
    %v2984 = vunpack.c.h.b16 %v320
    %v2985 = vunpack.c.l.b16 %v321
    %v2986 = vunpack.c.l.b16 %v322
    %v2987 = vunpack.c.h.b16 %v322
    %v2988 = vunpack.c.l.b16 %v323
    %v2989 = vunpack.c.l.b16 %v324
    %v2990 = vunpack.c.h.b16 %v324
    %v2991 = vunpack.c.l.b16 %v325
    %v2992 = vunpack.c.l.b16 %v326
    %v2993 = vunpack.c.h.b16 %v326
    %v2994 = vunpack.c.l.b16 %v327
    %v2995 = vunpack.c.l.b16 %v328
    %v2996 = vunpack.c.h.b16 %v328
    %v2997 = vunpack.c.l.b16 %v329
    %v2998 = vunpack.c.l.b16 %v330
    %v2999 = vunpack.c.h.b16 %v330
    %v3000 = vunpack.c.l.b16 %v331
    %v3001 = vunpack.c.l.b16 %v332
    %v3002 = vunpack.c.h.b16 %v332
    %v3003 = vunpack.c.l.b16 %v333
    %v3004 = vunpack.c.l.b16 %v334
    %v3005 = vunpack.c.h.b16 %v334
    %v3006 = vunpack.c.l.b16 %v335
    %v3007 = vpack.c.b16 %v2986, %v2983
    %v3008 = vpack.c.b16 %v2987, %v2984
    %v3009 = vpack.c.b16 %v2988, %v2985
    %v3010 = vpack.c.b16 %v2992, %v2989
    %v3011 = vpack.c.b16 %v2993, %v2990
    %v3012 = vpack.c.b16 %v2994, %v2991
    %v3013 = vpack.c.b16 %v2998, %v2995
    %v3014 = vpack.c.b16 %v2999, %v2996
    %v3015 = vpack.c.b16 %v3000, %v2997
    %v3016 = vpack.c.b16 %v3004, %v3001
    %v3017 = vpack.c.b16 %v3005, %v3002
    %v3018 = vpack.c.b16 %v3006, %v3003
    %v3032 = vsel %vm1956, %v2966, 0
    %3034 = vmatprep.subr.bf16.mxu0 %v3008
    %3035 = vmatpush1.bf16.msra.mxu0 %v3007
    %3036 = vmatprep.subr.bf16.mxu0 %v3011
    %3037 = vmatpush1.bf16.msra.mxu0 %v3010
    %3038 = vmatprep.subr.bf16.mxu0 %v3014
    %3039 = vmatpush1.bf16.msra.mxu0 %v3013
    %3040 = vmatprep.subr.bf16.mxu0 %v3017
    %3041 = vmatpush1.bf16.msra.mxu0 %v3016
    %3042 = vmatprep.subr.bf16.mxu0 0
    %3043 = vmatpush1.bf16.msra.mxu0 0
    %3044 = vmatprep.subr.bf16.mxu0 0
    %3045 = vmatpush1.bf16.msra.mxu0 0
    %3046 = vmatprep.subr.bf16.mxu0 0
    %3047 = vmatpush1.bf16.msra.mxu0 0
    %3048 = vmatprep.subr.bf16.mxu0 0
    %3049 = vmatpush1.bf16.msra.mxu0 0
    %3050 = vmatprep.subr.bf16.mxu0 0
    %3051 = vmatpush1.bf16.msra.mxu0 0
    %3052 = vmatprep.subr.bf16.mxu0 0
    %3053 = vmatpush1.bf16.msra.mxu0 0
    %3054 = vmatprep.subr.bf16.mxu0 0
    %3055 = vmatpush1.bf16.msra.mxu0 0
    %3056 = vmatprep.subr.bf16.mxu0 0
    %3057 = vmatpush1.bf16.msra.mxu0 0
    %3058 = vmatprep.subr.bf16.mxu0 0
    %3059 = vmatpush1.bf16.msra.mxu0 0
    %3060 = vmatprep.subr.bf16.mxu0 0
    %3061 = vmatpush1.bf16.msra.mxu0 0
    %3062 = vmatprep.subr.bf16.mxu0 0
    %3063 = vmatpush1.bf16.msra.mxu0 0
    %3064 = vmatprep.subr.bf16.mxu0 0
    %3065 = vmatpush1.bf16.msra.mxu0 0
    %3066 = vmatprep.mubr.bf16.mxu0 0
    %3067 = vmatmul.mubr.bf16.gmra.mrb[0].mxu0 %v3032
    %v3068 = vpop.f32.mrb[0].mxu0
    %v3069 = vadd.f32 0.0, %v3068
    %v3070 = vpop.f32.mrb[0].mxu0
    %v3071 = vadd.f32 0.0, %v3070
    %v3072 = vpop.f32.mrb[0].mxu0
    %v3073 = vpop.f32.mrb[0].mxu0
    %3074 = vdwg.mxu0
    %3075 = vmatprep.subr.bf16.mxu0 0
    %3076 = vmatpush1.bf16.msra.mxu0 %v3009
    %3077 = vmatprep.subr.bf16.mxu0 0
    %3078 = vmatpush1.bf16.msra.mxu0 %v3012
    %3079 = vmatprep.subr.bf16.mxu0 0
    %3080 = vmatpush1.bf16.msra.mxu0 %v3015
    %3081 = vmatprep.subr.bf16.mxu0 0
    %3082 = vmatpush1.bf16.msra.mxu0 %v3018
    %3083 = vmatprep.subr.bf16.mxu0 0
    %3084 = vmatpush1.bf16.msra.mxu0 0
    %3085 = vmatprep.subr.bf16.mxu0 0
    %3086 = vmatpush1.bf16.msra.mxu0 0
    %3087 = vmatprep.subr.bf16.mxu0 0
    %3088 = vmatpush1.bf16.msra.mxu0 0
    %3089 = vmatprep.subr.bf16.mxu0 0
    %3090 = vmatpush1.bf16.msra.mxu0 0
    %3091 = vmatprep.subr.bf16.mxu0 0
    %3092 = vmatpush1.bf16.msra.mxu0 0
    %3093 = vmatprep.subr.bf16.mxu0 0
    %3094 = vmatpush1.bf16.msra.mxu0 0
    %3095 = vmatprep.subr.bf16.mxu0 0
    %3096 = vmatpush1.bf16.msra.mxu0 0
    %3097 = vmatprep.subr.bf16.mxu0 0
    %3098 = vmatpush1.bf16.msra.mxu0 0
    %3099 = vmatprep.subr.bf16.mxu0 0
    %3100 = vmatpush1.bf16.msra.mxu0 0
    %3101 = vmatprep.subr.bf16.mxu0 0
    %3102 = vmatpush1.bf16.msra.mxu0 0
    %3103 = vmatprep.subr.bf16.mxu0 0
    %3104 = vmatpush1.bf16.msra.mxu0 0
    %3105 = vmatprep.subr.bf16.mxu0 0
    %3106 = vmatpush1.bf16.msra.mxu0 0
    %3107 = vmatprep.mubr.bf16.mxu0 0
    %3108 = vmatmul.mubr.bf16.gmra.mrb[0].mxu0 %v3032
    %v3109 = vpop.f32.mrb[0].mxu0
    %v3110 = vadd.f32 0.0, %v3109
    %v3111 = vpop.f32.mrb[0].mxu0
    %v3112 = vpop.f32.mrb[0].mxu0
    %v3113 = vpop.f32.mrb[0].mxu0
    %3114 = vdwg.mxu0
    %v3131 = vunpack.c.l.b16 %v304
    %v3132 = vunpack.c.h.b16 %v304
    %v3133 = vunpack.c.l.b16 %v305
    %v3134 = vunpack.c.l.b16 %v306
    %v3135 = vunpack.c.h.b16 %v306
    %v3136 = vunpack.c.l.b16 %v307
    %v3137 = vunpack.c.l.b16 %v308
    %v3138 = vunpack.c.h.b16 %v308
    %v3139 = vunpack.c.l.b16 %v309
    %v3140 = vunpack.c.l.b16 %v310
    %v3141 = vunpack.c.h.b16 %v310
    %v3142 = vunpack.c.l.b16 %v311
    %v3143 = vunpack.c.l.b16 %v312
    %v3144 = vunpack.c.h.b16 %v312
    %v3145 = vunpack.c.l.b16 %v313
    %v3146 = vunpack.c.l.b16 %v314
    %v3147 = vunpack.c.h.b16 %v314
    %v3148 = vunpack.c.l.b16 %v315
    %v3149 = vunpack.c.l.b16 %v316
    %v3150 = vunpack.c.h.b16 %v316
    %v3151 = vunpack.c.l.b16 %v317
    %v3152 = vunpack.c.l.b16 %v318
    %v3153 = vunpack.c.h.b16 %v318
    %v3154 = vunpack.c.l.b16 %v319
    %v3155 = vpack.c.b16 %v3134, %v3131
    %v3156 = vpack.c.b16 %v3135, %v3132
    %v3157 = vpack.c.b16 %v3136, %v3133
    %v3158 = vpack.c.b16 %v3140, %v3137
    %v3159 = vpack.c.b16 %v3141, %v3138
    %v3160 = vpack.c.b16 %v3142, %v3139
    %v3161 = vpack.c.b16 %v3146, %v3143
    %v3162 = vpack.c.b16 %v3147, %v3144
    %v3163 = vpack.c.b16 %v3148, %v3145
    %v3164 = vpack.c.b16 %v3152, %v3149
    %v3165 = vpack.c.b16 %v3153, %v3150
    %v3166 = vpack.c.b16 %v3154, %v3151
    %v3180 = vsel %vm1956, %v2914, 0
    %3182 = vmatprep.subr.bf16.mxu0 %v3156
    %3183 = vmatpush1.bf16.msra.mxu0 %v3155
    %3184 = vmatprep.subr.bf16.mxu0 %v3159
    %3185 = vmatpush1.bf16.msra.mxu0 %v3158
    %3186 = vmatprep.subr.bf16.mxu0 %v3162
    %3187 = vmatpush1.bf16.msra.mxu0 %v3161
    %3188 = vmatprep.subr.bf16.mxu0 %v3165
    %3189 = vmatpush1.bf16.msra.mxu0 %v3164
    %3190 = vmatprep.subr.bf16.mxu0 0
    %3191 = vmatpush1.bf16.msra.mxu0 0
    %3192 = vmatprep.subr.bf16.mxu0 0
    %3193 = vmatpush1.bf16.msra.mxu0 0
    %3194 = vmatprep.subr.bf16.mxu0 0
    %3195 = vmatpush1.bf16.msra.mxu0 0
    %3196 = vmatprep.subr.bf16.mxu0 0
    %3197 = vmatpush1.bf16.msra.mxu0 0
    %3198 = vmatprep.subr.bf16.mxu0 0
    %3199 = vmatpush1.bf16.msra.mxu0 0
    %3200 = vmatprep.subr.bf16.mxu0 0
    %3201 = vmatpush1.bf16.msra.mxu0 0
    %3202 = vmatprep.subr.bf16.mxu0 0
    %3203 = vmatpush1.bf16.msra.mxu0 0
    %3204 = vmatprep.subr.bf16.mxu0 0
    %3205 = vmatpush1.bf16.msra.mxu0 0
    %3206 = vmatprep.subr.bf16.mxu0 0
    %3207 = vmatpush1.bf16.msra.mxu0 0
    %3208 = vmatprep.subr.bf16.mxu0 0
    %3209 = vmatpush1.bf16.msra.mxu0 0
    %3210 = vmatprep.subr.bf16.mxu0 0
    %3211 = vmatpush1.bf16.msra.mxu0 0
    %3212 = vmatprep.subr.bf16.mxu0 0
    %3213 = vmatpush1.bf16.msra.mxu0 0
    %3214 = vmatprep.mubr.bf16.mxu0 0
    %3215 = vmatmul.mubr.bf16.gmra.mrb[0].mxu0 %v3180
    %v3216 = vpop.f32.mrb[0].mxu0
    %v3217 = vadd.f32 %v3069, %v3216
    %v3218 = vpop.f32.mrb[0].mxu0
    %v3219 = vadd.f32 %v3071, %v3218
    %v3220 = vpop.f32.mrb[0].mxu0
    %v3221 = vpop.f32.mrb[0].mxu0
    %3222 = vdwg.mxu0
    %3223 = vmatprep.subr.bf16.mxu0 0
    %3224 = vmatpush1.bf16.msra.mxu0 %v3157
    %3225 = vmatprep.subr.bf16.mxu0 0
    %3226 = vmatpush1.bf16.msra.mxu0 %v3160
    %3227 = vmatprep.subr.bf16.mxu0 0
    %3228 = vmatpush1.bf16.msra.mxu0 %v3163
    %3229 = vmatprep.subr.bf16.mxu0 0
    %3230 = vmatpush1.bf16.msra.mxu0 %v3166
    %3231 = vmatprep.subr.bf16.mxu0 0
    %3232 = vmatpush1.bf16.msra.mxu0 0
    %3233 = vmatprep.subr.bf16.mxu0 0
    %3234 = vmatpush1.bf16.msra.mxu0 0
    %3235 = vmatprep.subr.bf16.mxu0 0
    %3236 = vmatpush1.bf16.msra.mxu0 0
    %3237 = vmatprep.subr.bf16.mxu0 0
    %3238 = vmatpush1.bf16.msra.mxu0 0
    %3239 = vmatprep.subr.bf16.mxu0 0
    %3240 = vmatpush1.bf16.msra.mxu0 0
    %3241 = vmatprep.subr.bf16.mxu0 0
    %3242 = vmatpush1.bf16.msra.mxu0 0
    %3243 = vmatprep.subr.bf16.mxu0 0
    %3244 = vmatpush1.bf16.msra.mxu0 0
    %3245 = vmatprep.subr.bf16.mxu0 0
    %3246 = vmatpush1.bf16.msra.mxu0 0
    %3247 = vmatprep.subr.bf16.mxu0 0
    %3248 = vmatpush1.bf16.msra.mxu0 0
    %3249 = vmatprep.subr.bf16.mxu0 0
    %3250 = vmatpush1.bf16.msra.mxu0 0
    %3251 = vmatprep.subr.bf16.mxu0 0
    %3252 = vmatpush1.bf16.msra.mxu0 0
    %3253 = vmatprep.subr.bf16.mxu0 0
    %3254 = vmatpush1.bf16.msra.mxu0 0
    %3255 = vmatprep.mubr.bf16.mxu0 0
    %3256 = vmatmul.mubr.bf16.gmra.mrb[0].mxu0 %v3180
    %v3257 = vpop.f32.mrb[0].mxu0
    %v3258 = vadd.f32 %v3110, %v3257
    %v3259 = vpop.f32.mrb[0].mxu0
    %v3260 = vpop.f32.mrb[0].mxu0
    %v3261 = vpop.f32.mrb[0].mxu0
    %3262 = vdwg.mxu0
    %v3264 = vsel %vm2728, %v2862, 0
    %v3267 = vsel %vm2870, %v1954, 0
    %3269 = vmatprep.subr.bf16.mxu0 0
    %3270 = vmatpush1.bf16.msra.mxu0 %v3267
    %3271 = vmatprep.subr.bf16.mxu0 0
    %3272 = vmatpush1.bf16.msra.mxu0 0
    %3273 = vmatprep.subr.bf16.mxu0 0
    %3274 = vmatpush1.bf16.msra.mxu0 0
    %3275 = vmatprep.subr.bf16.mxu0 0
    %3276 = vmatpush1.bf16.msra.mxu0 0
    %3277 = vmatprep.subr.bf16.mxu0 0
    %3278 = vmatpush1.bf16.msra.mxu0 0
    %3279 = vmatprep.subr.bf16.mxu0 0
    %3280 = vmatpush1.bf16.msra.mxu0 0
    %3281 = vmatprep.subr.bf16.mxu0 0
    %3282 = vmatpush1.bf16.msra.mxu0 0
    %3283 = vmatprep.subr.bf16.mxu0 0
    %3284 = vmatpush1.bf16.msra.mxu0 0
    %3285 = vmatprep.subr.bf16.mxu0 0
    %3286 = vmatpush1.bf16.msra.mxu0 0
    %3287 = vmatprep.subr.bf16.mxu0 0
    %3288 = vmatpush1.bf16.msra.mxu0 0
    %3289 = vmatprep.subr.bf16.mxu0 0
    %3290 = vmatpush1.bf16.msra.mxu0 0
    %3291 = vmatprep.subr.bf16.mxu0 0
    %3292 = vmatpush1.bf16.msra.mxu0 0
    %3293 = vmatprep.subr.bf16.mxu0 0
    %3294 = vmatpush1.bf16.msra.mxu0 0
    %3295 = vmatprep.subr.bf16.mxu0 0
    %3296 = vmatpush1.bf16.msra.mxu0 0
    %3297 = vmatprep.subr.bf16.mxu0 0
    %3298 = vmatpush1.bf16.msra.mxu0 0
    %3299 = vmatprep.subr.bf16.mxu0 0
    %3300 = vmatpush1.bf16.msra.mxu0 0
    %3301 = vmatprep.mubr.bf16.mxu0 0
    %3302 = vmatmul.mubr.bf16.gmra.mrb[0].mxu0 %v3264
    %v3303 = vpop.f32.mrb[0].mxu0
    %v3304 = vadd.f32 0.0, %v3303
    %v3305 = vpop.f32.mrb[0].mxu0
    %v3306 = vpop.f32.mrb[0].mxu0
    %v3307 = vpop.f32.mrb[0].mxu0
    %3308 = vdwg.mxu0
    %v3309 = vpack.c.bf16 %v3304, %v3304
    %v3326 = vunpack.c.l.b16 %v336
    %v3327 = vunpack.c.h.b16 %v336
    %v3328 = vunpack.c.l.b16 %v337
    %v3329 = vunpack.c.l.b16 %v338
    %v3330 = vunpack.c.h.b16 %v338
    %v3331 = vunpack.c.l.b16 %v339
    %v3332 = vunpack.c.l.b16 %v340
    %v3333 = vunpack.c.h.b16 %v340
    %v3334 = vunpack.c.l.b16 %v341
    %v3335 = vunpack.c.l.b16 %v342
    %v3336 = vunpack.c.h.b16 %v342
    %v3337 = vunpack.c.l.b16 %v343
    %v3338 = vunpack.c.l.b16 %v344
    %v3339 = vunpack.c.h.b16 %v344
    %v3340 = vunpack.c.l.b16 %v345
    %v3341 = vunpack.c.l.b16 %v346
    %v3342 = vunpack.c.h.b16 %v346
    %v3343 = vunpack.c.l.b16 %v347
    %v3344 = vunpack.c.l.b16 %v348
    %v3345 = vunpack.c.h.b16 %v348
    %v3346 = vunpack.c.l.b16 %v349
    %v3347 = vunpack.c.l.b16 %v350
    %v3348 = vunpack.c.h.b16 %v350
    %v3349 = vunpack.c.l.b16 %v351
    %v3350 = vpack.c.b16 %v3329, %v3326
    %v3351 = vpack.c.b16 %v3330, %v3327
    %v3352 = vpack.c.b16 %v3331, %v3328
    %v3353 = vpack.c.b16 %v3335, %v3332
    %v3354 = vpack.c.b16 %v3336, %v3333
    %v3355 = vpack.c.b16 %v3337, %v3334
    %v3356 = vpack.c.b16 %v3341, %v3338
    %v3357 = vpack.c.b16 %v3342, %v3339
    %v3358 = vpack.c.b16 %v3343, %v3340
    %v3359 = vpack.c.b16 %v3347, %v3344
    %v3360 = vpack.c.b16 %v3348, %v3345
    %v3361 = vpack.c.b16 %v3349, %v3346
    %v3375 = vsel %vm1956, %v3309, 0
    %3377 = vmatprep.subr.bf16.mxu0 %v3351
    %3378 = vmatpush1.bf16.msra.mxu0 %v3350
    %3379 = vmatprep.subr.bf16.mxu0 %v3354
    %3380 = vmatpush1.bf16.msra.mxu0 %v3353
    %3381 = vmatprep.subr.bf16.mxu0 %v3357
    %3382 = vmatpush1.bf16.msra.mxu0 %v3356
    %3383 = vmatprep.subr.bf16.mxu0 %v3360
    %3384 = vmatpush1.bf16.msra.mxu0 %v3359
    %3385 = vmatprep.subr.bf16.mxu0 0
    %3386 = vmatpush1.bf16.msra.mxu0 0
    %3387 = vmatprep.subr.bf16.mxu0 0
    %3388 = vmatpush1.bf16.msra.mxu0 0
    %3389 = vmatprep.subr.bf16.mxu0 0
    %3390 = vmatpush1.bf16.msra.mxu0 0
    %3391 = vmatprep.subr.bf16.mxu0 0
    %3392 = vmatpush1.bf16.msra.mxu0 0
    %3393 = vmatprep.subr.bf16.mxu0 0
    %3394 = vmatpush1.bf16.msra.mxu0 0
    %3395 = vmatprep.subr.bf16.mxu0 0
    %3396 = vmatpush1.bf16.msra.mxu0 0
    %3397 = vmatprep.subr.bf16.mxu0 0
    %3398 = vmatpush1.bf16.msra.mxu0 0
    %3399 = vmatprep.subr.bf16.mxu0 0
    %3400 = vmatpush1.bf16.msra.mxu0 0
    %3401 = vmatprep.subr.bf16.mxu0 0
    %3402 = vmatpush1.bf16.msra.mxu0 0
    %3403 = vmatprep.subr.bf16.mxu0 0
    %3404 = vmatpush1.bf16.msra.mxu0 0
    %3405 = vmatprep.subr.bf16.mxu0 0
    %3406 = vmatpush1.bf16.msra.mxu0 0
    %3407 = vmatprep.subr.bf16.mxu0 0
    %3408 = vmatpush1.bf16.msra.mxu0 0
    %3409 = vmatprep.mubr.bf16.mxu0 0
    %3410 = vmatmul.mubr.bf16.gmra.mrb[0].mxu0 %v3375
    %v3411 = vpop.f32.mrb[0].mxu0
    %v3412 = vadd.f32 0.0, %v3411
    %v3413 = vpop.f32.mrb[0].mxu0
    %v3414 = vadd.f32 0.0, %v3413
    %v3415 = vpop.f32.mrb[0].mxu0
    %v3416 = vpop.f32.mrb[0].mxu0
    %3417 = vdwg.mxu0
    %3418 = vmatprep.subr.bf16.mxu0 0
    %3419 = vmatpush1.bf16.msra.mxu0 %v3352
    %3420 = vmatprep.subr.bf16.mxu0 0
    %3421 = vmatpush1.bf16.msra.mxu0 %v3355
    %3422 = vmatprep.subr.bf16.mxu0 0
    %3423 = vmatpush1.bf16.msra.mxu0 %v3358
    %3424 = vmatprep.subr.bf16.mxu0 0
    %3425 = vmatpush1.bf16.msra.mxu0 %v3361
    %3426 = vmatprep.subr.bf16.mxu0 0
    %3427 = vmatpush1.bf16.msra.mxu0 0
    %3428 = vmatprep.subr.bf16.mxu0 0
    %3429 = vmatpush1.bf16.msra.mxu0 0
    %3430 = vmatprep.subr.bf16.mxu0 0
    %3431 = vmatpush1.bf16.msra.mxu0 0
    %3432 = vmatprep.subr.bf16.mxu0 0
    %3433 = vmatpush1.bf16.msra.mxu0 0
    %3434 = vmatprep.subr.bf16.mxu0 0
    %3435 = vmatpush1.bf16.msra.mxu0 0
    %3436 = vmatprep.subr.bf16.mxu0 0
    %3437 = vmatpush1.bf16.msra.mxu0 0
    %3438 = vmatprep.subr.bf16.mxu0 0
    %3439 = vmatpush1.bf16.msra.mxu0 0
    %3440 = vmatprep.subr.bf16.mxu0 0
    %3441 = vmatpush1.bf16.msra.mxu0 0
    %3442 = vmatprep.subr.bf16.mxu0 0
    %3443 = vmatpush1.bf16.msra.mxu0 0
    %3444 = vmatprep.subr.bf16.mxu0 0
    %3445 = vmatpush1.bf16.msra.mxu0 0
    %3446 = vmatprep.subr.bf16.mxu0 0
    %3447 = vmatpush1.bf16.msra.mxu0 0
    %3448 = vmatprep.subr.bf16.mxu0 0
    %3449 = vmatpush1.bf16.msra.mxu0 0
    %3450 = vmatprep.mubr.bf16.mxu0 0
    %3451 = vmatmul.mubr.bf16.gmra.mrb[0].mxu0 %v3375
    %v3452 = vpop.f32.mrb[0].mxu0
    %v3453 = vadd.f32 0.0, %v3452
    %v3454 = vpop.f32.mrb[0].mxu0
    %v3455 = vpop.f32.mrb[0].mxu0
    %v3456 = vpop.f32.mrb[0].mxu0
    %3457 = vdwg.mxu0
    %v3458 = vadd.f32 %v3217, %v3412
    %v3459 = vadd.f32 %v3219, %v3414
    %v3460 = vadd.f32 %v3258, %v3453
    %v3462 = vrot.slane %v2862, 4
    %3464 = vrot.lane.b32.xlu0 %v1954, 64
    %v3465 = vpop.permute.xlu0 %3464
    %v3467 = vsel %vm2728, %v3462, 0
    %v3470 = vsel %vm2870, %v3465, 0
    %3472 = vmatprep.subr.bf16.mxu0 0
    %3473 = vmatpush1.bf16.msra.mxu0 %v3470
    %3474 = vmatprep.subr.bf16.mxu0 0
    %3475 = vmatpush1.bf16.msra.mxu0 0
    %3476 = vmatprep.subr.bf16.mxu0 0
    %3477 = vmatpush1.bf16.msra.mxu0 0
    %3478 = vmatprep.subr.bf16.mxu0 0
    %3479 = vmatpush1.bf16.msra.mxu0 0
    %3480 = vmatprep.subr.bf16.mxu0 0
    %3481 = vmatpush1.bf16.msra.mxu0 0
    %3482 = vmatprep.subr.bf16.mxu0 0
    %3483 = vmatpush1.bf16.msra.mxu0 0
    %3484 = vmatprep.subr.bf16.mxu0 0
    %3485 = vmatpush1.bf16.msra.mxu0 0
    %3486 = vmatprep.subr.bf16.mxu0 0
    %3487 = vmatpush1.bf16.msra.mxu0 0
    %3488 = vmatprep.subr.bf16.mxu0 0
    %3489 = vmatpush1.bf16.msra.mxu0 0
    %3490 = vmatprep.subr.bf16.mxu0 0
    %3491 = vmatpush1.bf16.msra.mxu0 0
    %3492 = vmatprep.subr.bf16.mxu0 0
    %3493 = vmatpush1.bf16.msra.mxu0 0
    %3494 = vmatprep.subr.bf16.mxu0 0
    %3495 = vmatpush1.bf16.msra.mxu0 0
    %3496 = vmatprep.subr.bf16.mxu0 0
    %3497 = vmatpush1.bf16.msra.mxu0 0
    %3498 = vmatprep.subr.bf16.mxu0 0
    %3499 = vmatpush1.bf16.msra.mxu0 0
    %3500 = vmatprep.subr.bf16.mxu0 0
    %3501 = vmatpush1.bf16.msra.mxu0 0
    %3502 = vmatprep.subr.bf16.mxu0 0
    %3503 = vmatpush1.bf16.msra.mxu0 0
    %3504 = vmatprep.mubr.bf16.mxu0 0
    %3505 = vmatmul.mubr.bf16.gmra.mrb[0].mxu0 %v3467
    %v3506 = vpop.f32.mrb[0].mxu0
    %v3507 = vadd.f32 0.0, %v3506
    %v3508 = vpop.f32.mrb[0].mxu0
    %v3509 = vpop.f32.mrb[0].mxu0
    %v3510 = vpop.f32.mrb[0].mxu0
    %3511 = vdwg.mxu0
    %v3512 = vpack.c.bf16 %v3507, %v3507
    %v3529 = vunpack.c.l.b16 %v352
    %v3530 = vunpack.c.h.b16 %v352
    %v3531 = vunpack.c.l.b16 %v353
    %v3532 = vunpack.c.l.b16 %v354
    %v3533 = vunpack.c.h.b16 %v354
    %v3534 = vunpack.c.l.b16 %v355
    %v3535 = vunpack.c.l.b16 %v356
    %v3536 = vunpack.c.h.b16 %v356
    %v3537 = vunpack.c.l.b16 %v357
    %v3538 = vunpack.c.l.b16 %v358
    %v3539 = vunpack.c.h.b16 %v358
    %v3540 = vunpack.c.l.b16 %v359
    %v3541 = vunpack.c.l.b16 %v360
    %v3542 = vunpack.c.h.b16 %v360
    %v3543 = vunpack.c.l.b16 %v361
    %v3544 = vunpack.c.l.b16 %v362
    %v3545 = vunpack.c.h.b16 %v362
    %v3546 = vunpack.c.l.b16 %v363
    %v3547 = vunpack.c.l.b16 %v364
    %v3548 = vunpack.c.h.b16 %v364
    %v3549 = vunpack.c.l.b16 %v365
    %v3550 = vunpack.c.l.b16 %v366
    %v3551 = vunpack.c.h.b16 %v366
    %v3552 = vunpack.c.l.b16 %v367
    %v3553 = vpack.c.b16 %v3532, %v3529
    %v3554 = vpack.c.b16 %v3533, %v3530
    %v3555 = vpack.c.b16 %v3534, %v3531
    %v3556 = vpack.c.b16 %v3538, %v3535
    %v3557 = vpack.c.b16 %v3539, %v3536
    %v3558 = vpack.c.b16 %v3540, %v3537
    %v3559 = vpack.c.b16 %v3544, %v3541
    %v3560 = vpack.c.b16 %v3545, %v3542
    %v3561 = vpack.c.b16 %v3546, %v3543
    %v3562 = vpack.c.b16 %v3550, %v3547
    %v3563 = vpack.c.b16 %v3551, %v3548
    %v3564 = vpack.c.b16 %v3552, %v3549
    %v3578 = vsel %vm1956, %v3512, 0
    %3580 = vmatprep.subr.bf16.mxu0 %v3554
    %3581 = vmatpush1.bf16.msra.mxu0 %v3553
    %3582 = vmatprep.subr.bf16.mxu0 %v3557
    %3583 = vmatpush1.bf16.msra.mxu0 %v3556
    %3584 = vmatprep.subr.bf16.mxu0 %v3560
    %3585 = vmatpush1.bf16.msra.mxu0 %v3559
    %3586 = vmatprep.subr.bf16.mxu0 %v3563
    %3587 = vmatpush1.bf16.msra.mxu0 %v3562
    %3588 = vmatprep.subr.bf16.mxu0 0
    %3589 = vmatpush1.bf16.msra.mxu0 0
    %3590 = vmatprep.subr.bf16.mxu0 0
    %3591 = vmatpush1.bf16.msra.mxu0 0
    %3592 = vmatprep.subr.bf16.mxu0 0
    %3593 = vmatpush1.bf16.msra.mxu0 0
    %3594 = vmatprep.subr.bf16.mxu0 0
    %3595 = vmatpush1.bf16.msra.mxu0 0
    %3596 = vmatprep.subr.bf16.mxu0 0
    %3597 = vmatpush1.bf16.msra.mxu0 0
    %3598 = vmatprep.subr.bf16.mxu0 0
    %3599 = vmatpush1.bf16.msra.mxu0 0
    %3600 = vmatprep.subr.bf16.mxu0 0
    %3601 = vmatpush1.bf16.msra.mxu0 0
    %3602 = vmatprep.subr.bf16.mxu0 0
    %3603 = vmatpush1.bf16.msra.mxu0 0
    %3604 = vmatprep.subr.bf16.mxu0 0
    %3605 = vmatpush1.bf16.msra.mxu0 0
    %3606 = vmatprep.subr.bf16.mxu0 0
    %3607 = vmatpush1.bf16.msra.mxu0 0
    %3608 = vmatprep.subr.bf16.mxu0 0
    %3609 = vmatpush1.bf16.msra.mxu0 0
    %3610 = vmatprep.subr.bf16.mxu0 0
    %3611 = vmatpush1.bf16.msra.mxu0 0
    %3612 = vmatprep.mubr.bf16.mxu0 0
    %3613 = vmatmul.mubr.bf16.gmra.mrb[0].mxu0 %v3578
    %v3614 = vpop.f32.mrb[0].mxu0
    %v3615 = vadd.f32 0.0, %v3614
    %v3616 = vpop.f32.mrb[0].mxu0
    %v3617 = vadd.f32 0.0, %v3616
    %v3618 = vpop.f32.mrb[0].mxu0
    %v3619 = vpop.f32.mrb[0].mxu0
    %3620 = vdwg.mxu0
    %3621 = vmatprep.subr.bf16.mxu0 0
    %3622 = vmatpush1.bf16.msra.mxu0 %v3555
    %3623 = vmatprep.subr.bf16.mxu0 0
    %3624 = vmatpush1.bf16.msra.mxu0 %v3558
    %3625 = vmatprep.subr.bf16.mxu0 0
    %3626 = vmatpush1.bf16.msra.mxu0 %v3561
    %3627 = vmatprep.subr.bf16.mxu0 0
    %3628 = vmatpush1.bf16.msra.mxu0 %v3564
    %3629 = vmatprep.subr.bf16.mxu0 0
    %3630 = vmatpush1.bf16.msra.mxu0 0
    %3631 = vmatprep.subr.bf16.mxu0 0
    %3632 = vmatpush1.bf16.msra.mxu0 0
    %3633 = vmatprep.subr.bf16.mxu0 0
    %3634 = vmatpush1.bf16.msra.mxu0 0
    %3635 = vmatprep.subr.bf16.mxu0 0
    %3636 = vmatpush1.bf16.msra.mxu0 0
    %3637 = vmatprep.subr.bf16.mxu0 0
    %3638 = vmatpush1.bf16.msra.mxu0 0
    %3639 = vmatprep.subr.bf16.mxu0 0
    %3640 = vmatpush1.bf16.msra.mxu0 0
    %3641 = vmatprep.subr.bf16.mxu0 0
    %3642 = vmatpush1.bf16.msra.mxu0 0
    %3643 = vmatprep.subr.bf16.mxu0 0
    %3644 = vmatpush1.bf16.msra.mxu0 0
    %3645 = vmatprep.subr.bf16.mxu0 0
    %3646 = vmatpush1.bf16.msra.mxu0 0
    %3647 = vmatprep.subr.bf16.mxu0 0
    %3648 = vmatpush1.bf16.msra.mxu0 0
    %3649 = vmatprep.subr.bf16.mxu0 0
    %3650 = vmatpush1.bf16.msra.mxu0 0
    %3651 = vmatprep.subr.bf16.mxu0 0
    %3652 = vmatpush1.bf16.msra.mxu0 0
    %3653 = vmatprep.mubr.bf16.mxu0 0
    %3654 = vmatmul.mubr.bf16.gmra.mrb[0].mxu0 %v3578
    %v3655 = vpop.f32.mrb[0].mxu0
    %v3656 = vadd.f32 0.0, %v3655
    %v3657 = vpop.f32.mrb[0].mxu0
    %v3658 = vpop.f32.mrb[0].mxu0
    %v3659 = vpop.f32.mrb[0].mxu0
    %3660 = vdwg.mxu0
    %v3661 = vadd.f32 %v3458, %v3615
    %v3662 = vadd.f32 %v3459, %v3617
    %v3663 = vadd.f32 %v3460, %v3656
    %v3665 = vsel %vm2728, %v2863, 0
    %v3668 = vsel %vm2870, %v1955, 0
    %3670 = vmatprep.subr.bf16.mxu0 0
    %3671 = vmatpush1.bf16.msra.mxu0 %v3668
    %3672 = vmatprep.subr.bf16.mxu0 0
    %3673 = vmatpush1.bf16.msra.mxu0 0
    %3674 = vmatprep.subr.bf16.mxu0 0
    %3675 = vmatpush1.bf16.msra.mxu0 0
    %3676 = vmatprep.subr.bf16.mxu0 0
    %3677 = vmatpush1.bf16.msra.mxu0 0
    %3678 = vmatprep.subr.bf16.mxu0 0
    %3679 = vmatpush1.bf16.msra.mxu0 0
    %3680 = vmatprep.subr.bf16.mxu0 0
    %3681 = vmatpush1.bf16.msra.mxu0 0
    %3682 = vmatprep.subr.bf16.mxu0 0
    %3683 = vmatpush1.bf16.msra.mxu0 0
    %3684 = vmatprep.subr.bf16.mxu0 0
    %3685 = vmatpush1.bf16.msra.mxu0 0
    %3686 = vmatprep.subr.bf16.mxu0 0
    %3687 = vmatpush1.bf16.msra.mxu0 0
    %3688 = vmatprep.subr.bf16.mxu0 0
    %3689 = vmatpush1.bf16.msra.mxu0 0
    %3690 = vmatprep.subr.bf16.mxu0 0
    %3691 = vmatpush1.bf16.msra.mxu0 0
    %3692 = vmatprep.subr.bf16.mxu0 0
    %3693 = vmatpush1.bf16.msra.mxu0 0
    %3694 = vmatprep.subr.bf16.mxu0 0
    %3695 = vmatpush1.bf16.msra.mxu0 0
    %3696 = vmatprep.subr.bf16.mxu0 0
    %3697 = vmatpush1.bf16.msra.mxu0 0
    %3698 = vmatprep.subr.bf16.mxu0 0
    %3699 = vmatpush1.bf16.msra.mxu0 0
    %3700 = vmatprep.subr.bf16.mxu0 0
    %3701 = vmatpush1.bf16.msra.mxu0 0
    %3702 = vmatprep.mubr.bf16.mxu0 0
    %3703 = vmatmul.mubr.bf16.gmra.mrb[0].mxu0 %v3665
    %v3704 = vpop.f32.mrb[0].mxu0
    %v3705 = vadd.f32 0.0, %v3704
    %v3706 = vpop.f32.mrb[0].mxu0
    %v3707 = vpop.f32.mrb[0].mxu0
    %v3708 = vpop.f32.mrb[0].mxu0
    %3709 = vdwg.mxu0
    %v3710 = vpack.c.bf16 %v3705, %v3705
    %v3727 = vunpack.c.l.b16 %v368
    %v3728 = vunpack.c.h.b16 %v368
    %v3729 = vunpack.c.l.b16 %v369
    %v3730 = vunpack.c.l.b16 %v370
    %v3731 = vunpack.c.h.b16 %v370
    %v3732 = vunpack.c.l.b16 %v371
    %v3733 = vunpack.c.l.b16 %v372
    %v3734 = vunpack.c.h.b16 %v372
    %v3735 = vunpack.c.l.b16 %v373
    %v3736 = vunpack.c.l.b16 %v374
    %v3737 = vunpack.c.h.b16 %v374
    %v3738 = vunpack.c.l.b16 %v375
    %v3739 = vunpack.c.l.b16 %v376
    %v3740 = vunpack.c.h.b16 %v376
    %v3741 = vunpack.c.l.b16 %v377
    %v3742 = vunpack.c.l.b16 %v378
    %v3743 = vunpack.c.h.b16 %v378
    %v3744 = vunpack.c.l.b16 %v379
    %v3745 = vunpack.c.l.b16 %v380
    %v3746 = vunpack.c.h.b16 %v380
    %v3747 = vunpack.c.l.b16 %v381
    %v3748 = vunpack.c.l.b16 %v382
    %v3749 = vunpack.c.h.b16 %v382
    %v3750 = vunpack.c.l.b16 %v383
    %v3751 = vpack.c.b16 %v3730, %v3727
    %v3752 = vpack.c.b16 %v3731, %v3728
    %v3753 = vpack.c.b16 %v3732, %v3729
    %v3754 = vpack.c.b16 %v3736, %v3733
    %v3755 = vpack.c.b16 %v3737, %v3734
    %v3756 = vpack.c.b16 %v3738, %v3735
    %v3757 = vpack.c.b16 %v3742, %v3739
    %v3758 = vpack.c.b16 %v3743, %v3740
    %v3759 = vpack.c.b16 %v3744, %v3741
    %v3760 = vpack.c.b16 %v3748, %v3745
    %v3761 = vpack.c.b16 %v3749, %v3746
    %v3762 = vpack.c.b16 %v3750, %v3747
    %v3776 = vsel %vm1956, %v3710, 0
    %3778 = vmatprep.subr.bf16.mxu0 %v3752
    %3779 = vmatpush1.bf16.msra.mxu0 %v3751
    %3780 = vmatprep.subr.bf16.mxu0 %v3755
    %3781 = vmatpush1.bf16.msra.mxu0 %v3754
    %3782 = vmatprep.subr.bf16.mxu0 %v3758
    %3783 = vmatpush1.bf16.msra.mxu0 %v3757
    %3784 = vmatprep.subr.bf16.mxu0 %v3761
    %3785 = vmatpush1.bf16.msra.mxu0 %v3760
    %3786 = vmatprep.subr.bf16.mxu0 0
    %3787 = vmatpush1.bf16.msra.mxu0 0
    %3788 = vmatprep.subr.bf16.mxu0 0
    %3789 = vmatpush1.bf16.msra.mxu0 0
    %3790 = vmatprep.subr.bf16.mxu0 0
    %3791 = vmatpush1.bf16.msra.mxu0 0
    %3792 = vmatprep.subr.bf16.mxu0 0
    %3793 = vmatpush1.bf16.msra.mxu0 0
    %3794 = vmatprep.subr.bf16.mxu0 0
    %3795 = vmatpush1.bf16.msra.mxu0 0
    %3796 = vmatprep.subr.bf16.mxu0 0
    %3797 = vmatpush1.bf16.msra.mxu0 0
    %3798 = vmatprep.subr.bf16.mxu0 0
    %3799 = vmatpush1.bf16.msra.mxu0 0
    %3800 = vmatprep.subr.bf16.mxu0 0
    %3801 = vmatpush1.bf16.msra.mxu0 0
    %3802 = vmatprep.subr.bf16.mxu0 0
    %3803 = vmatpush1.bf16.msra.mxu0 0
    %3804 = vmatprep.subr.bf16.mxu0 0
    %3805 = vmatpush1.bf16.msra.mxu0 0
    %3806 = vmatprep.subr.bf16.mxu0 0
    %3807 = vmatpush1.bf16.msra.mxu0 0
    %3808 = vmatprep.subr.bf16.mxu0 0
    %3809 = vmatpush1.bf16.msra.mxu0 0
    %3810 = vmatprep.mubr.bf16.mxu0 0
    %3811 = vmatmul.mubr.bf16.gmra.mrb[0].mxu0 %v3776
    %v3812 = vpop.f32.mrb[0].mxu0
    %v3813 = vadd.f32 0.0, %v3812
    %v3814 = vpop.f32.mrb[0].mxu0
    %v3815 = vadd.f32 0.0, %v3814
    %v3816 = vpop.f32.mrb[0].mxu0
    %v3817 = vpop.f32.mrb[0].mxu0
    %3818 = vdwg.mxu0
    %3819 = vmatprep.subr.bf16.mxu0 0
    %3820 = vmatpush1.bf16.msra.mxu0 %v3753
    %3821 = vmatprep.subr.bf16.mxu0 0
    %3822 = vmatpush1.bf16.msra.mxu0 %v3756
    %3823 = vmatprep.subr.bf16.mxu0 0
    %3824 = vmatpush1.bf16.msra.mxu0 %v3759
    %3825 = vmatprep.subr.bf16.mxu0 0
    %3826 = vmatpush1.bf16.msra.mxu0 %v3762
    %3827 = vmatprep.subr.bf16.mxu0 0
    %3828 = vmatpush1.bf16.msra.mxu0 0
    %3829 = vmatprep.subr.bf16.mxu0 0
    %3830 = vmatpush1.bf16.msra.mxu0 0
    %3831 = vmatprep.subr.bf16.mxu0 0
    %3832 = vmatpush1.bf16.msra.mxu0 0
    %3833 = vmatprep.subr.bf16.mxu0 0
    %3834 = vmatpush1.bf16.msra.mxu0 0
    %3835 = vmatprep.subr.bf16.mxu0 0
    %3836 = vmatpush1.bf16.msra.mxu0 0
    %3837 = vmatprep.subr.bf16.mxu0 0
    %3838 = vmatpush1.bf16.msra.mxu0 0
    %3839 = vmatprep.subr.bf16.mxu0 0
    %3840 = vmatpush1.bf16.msra.mxu0 0
    %3841 = vmatprep.subr.bf16.mxu0 0
    %3842 = vmatpush1.bf16.msra.mxu0 0
    %3843 = vmatprep.subr.bf16.mxu0 0
    %3844 = vmatpush1.bf16.msra.mxu0 0
    %3845 = vmatprep.subr.bf16.mxu0 0
    %3846 = vmatpush1.bf16.msra.mxu0 0
    %3847 = vmatprep.subr.bf16.mxu0 0
    %3848 = vmatpush1.bf16.msra.mxu0 0
    %3849 = vmatprep.subr.bf16.mxu0 0
    %3850 = vmatpush1.bf16.msra.mxu0 0
    %3851 = vmatprep.mubr.bf16.mxu0 0
    %3852 = vmatmul.mubr.bf16.gmra.mrb[0].mxu0 %v3776
    %v3853 = vpop.f32.mrb[0].mxu0
    %v3854 = vadd.f32 0.0, %v3853
    %v3855 = vpop.f32.mrb[0].mxu0
    %v3856 = vpop.f32.mrb[0].mxu0
    %v3857 = vpop.f32.mrb[0].mxu0
    %3858 = vdwg.mxu0
    %v3859 = vadd.f32 %v3661, %v3813
    %v3860 = vadd.f32 %v3662, %v3815
    %v3861 = vadd.f32 %v3663, %v3854
    %v3863 = vrot.slane %v2863, 4
    %3865 = vrot.lane.b32.xlu0 %v1955, 64
    %v3866 = vpop.permute.xlu0 %3865
    %v3868 = vsel %vm2728, %v3863, 0
    %v3871 = vsel %vm2870, %v3866, 0
    %3873 = vmatprep.subr.bf16.mxu0 0
    %3874 = vmatpush1.bf16.msra.mxu0 %v3871
    %3875 = vmatprep.subr.bf16.mxu0 0
    %3876 = vmatpush1.bf16.msra.mxu0 0
    %3877 = vmatprep.subr.bf16.mxu0 0
    %3878 = vmatpush1.bf16.msra.mxu0 0
    %3879 = vmatprep.subr.bf16.mxu0 0
    %3880 = vmatpush1.bf16.msra.mxu0 0
    %3881 = vmatprep.subr.bf16.mxu0 0
    %3882 = vmatpush1.bf16.msra.mxu0 0
    %3883 = vmatprep.subr.bf16.mxu0 0
    %3884 = vmatpush1.bf16.msra.mxu0 0
    %3885 = vmatprep.subr.bf16.mxu0 0
    %3886 = vmatpush1.bf16.msra.mxu0 0
    %3887 = vmatprep.subr.bf16.mxu0 0
    %3888 = vmatpush1.bf16.msra.mxu0 0
    %3889 = vmatprep.subr.bf16.mxu0 0
    %3890 = vmatpush1.bf16.msra.mxu0 0
    %3891 = vmatprep.subr.bf16.mxu0 0
    %3892 = vmatpush1.bf16.msra.mxu0 0
    %3893 = vmatprep.subr.bf16.mxu0 0
    %3894 = vmatpush1.bf16.msra.mxu0 0
    %3895 = vmatprep.subr.bf16.mxu0 0
    %3896 = vmatpush1.bf16.msra.mxu0 0
    %3897 = vmatprep.subr.bf16.mxu0 0
    %3898 = vmatpush1.bf16.msra.mxu0 0
    %3899 = vmatprep.subr.bf16.mxu0 0
    %3900 = vmatpush1.bf16.msra.mxu0 0
    %3901 = vmatprep.subr.bf16.mxu0 0
    %3902 = vmatpush1.bf16.msra.mxu0 0
    %3903 = vmatprep.subr.bf16.mxu0 0
    %3904 = vmatpush1.bf16.msra.mxu0 0
    %3905 = vmatprep.mubr.bf16.mxu0 0
    %3906 = vmatmul.mubr.bf16.gmra.mrb[0].mxu0 %v3868
    %v3907 = vpop.f32.mrb[0].mxu0
    %v3908 = vadd.f32 0.0, %v3907
    %v3909 = vpop.f32.mrb[0].mxu0
    %v3910 = vpop.f32.mrb[0].mxu0
    %v3911 = vpop.f32.mrb[0].mxu0
    %3912 = vdwg.mxu0
    %v3913 = vpack.c.bf16 %v3908, %v3908
    %v3930 = vunpack.c.l.b16 %v384
    %v3931 = vunpack.c.h.b16 %v384
    %v3932 = vunpack.c.l.b16 %v385
    %v3933 = vunpack.c.l.b16 %v386
    %v3934 = vunpack.c.h.b16 %v386
    %v3935 = vunpack.c.l.b16 %v387
    %v3936 = vunpack.c.l.b16 %v388
    %v3937 = vunpack.c.h.b16 %v388
    %v3938 = vunpack.c.l.b16 %v389
    %v3939 = vunpack.c.l.b16 %v390
    %v3940 = vunpack.c.h.b16 %v390
    %v3941 = vunpack.c.l.b16 %v391
    %v3942 = vunpack.c.l.b16 %v392
    %v3943 = vunpack.c.h.b16 %v392
    %v3944 = vunpack.c.l.b16 %v393
    %v3945 = vunpack.c.l.b16 %v394
    %v3946 = vunpack.c.h.b16 %v394
    %v3947 = vunpack.c.l.b16 %v395
    %v3948 = vunpack.c.l.b16 %v396
    %v3949 = vunpack.c.h.b16 %v396
    %v3950 = vunpack.c.l.b16 %v397
    %v3951 = vunpack.c.l.b16 %v398
    %v3952 = vunpack.c.h.b16 %v398
    %v3953 = vunpack.c.l.b16 %v399
    %v3954 = vpack.c.b16 %v3933, %v3930
    %v3955 = vpack.c.b16 %v3934, %v3931
    %v3956 = vpack.c.b16 %v3935, %v3932
    %v3957 = vpack.c.b16 %v3939, %v3936
    %v3958 = vpack.c.b16 %v3940, %v3937
    %v3959 = vpack.c.b16 %v3941, %v3938
    %v3960 = vpack.c.b16 %v3945, %v3942
    %v3961 = vpack.c.b16 %v3946, %v3943
    %v3962 = vpack.c.b16 %v3947, %v3944
    %v3963 = vpack.c.b16 %v3951, %v3948
    %v3964 = vpack.c.b16 %v3952, %v3949
    %v3965 = vpack.c.b16 %v3953, %v3950
    %v3979 = vsel %vm1956, %v3913, 0
    %3981 = vmatprep.subr.bf16.mxu0 %v3955
    %3982 = vmatpush1.bf16.msra.mxu0 %v3954
    %3983 = vmatprep.subr.bf16.mxu0 %v3958
    %3984 = vmatpush1.bf16.msra.mxu0 %v3957
    %3985 = vmatprep.subr.bf16.mxu0 %v3961
    %3986 = vmatpush1.bf16.msra.mxu0 %v3960
    %3987 = vmatprep.subr.bf16.mxu0 %v3964
    %3988 = vmatpush1.bf16.msra.mxu0 %v3963
    %3989 = vmatprep.subr.bf16.mxu0 0
    %3990 = vmatpush1.bf16.msra.mxu0 0
    %3991 = vmatprep.subr.bf16.mxu0 0
    %3992 = vmatpush1.bf16.msra.mxu0 0
    %3993 = vmatprep.subr.bf16.mxu0 0
    %3994 = vmatpush1.bf16.msra.mxu0 0
    %3995 = vmatprep.subr.bf16.mxu0 0
    %3996 = vmatpush1.bf16.msra.mxu0 0
    %3997 = vmatprep.subr.bf16.mxu0 0
    %3998 = vmatpush1.bf16.msra.mxu0 0
    %3999 = vmatprep.subr.bf16.mxu0 0
    %4000 = vmatpush1.bf16.msra.mxu0 0
    %4001 = vmatprep.subr.bf16.mxu0 0
    %4002 = vmatpush1.bf16.msra.mxu0 0
    %4003 = vmatprep.subr.bf16.mxu0 0
    %4004 = vmatpush1.bf16.msra.mxu0 0
    %4005 = vmatprep.subr.bf16.mxu0 0
    %4006 = vmatpush1.bf16.msra.mxu0 0
    %4007 = vmatprep.subr.bf16.mxu0 0
    %4008 = vmatpush1.bf16.msra.mxu0 0
    %4009 = vmatprep.subr.bf16.mxu0 0
    %4010 = vmatpush1.bf16.msra.mxu0 0
    %4011 = vmatprep.subr.bf16.mxu0 0
    %4012 = vmatpush1.bf16.msra.mxu0 0
    %4013 = vmatprep.mubr.bf16.mxu0 0
    %4014 = vmatmul.mubr.bf16.gmra.mrb[0].mxu0 %v3979
    %v4015 = vpop.f32.mrb[0].mxu0
    %v4016 = vadd.f32 0.0, %v4015
    %v4017 = vpop.f32.mrb[0].mxu0
    %v4018 = vadd.f32 0.0, %v4017
    %v4019 = vpop.f32.mrb[0].mxu0
    %v4020 = vpop.f32.mrb[0].mxu0
    %4021 = vdwg.mxu0
    %4022 = vmatprep.subr.bf16.mxu0 0
    %4023 = vmatpush1.bf16.msra.mxu0 %v3956
    %4024 = vmatprep.subr.bf16.mxu0 0
    %4025 = vmatpush1.bf16.msra.mxu0 %v3959
    %4026 = vmatprep.subr.bf16.mxu0 0
    %4027 = vmatpush1.bf16.msra.mxu0 %v3962
    %4028 = vmatprep.subr.bf16.mxu0 0
    %4029 = vmatpush1.bf16.msra.mxu0 %v3965
    %4030 = vmatprep.subr.bf16.mxu0 0
    %4031 = vmatpush1.bf16.msra.mxu0 0
    %4032 = vmatprep.subr.bf16.mxu0 0
    %4033 = vmatpush1.bf16.msra.mxu0 0
    %4034 = vmatprep.subr.bf16.mxu0 0
    %4035 = vmatpush1.bf16.msra.mxu0 0
    %4036 = vmatprep.subr.bf16.mxu0 0
    %4037 = vmatpush1.bf16.msra.mxu0 0
    %4038 = vmatprep.subr.bf16.mxu0 0
    %4039 = vmatpush1.bf16.msra.mxu0 0
    %4040 = vmatprep.subr.bf16.mxu0 0
    %4041 = vmatpush1.bf16.msra.mxu0 0
    %4042 = vmatprep.subr.bf16.mxu0 0
    %4043 = vmatpush1.bf16.msra.mxu0 0
    %4044 = vmatprep.subr.bf16.mxu0 0
    %4045 = vmatpush1.bf16.msra.mxu0 0
    %4046 = vmatprep.subr.bf16.mxu0 0
    %4047 = vmatpush1.bf16.msra.mxu0 0
    %4048 = vmatprep.subr.bf16.mxu0 0
    %4049 = vmatpush1.bf16.msra.mxu0 0
    %4050 = vmatprep.subr.bf16.mxu0 0
    %4051 = vmatpush1.bf16.msra.mxu0 0
    %4052 = vmatprep.subr.bf16.mxu0 0
    %4053 = vmatpush1.bf16.msra.mxu0 0
    %4054 = vmatprep.mubr.bf16.mxu0 0
    %4055 = vmatmul.mubr.bf16.gmra.mrb[0].mxu0 %v3979
    %v4056 = vpop.f32.mrb[0].mxu0
    %v4057 = vadd.f32 0.0, %v4056
    %v4058 = vpop.f32.mrb[0].mxu0
    %v4059 = vpop.f32.mrb[0].mxu0
    %v4060 = vpop.f32.mrb[0].mxu0
    %4061 = vdwg.mxu0
    %v4062 = vadd.f32 %v3859, %v4016
    %v4063 = vadd.f32 %v3860, %v4018
    %v4064 = vadd.f32 %v3861, %v4057
    %v4066 = vlaneseq
    %v4067 = vshrl.u32 %v4066, 7
    %v4068 = vsub.s32 0, %v4067
    %v4069 = vrot.slane %v400, %v4068
    %v4070 = vlaneseq
    %v4071 = vshrl.u32 %v4070, 7
    %v4072 = vsub.s32 1, %v4071
    %v4073 = vrot.slane %v400, %v4072
    %v4074 = vlaneseq
    %v4075 = vshrl.u32 %v4074, 7
    %v4076 = vsub.s32 2, %v4075
    %v4077 = vrot.slane %v400, %v4076
    %v4081 = vadd.f32 %v4062, %v4069
    %v4082 = vadd.f32 %v4063, %v4073
    %v4083 = vadd.f32 %v4064, %v4077
    %4084 = vst [vmem:[#allocation8] sm:$0xff] %v4081
    %4085 = vst [vmem:[#allocation8 + $0x8] sm:$0xff] %v4082
    %4086 = vst [vmem:[#allocation8 + $0x10] sm:$0xff] %v4083
    %v4087 = vrot.slane %v1953, 4
    %v4089 = vsel %vm2728, %v2864, 0
    %v4092 = vsel %vm2870, %v4087, 0
    %4094 = vmatprep.subr.bf16.mxu0 0
    %4095 = vmatpush1.bf16.msra.mxu0 %v4092
    %4096 = vmatprep.subr.bf16.mxu0 0
    %4097 = vmatpush1.bf16.msra.mxu0 0
    %4098 = vmatprep.subr.bf16.mxu0 0
    %4099 = vmatpush1.bf16.msra.mxu0 0
    %4100 = vmatprep.subr.bf16.mxu0 0
    %4101 = vmatpush1.bf16.msra.mxu0 0
    %4102 = vmatprep.subr.bf16.mxu0 0
    %4103 = vmatpush1.bf16.msra.mxu0 0
    %4104 = vmatprep.subr.bf16.mxu0 0
    %4105 = vmatpush1.bf16.msra.mxu0 0
    %4106 = vmatprep.subr.bf16.mxu0 0
    %4107 = vmatpush1.bf16.msra.mxu0 0
    %4108 = vmatprep.subr.bf16.mxu0 0
    %4109 = vmatpush1.bf16.msra.mxu0 0
    %4110 = vmatprep.subr.bf16.mxu0 0
    %4111 = vmatpush1.bf16.msra.mxu0 0
    %4112 = vmatprep.subr.bf16.mxu0 0
    %4113 = vmatpush1.bf16.msra.mxu0 0
    %4114 = vmatprep.subr.bf16.mxu0 0
    %4115 = vmatpush1.bf16.msra.mxu0 0
    %4116 = vmatprep.subr.bf16.mxu0 0
    %4117 = vmatpush1.bf16.msra.mxu0 0
    %4118 = vmatprep.subr.bf16.mxu0 0
    %4119 = vmatpush1.bf16.msra.mxu0 0
    %4120 = vmatprep.subr.bf16.mxu0 0
    %4121 = vmatpush1.bf16.msra.mxu0 0
    %4122 = vmatprep.subr.bf16.mxu0 0
    %4123 = vmatpush1.bf16.msra.mxu0 0
    %4124 = vmatprep.subr.bf16.mxu0 0
    %4125 = vmatpush1.bf16.msra.mxu0 0
    %4126 = vmatprep.mubr.bf16.mxu0 0
    %4127 = vmatmul.mubr.bf16.gmra.mrb[0].mxu0 %v4089
    %v4128 = vpop.f32.mrb[0].mxu0
    %v4129 = vadd.f32 0.0, %v4128
    %v4130 = vpop.f32.mrb[0].mxu0
    %v4131 = vpop.f32.mrb[0].mxu0
    %v4132 = vpop.f32.mrb[0].mxu0
    %4133 = vdwg.mxu0
    %v4134 = vpack.c.bf16 %v4129, %v4129
    %v4136 = vrot.slane %v2864, 4
    %4137 = vrot.lane.b32.xlu0 %v4087, 64
    %v4138 = vpop.permute.xlu0 %4137
    %v4140 = vsel %vm2728, %v4136, 0
    %v4143 = vsel %vm2870, %v4138, 0
    %4145 = vmatprep.subr.bf16.mxu0 0
    %4146 = vmatpush1.bf16.msra.mxu0 %v4143
    %4147 = vmatprep.subr.bf16.mxu0 0
    %4148 = vmatpush1.bf16.msra.mxu0 0
    %4149 = vmatprep.subr.bf16.mxu0 0
    %4150 = vmatpush1.bf16.msra.mxu0 0
    %4151 = vmatprep.subr.bf16.mxu0 0
    %4152 = vmatpush1.bf16.msra.mxu0 0
    %4153 = vmatprep.subr.bf16.mxu0 0
    %4154 = vmatpush1.bf16.msra.mxu0 0
    %4155 = vmatprep.subr.bf16.mxu0 0
    %4156 = vmatpush1.bf16.msra.mxu0 0
    %4157 = vmatprep.subr.bf16.mxu0 0
    %4158 = vmatpush1.bf16.msra.mxu0 0
    %4159 = vmatprep.subr.bf16.mxu0 0
    %4160 = vmatpush1.bf16.msra.mxu0 0
    %4161 = vmatprep.subr.bf16.mxu0 0
    %4162 = vmatpush1.bf16.msra.mxu0 0
    %4163 = vmatprep.subr.bf16.mxu0 0
    %4164 = vmatpush1.bf16.msra.mxu0 0
    %4165 = vmatprep.subr.bf16.mxu0 0
    %4166 = vmatpush1.bf16.msra.mxu0 0
    %4167 = vmatprep.subr.bf16.mxu0 0
    %4168 = vmatpush1.bf16.msra.mxu0 0
    %4169 = vmatprep.subr.bf16.mxu0 0
    %4170 = vmatpush1.bf16.msra.mxu0 0
    %4171 = vmatprep.subr.bf16.mxu0 0
    %4172 = vmatpush1.bf16.msra.mxu0 0
    %4173 = vmatprep.subr.bf16.mxu0 0
    %4174 = vmatpush1.bf16.msra.mxu0 0
    %4175 = vmatprep.subr.bf16.mxu0 0
    %4176 = vmatpush1.bf16.msra.mxu0 0
    %4177 = vmatprep.mubr.bf16.mxu0 0
    %4178 = vmatmul.mubr.bf16.gmra.mrb[0].mxu0 %v4140
    %v4179 = vpop.f32.mrb[0].mxu0
    %v4180 = vadd.f32 0.0, %v4179
    %v4181 = vpop.f32.mrb[0].mxu0
    %v4182 = vpop.f32.mrb[0].mxu0
    %v4183 = vpop.f32.mrb[0].mxu0
    %4184 = vdwg.mxu0
    %v4185 = vpack.c.bf16 %v4180, %v4180
    %v4187 = vsel %vm1956, %v4185, 0
    %4189 = vmatprep.subr.bf16.mxu0 %v3008
    %4190 = vmatpush1.bf16.msra.mxu0 %v3007
    %4191 = vmatprep.subr.bf16.mxu0 %v3011
    %4192 = vmatpush1.bf16.msra.mxu0 %v3010
    %4193 = vmatprep.subr.bf16.mxu0 %v3014
    %4194 = vmatpush1.bf16.msra.mxu0 %v3013
    %4195 = vmatprep.subr.bf16.mxu0 %v3017
    %4196 = vmatpush1.bf16.msra.mxu0 %v3016
    %4197 = vmatprep.subr.bf16.mxu0 0
    %4198 = vmatpush1.bf16.msra.mxu0 0
    %4199 = vmatprep.subr.bf16.mxu0 0
    %4200 = vmatpush1.bf16.msra.mxu0 0
    %4201 = vmatprep.subr.bf16.mxu0 0
    %4202 = vmatpush1.bf16.msra.mxu0 0
    %4203 = vmatprep.subr.bf16.mxu0 0
    %4204 = vmatpush1.bf16.msra.mxu0 0
    %4205 = vmatprep.subr.bf16.mxu0 0
    %4206 = vmatpush1.bf16.msra.mxu0 0
    %4207 = vmatprep.subr.bf16.mxu0 0
    %4208 = vmatpush1.bf16.msra.mxu0 0
    %4209 = vmatprep.subr.bf16.mxu0 0
    %4210 = vmatpush1.bf16.msra.mxu0 0
    %4211 = vmatprep.subr.bf16.mxu0 0
    %4212 = vmatpush1.bf16.msra.mxu0 0
    %4213 = vmatprep.subr.bf16.mxu0 0
    %4214 = vmatpush1.bf16.msra.mxu0 0
    %4215 = vmatprep.subr.bf16.mxu0 0
    %4216 = vmatpush1.bf16.msra.mxu0 0
    %4217 = vmatprep.subr.bf16.mxu0 0
    %4218 = vmatpush1.bf16.msra.mxu0 0
    %4219 = vmatprep.subr.bf16.mxu0 0
    %4220 = vmatpush1.bf16.msra.mxu0 0
    %4221 = vmatprep.mubr.bf16.mxu0 0
    %4222 = vmatmul.mubr.bf16.gmra.mrb[0].mxu0 %v4187
    %v4223 = vpop.f32.mrb[0].mxu0
    %v4224 = vadd.f32 0.0, %v4223
    %v4225 = vpop.f32.mrb[0].mxu0
    %v4226 = vadd.f32 0.0, %v4225
    %v4227 = vpop.f32.mrb[0].mxu0
    %v4228 = vpop.f32.mrb[0].mxu0
    %4229 = vdwg.mxu0
    %4230 = vmatprep.subr.bf16.mxu0 0
    %4231 = vmatpush1.bf16.msra.mxu0 %v3009
    %4232 = vmatprep.subr.bf16.mxu0 0
    %4233 = vmatpush1.bf16.msra.mxu0 %v3012
    %4234 = vmatprep.subr.bf16.mxu0 0
    %4235 = vmatpush1.bf16.msra.mxu0 %v3015
    %4236 = vmatprep.subr.bf16.mxu0 0
    %4237 = vmatpush1.bf16.msra.mxu0 %v3018
    %4238 = vmatprep.subr.bf16.mxu0 0
    %4239 = vmatpush1.bf16.msra.mxu0 0
    %4240 = vmatprep.subr.bf16.mxu0 0
    %4241 = vmatpush1.bf16.msra.mxu0 0
    %4242 = vmatprep.subr.bf16.mxu0 0
    %4243 = vmatpush1.bf16.msra.mxu0 0
    %4244 = vmatprep.subr.bf16.mxu0 0
    %4245 = vmatpush1.bf16.msra.mxu0 0
    %4246 = vmatprep.subr.bf16.mxu0 0
    %4247 = vmatpush1.bf16.msra.mxu0 0
    %4248 = vmatprep.subr.bf16.mxu0 0
    %4249 = vmatpush1.bf16.msra.mxu0 0
    %4250 = vmatprep.subr.bf16.mxu0 0
    %4251 = vmatpush1.bf16.msra.mxu0 0
    %4252 = vmatprep.subr.bf16.mxu0 0
    %4253 = vmatpush1.bf16.msra.mxu0 0
    %4254 = vmatprep.subr.bf16.mxu0 0
    %4255 = vmatpush1.bf16.msra.mxu0 0
    %4256 = vmatprep.subr.bf16.mxu0 0
    %4257 = vmatpush1.bf16.msra.mxu0 0
    %4258 = vmatprep.subr.bf16.mxu0 0
    %4259 = vmatpush1.bf16.msra.mxu0 0
    %4260 = vmatprep.subr.bf16.mxu0 0
    %4261 = vmatpush1.bf16.msra.mxu0 0
    %4262 = vmatprep.mubr.bf16.mxu0 0
    %4263 = vmatmul.mubr.bf16.gmra.mrb[0].mxu0 %v4187
    %v4264 = vpop.f32.mrb[0].mxu0
    %v4265 = vadd.f32 0.0, %v4264
    %v4266 = vpop.f32.mrb[0].mxu0
    %v4267 = vpop.f32.mrb[0].mxu0
    %v4268 = vpop.f32.mrb[0].mxu0
    %4269 = vdwg.mxu0
    %v4271 = vsel %vm1956, %v4134, 0
    %4273 = vmatprep.subr.bf16.mxu0 %v3156
    %4274 = vmatpush1.bf16.msra.mxu0 %v3155
    %4275 = vmatprep.subr.bf16.mxu0 %v3159
    %4276 = vmatpush1.bf16.msra.mxu0 %v3158
    %4277 = vmatprep.subr.bf16.mxu0 %v3162
    %4278 = vmatpush1.bf16.msra.mxu0 %v3161
    %4279 = vmatprep.subr.bf16.mxu0 %v3165
    %4280 = vmatpush1.bf16.msra.mxu0 %v3164
    %4281 = vmatprep.subr.bf16.mxu0 0
    %4282 = vmatpush1.bf16.msra.mxu0 0
    %4283 = vmatprep.subr.bf16.mxu0 0
    %4284 = vmatpush1.bf16.msra.mxu0 0
    %4285 = vmatprep.subr.bf16.mxu0 0
    %4286 = vmatpush1.bf16.msra.mxu0 0
    %4287 = vmatprep.subr.bf16.mxu0 0
    %4288 = vmatpush1.bf16.msra.mxu0 0
    %4289 = vmatprep.subr.bf16.mxu0 0
    %4290 = vmatpush1.bf16.msra.mxu0 0
    %4291 = vmatprep.subr.bf16.mxu0 0
    %4292 = vmatpush1.bf16.msra.mxu0 0
    %4293 = vmatprep.subr.bf16.mxu0 0
    %4294 = vmatpush1.bf16.msra.mxu0 0
    %4295 = vmatprep.subr.bf16.mxu0 0
    %4296 = vmatpush1.bf16.msra.mxu0 0
    %4297 = vmatprep.subr.bf16.mxu0 0
    %4298 = vmatpush1.bf16.msra.mxu0 0
    %4299 = vmatprep.subr.bf16.mxu0 0
    %4300 = vmatpush1.bf16.msra.mxu0 0
    %4301 = vmatprep.subr.bf16.mxu0 0
    %4302 = vmatpush1.bf16.msra.mxu0 0
    %4303 = vmatprep.subr.bf16.mxu0 0
    %4304 = vmatpush1.bf16.msra.mxu0 0
    %4305 = vmatprep.mubr.bf16.mxu0 0
    %4306 = vmatmul.mubr.bf16.gmra.mrb[0].mxu0 %v4271
    %v4307 = vpop.f32.mrb[0].mxu0
    %v4308 = vadd.f32 %v4224, %v4307
    %v4309 = vpop.f32.mrb[0].mxu0
    %v4310 = vadd.f32 %v4226, %v4309
    %v4311 = vpop.f32.mrb[0].mxu0
    %v4312 = vpop.f32.mrb[0].mxu0
    %4313 = vdwg.mxu0
    %4314 = vmatprep.subr.bf16.mxu0 0
    %4315 = vmatpush1.bf16.msra.mxu0 %v3157
    %4316 = vmatprep.subr.bf16.mxu0 0
    %4317 = vmatpush1.bf16.msra.mxu0 %v3160
    %4318 = vmatprep.subr.bf16.mxu0 0
    %4319 = vmatpush1.bf16.msra.mxu0 %v3163
    %4320 = vmatprep.subr.bf16.mxu0 0
    %4321 = vmatpush1.bf16.msra.mxu0 %v3166
    %4322 = vmatprep.subr.bf16.mxu0 0
    %4323 = vmatpush1.bf16.msra.mxu0 0
    %4324 = vmatprep.subr.bf16.mxu0 0
    %4325 = vmatpush1.bf16.msra.mxu0 0
    %4326 = vmatprep.subr.bf16.mxu0 0
    %4327 = vmatpush1.bf16.msra.mxu0 0
    %4328 = vmatprep.subr.bf16.mxu0 0
    %4329 = vmatpush1.bf16.msra.mxu0 0
    %4330 = vmatprep.subr.bf16.mxu0 0
    %4331 = vmatpush1.bf16.msra.mxu0 0
    %4332 = vmatprep.subr.bf16.mxu0 0
    %4333 = vmatpush1.bf16.msra.mxu0 0
    %4334 = vmatprep.subr.bf16.mxu0 0
    %4335 = vmatpush1.bf16.msra.mxu0 0
    %4336 = vmatprep.subr.bf16.mxu0 0
    %4337 = vmatpush1.bf16.msra.mxu0 0
    %4338 = vmatprep.subr.bf16.mxu0 0
    %4339 = vmatpush1.bf16.msra.mxu0 0
    %4340 = vmatprep.subr.bf16.mxu0 0
    %4341 = vmatpush1.bf16.msra.mxu0 0
    %4342 = vmatprep.subr.bf16.mxu0 0
    %4343 = vmatpush1.bf16.msra.mxu0 0
    %4344 = vmatprep.subr.bf16.mxu0 0
    %4345 = vmatpush1.bf16.msra.mxu0 0
    %4346 = vmatprep.mubr.bf16.mxu0 0
    %4347 = vmatmul.mubr.bf16.gmra.mrb[0].mxu0 %v4271
    %v4348 = vpop.f32.mrb[0].mxu0
    %v4349 = vadd.f32 %v4265, %v4348
    %v4350 = vpop.f32.mrb[0].mxu0
    %v4351 = vpop.f32.mrb[0].mxu0
    %v4352 = vpop.f32.mrb[0].mxu0
    %4353 = vdwg.mxu0
    %v4354 = vrot.slane %v1954, 4
    %v4356 = vsel %vm2728, %v2865, 0
    %v4359 = vsel %vm2870, %v4354, 0
    %4361 = vmatprep.subr.bf16.mxu0 0
    %4362 = vmatpush1.bf16.msra.mxu0 %v4359
    %4363 = vmatprep.subr.bf16.mxu0 0
    %4364 = vmatpush1.bf16.msra.mxu0 0
    %4365 = vmatprep.subr.bf16.mxu0 0
    %4366 = vmatpush1.bf16.msra.mxu0 0
    %4367 = vmatprep.subr.bf16.mxu0 0
    %4368 = vmatpush1.bf16.msra.mxu0 0
    %4369 = vmatprep.subr.bf16.mxu0 0
    %4370 = vmatpush1.bf16.msra.mxu0 0
    %4371 = vmatprep.subr.bf16.mxu0 0
    %4372 = vmatpush1.bf16.msra.mxu0 0
    %4373 = vmatprep.subr.bf16.mxu0 0
    %4374 = vmatpush1.bf16.msra.mxu0 0
    %4375 = vmatprep.subr.bf16.mxu0 0
    %4376 = vmatpush1.bf16.msra.mxu0 0
    %4377 = vmatprep.subr.bf16.mxu0 0
    %4378 = vmatpush1.bf16.msra.mxu0 0
    %4379 = vmatprep.subr.bf16.mxu0 0
    %4380 = vmatpush1.bf16.msra.mxu0 0
    %4381 = vmatprep.subr.bf16.mxu0 0
    %4382 = vmatpush1.bf16.msra.mxu0 0
    %4383 = vmatprep.subr.bf16.mxu0 0
    %4384 = vmatpush1.bf16.msra.mxu0 0
    %4385 = vmatprep.subr.bf16.mxu0 0
    %4386 = vmatpush1.bf16.msra.mxu0 0
    %4387 = vmatprep.subr.bf16.mxu0 0
    %4388 = vmatpush1.bf16.msra.mxu0 0
    %4389 = vmatprep.subr.bf16.mxu0 0
    %4390 = vmatpush1.bf16.msra.mxu0 0
    %4391 = vmatprep.subr.bf16.mxu0 0
    %4392 = vmatpush1.bf16.msra.mxu0 0
    %4393 = vmatprep.mubr.bf16.mxu0 0
    %4394 = vmatmul.mubr.bf16.gmra.mrb[0].mxu0 %v4356
    %v4395 = vpop.f32.mrb[0].mxu0
    %v4396 = vadd.f32 0.0, %v4395
    %v4397 = vpop.f32.mrb[0].mxu0
    %v4398 = vpop.f32.mrb[0].mxu0
    %v4399 = vpop.f32.mrb[0].mxu0
    %4400 = vdwg.mxu0
    %v4401 = vpack.c.bf16 %v4396, %v4396
    %v4403 = vsel %vm1956, %v4401, 0
    %4405 = vmatprep.subr.bf16.mxu0 %v3351
    %4406 = vmatpush1.bf16.msra.mxu0 %v3350
    %4407 = vmatprep.subr.bf16.mxu0 %v3354
    %4408 = vmatpush1.bf16.msra.mxu0 %v3353
    %4409 = vmatprep.subr.bf16.mxu0 %v3357
    %4410 = vmatpush1.bf16.msra.mxu0 %v3356
    %4411 = vmatprep.subr.bf16.mxu0 %v3360
    %4412 = vmatpush1.bf16.msra.mxu0 %v3359
    %4413 = vmatprep.subr.bf16.mxu0 0
    %4414 = vmatpush1.bf16.msra.mxu0 0
    %4415 = vmatprep.subr.bf16.mxu0 0
    %4416 = vmatpush1.bf16.msra.mxu0 0
    %4417 = vmatprep.subr.bf16.mxu0 0
    %4418 = vmatpush1.bf16.msra.mxu0 0
    %4419 = vmatprep.subr.bf16.mxu0 0
    %4420 = vmatpush1.bf16.msra.mxu0 0
    %4421 = vmatprep.subr.bf16.mxu0 0
    %4422 = vmatpush1.bf16.msra.mxu0 0
    %4423 = vmatprep.subr.bf16.mxu0 0
    %4424 = vmatpush1.bf16.msra.mxu0 0
    %4425 = vmatprep.subr.bf16.mxu0 0
    %4426 = vmatpush1.bf16.msra.mxu0 0
    %4427 = vmatprep.subr.bf16.mxu0 0
    %4428 = vmatpush1.bf16.msra.mxu0 0
    %4429 = vmatprep.subr.bf16.mxu0 0
    %4430 = vmatpush1.bf16.msra.mxu0 0
    %4431 = vmatprep.subr.bf16.mxu0 0
    %4432 = vmatpush1.bf16.msra.mxu0 0
    %4433 = vmatprep.subr.bf16.mxu0 0
    %4434 = vmatpush1.bf16.msra.mxu0 0
    %4435 = vmatprep.subr.bf16.mxu0 0
    %4436 = vmatpush1.bf16.msra.mxu0 0
    %4437 = vmatprep.mubr.bf16.mxu0 0
    %4438 = vmatmul.mubr.bf16.gmra.mrb[0].mxu0 %v4403
    %v4439 = vpop.f32.mrb[0].mxu0
    %v4440 = vadd.f32 0.0, %v4439
    %v4441 = vpop.f32.mrb[0].mxu0
    %v4442 = vadd.f32 0.0, %v4441
    %v4443 = vpop.f32.mrb[0].mxu0
    %v4444 = vpop.f32.mrb[0].mxu0
    %4445 = vdwg.mxu0
    %4446 = vmatprep.subr.bf16.mxu0 0
    %4447 = vmatpush1.bf16.msra.mxu0 %v3352
    %4448 = vmatprep.subr.bf16.mxu0 0
    %4449 = vmatpush1.bf16.msra.mxu0 %v3355
    %4450 = vmatprep.subr.bf16.mxu0 0
    %4451 = vmatpush1.bf16.msra.mxu0 %v3358
    %4452 = vmatprep.subr.bf16.mxu0 0
    %4453 = vmatpush1.bf16.msra.mxu0 %v3361
    %4454 = vmatprep.subr.bf16.mxu0 0
    %4455 = vmatpush1.bf16.msra.mxu0 0
    %4456 = vmatprep.subr.bf16.mxu0 0
    %4457 = vmatpush1.bf16.msra.mxu0 0
    %4458 = vmatprep.subr.bf16.mxu0 0
    %4459 = vmatpush1.bf16.msra.mxu0 0
    %4460 = vmatprep.subr.bf16.mxu0 0
    %4461 = vmatpush1.bf16.msra.mxu0 0
    %4462 = vmatprep.subr.bf16.mxu0 0
    %4463 = vmatpush1.bf16.msra.mxu0 0
    %4464 = vmatprep.subr.bf16.mxu0 0
    %4465 = vmatpush1.bf16.msra.mxu0 0
    %4466 = vmatprep.subr.bf16.mxu0 0
    %4467 = vmatpush1.bf16.msra.mxu0 0
    %4468 = vmatprep.subr.bf16.mxu0 0
    %4469 = vmatpush1.bf16.msra.mxu0 0
    %4470 = vmatprep.subr.bf16.mxu0 0
    %4471 = vmatpush1.bf16.msra.mxu0 0
    %4472 = vmatprep.subr.bf16.mxu0 0
    %4473 = vmatpush1.bf16.msra.mxu0 0
    %4474 = vmatprep.subr.bf16.mxu0 0
    %4475 = vmatpush1.bf16.msra.mxu0 0
    %4476 = vmatprep.subr.bf16.mxu0 0
    %4477 = vmatpush1.bf16.msra.mxu0 0
    %4478 = vmatprep.mubr.bf16.mxu0 0
    %4479 = vmatmul.mubr.bf16.gmra.mrb[0].mxu0 %v4403
    %v4480 = vpop.f32.mrb[0].mxu0
    %v4481 = vadd.f32 0.0, %v4480
    %v4482 = vpop.f32.mrb[0].mxu0
    %v4483 = vpop.f32.mrb[0].mxu0
    %v4484 = vpop.f32.mrb[0].mxu0
    %4485 = vdwg.mxu0
    %v4486 = vadd.f32 %v4308, %v4440
    %v4487 = vadd.f32 %v4310, %v4442
    %v4488 = vadd.f32 %v4349, %v4481
    %v4490 = vrot.slane %v2865, 4
    %4491 = vrot.lane.b32.xlu0 %v4354, 64
    %v4492 = vpop.permute.xlu0 %4491
    %v4494 = vsel %vm2728, %v4490, 0
    %v4497 = vsel %vm2870, %v4492, 0
    %4499 = vmatprep.subr.bf16.mxu0 0
    %4500 = vmatpush1.bf16.msra.mxu0 %v4497
    %4501 = vmatprep.subr.bf16.mxu0 0
    %4502 = vmatpush1.bf16.msra.mxu0 0
    %4503 = vmatprep.subr.bf16.mxu0 0
    %4504 = vmatpush1.bf16.msra.mxu0 0
    %4505 = vmatprep.subr.bf16.mxu0 0
    %4506 = vmatpush1.bf16.msra.mxu0 0
    %4507 = vmatprep.subr.bf16.mxu0 0
    %4508 = vmatpush1.bf16.msra.mxu0 0
    %4509 = vmatprep.subr.bf16.mxu0 0
    %4510 = vmatpush1.bf16.msra.mxu0 0
    %4511 = vmatprep.subr.bf16.mxu0 0
    %4512 = vmatpush1.bf16.msra.mxu0 0
    %4513 = vmatprep.subr.bf16.mxu0 0
    %4514 = vmatpush1.bf16.msra.mxu0 0
    %4515 = vmatprep.subr.bf16.mxu0 0
    %4516 = vmatpush1.bf16.msra.mxu0 0
    %4517 = vmatprep.subr.bf16.mxu0 0
    %4518 = vmatpush1.bf16.msra.mxu0 0
    %4519 = vmatprep.subr.bf16.mxu0 0
    %4520 = vmatpush1.bf16.msra.mxu0 0
    %4521 = vmatprep.subr.bf16.mxu0 0
    %4522 = vmatpush1.bf16.msra.mxu0 0
    %4523 = vmatprep.subr.bf16.mxu0 0
    %4524 = vmatpush1.bf16.msra.mxu0 0
    %4525 = vmatprep.subr.bf16.mxu0 0
    %4526 = vmatpush1.bf16.msra.mxu0 0
    %4527 = vmatprep.subr.bf16.mxu0 0
    %4528 = vmatpush1.bf16.msra.mxu0 0
    %4529 = vmatprep.subr.bf16.mxu0 0
    %4530 = vmatpush1.bf16.msra.mxu0 0
    %4531 = vmatprep.mubr.bf16.mxu0 0
    %4532 = vmatmul.mubr.bf16.gmra.mrb[0].mxu0 %v4494
    %v4533 = vpop.f32.mrb[0].mxu0
    %v4534 = vadd.f32 0.0, %v4533
    %v4535 = vpop.f32.mrb[0].mxu0
    %v4536 = vpop.f32.mrb[0].mxu0
    %v4537 = vpop.f32.mrb[0].mxu0
    %4538 = vdwg.mxu0
    %v4539 = vpack.c.bf16 %v4534, %v4534
    %v4541 = vsel %vm1956, %v4539, 0
    %4543 = vmatprep.subr.bf16.mxu0 %v3554
    %4544 = vmatpush1.bf16.msra.mxu0 %v3553
    %4545 = vmatprep.subr.bf16.mxu0 %v3557
    %4546 = vmatpush1.bf16.msra.mxu0 %v3556
    %4547 = vmatprep.subr.bf16.mxu0 %v3560
    %4548 = vmatpush1.bf16.msra.mxu0 %v3559
    %4549 = vmatprep.subr.bf16.mxu0 %v3563
    %4550 = vmatpush1.bf16.msra.mxu0 %v3562
    %4551 = vmatprep.subr.bf16.mxu0 0
    %4552 = vmatpush1.bf16.msra.mxu0 0
    %4553 = vmatprep.subr.bf16.mxu0 0
    %4554 = vmatpush1.bf16.msra.mxu0 0
    %4555 = vmatprep.subr.bf16.mxu0 0
    %4556 = vmatpush1.bf16.msra.mxu0 0
    %4557 = vmatprep.subr.bf16.mxu0 0
    %4558 = vmatpush1.bf16.msra.mxu0 0
    %4559 = vmatprep.subr.bf16.mxu0 0
    %4560 = vmatpush1.bf16.msra.mxu0 0
    %4561 = vmatprep.subr.bf16.mxu0 0
    %4562 = vmatpush1.bf16.msra.mxu0 0
    %4563 = vmatprep.subr.bf16.mxu0 0
    %4564 = vmatpush1.bf16.msra.mxu0 0
    %4565 = vmatprep.subr.bf16.mxu0 0
    %4566 = vmatpush1.bf16.msra.mxu0 0
    %4567 = vmatprep.subr.bf16.mxu0 0
    %4568 = vmatpush1.bf16.msra.mxu0 0
    %4569 = vmatprep.subr.bf16.mxu0 0
    %4570 = vmatpush1.bf16.msra.mxu0 0
    %4571 = vmatprep.subr.bf16.mxu0 0
    %4572 = vmatpush1.bf16.msra.mxu0 0
    %4573 = vmatprep.subr.bf16.mxu0 0
    %4574 = vmatpush1.bf16.msra.mxu0 0
    %4575 = vmatprep.mubr.bf16.mxu0 0
    %4576 = vmatmul.mubr.bf16.gmra.mrb[0].mxu0 %v4541
    %v4577 = vpop.f32.mrb[0].mxu0
    %v4578 = vadd.f32 0.0, %v4577
    %v4579 = vpop.f32.mrb[0].mxu0
    %v4580 = vadd.f32 0.0, %v4579
    %v4581 = vpop.f32.mrb[0].mxu0
    %v4582 = vpop.f32.mrb[0].mxu0
    %4583 = vdwg.mxu0
    %4584 = vmatprep.subr.bf16.mxu0 0
    %4585 = vmatpush1.bf16.msra.mxu0 %v3555
    %4586 = vmatprep.subr.bf16.mxu0 0
    %4587 = vmatpush1.bf16.msra.mxu0 %v3558
    %4588 = vmatprep.subr.bf16.mxu0 0
    %4589 = vmatpush1.bf16.msra.mxu0 %v3561
    %4590 = vmatprep.subr.bf16.mxu0 0
    %4591 = vmatpush1.bf16.msra.mxu0 %v3564
    %4592 = vmatprep.subr.bf16.mxu0 0
    %4593 = vmatpush1.bf16.msra.mxu0 0
    %4594 = vmatprep.subr.bf16.mxu0 0
    %4595 = vmatpush1.bf16.msra.mxu0 0
    %4596 = vmatprep.subr.bf16.mxu0 0
    %4597 = vmatpush1.bf16.msra.mxu0 0
    %4598 = vmatprep.subr.bf16.mxu0 0
    %4599 = vmatpush1.bf16.msra.mxu0 0
    %4600 = vmatprep.subr.bf16.mxu0 0
    %4601 = vmatpush1.bf16.msra.mxu0 0
    %4602 = vmatprep.subr.bf16.mxu0 0
    %4603 = vmatpush1.bf16.msra.mxu0 0
    %4604 = vmatprep.subr.bf16.mxu0 0
    %4605 = vmatpush1.bf16.msra.mxu0 0
    %4606 = vmatprep.subr.bf16.mxu0 0
    %4607 = vmatpush1.bf16.msra.mxu0 0
    %4608 = vmatprep.subr.bf16.mxu0 0
    %4609 = vmatpush1.bf16.msra.mxu0 0
    %4610 = vmatprep.subr.bf16.mxu0 0
    %4611 = vmatpush1.bf16.msra.mxu0 0
    %4612 = vmatprep.subr.bf16.mxu0 0
    %4613 = vmatpush1.bf16.msra.mxu0 0
    %4614 = vmatprep.subr.bf16.mxu0 0
    %4615 = vmatpush1.bf16.msra.mxu0 0
    %4616 = vmatprep.mubr.bf16.mxu0 0
    %4617 = vmatmul.mubr.bf16.gmra.mrb[0].mxu0 %v4541
    %v4618 = vpop.f32.mrb[0].mxu0
    %v4619 = vadd.f32 0.0, %v4618
    %v4620 = vpop.f32.mrb[0].mxu0
    %v4621 = vpop.f32.mrb[0].mxu0
    %v4622 = vpop.f32.mrb[0].mxu0
    %4623 = vdwg.mxu0
    %v4624 = vadd.f32 %v4486, %v4578
    %v4625 = vadd.f32 %v4487, %v4580
    %v4626 = vadd.f32 %v4488, %v4619
    %v4627 = vrot.slane %v1955, 4
    %v4629 = vsel %vm2728, %v2866, 0
    %v4632 = vsel %vm2870, %v4627, 0
    %4634 = vmatprep.subr.bf16.mxu0 0
    %4635 = vmatpush1.bf16.msra.mxu0 %v4632
    %4636 = vmatprep.subr.bf16.mxu0 0
    %4637 = vmatpush1.bf16.msra.mxu0 0
    %4638 = vmatprep.subr.bf16.mxu0 0
    %4639 = vmatpush1.bf16.msra.mxu0 0
    %4640 = vmatprep.subr.bf16.mxu0 0
    %4641 = vmatpush1.bf16.msra.mxu0 0
    %4642 = vmatprep.subr.bf16.mxu0 0
    %4643 = vmatpush1.bf16.msra.mxu0 0
    %4644 = vmatprep.subr.bf16.mxu0 0
    %4645 = vmatpush1.bf16.msra.mxu0 0
    %4646 = vmatprep.subr.bf16.mxu0 0
    %4647 = vmatpush1.bf16.msra.mxu0 0
    %4648 = vmatprep.subr.bf16.mxu0 0
    %4649 = vmatpush1.bf16.msra.mxu0 0
    %4650 = vmatprep.subr.bf16.mxu0 0
    %4651 = vmatpush1.bf16.msra.mxu0 0
    %4652 = vmatprep.subr.bf16.mxu0 0
    %4653 = vmatpush1.bf16.msra.mxu0 0
    %4654 = vmatprep.subr.bf16.mxu0 0
    %4655 = vmatpush1.bf16.msra.mxu0 0
    %4656 = vmatprep.subr.bf16.mxu0 0
    %4657 = vmatpush1.bf16.msra.mxu0 0
    %4658 = vmatprep.subr.bf16.mxu0 0
    %4659 = vmatpush1.bf16.msra.mxu0 0
    %4660 = vmatprep.subr.bf16.mxu0 0
    %4661 = vmatpush1.bf16.msra.mxu0 0
    %4662 = vmatprep.subr.bf16.mxu0 0
    %4663 = vmatpush1.bf16.msra.mxu0 0
    %4664 = vmatprep.subr.bf16.mxu0 0
    %4665 = vmatpush1.bf16.msra.mxu0 0
    %4666 = vmatprep.mubr.bf16.mxu0 0
    %4667 = vmatmul.mubr.bf16.gmra.mrb[0].mxu0 %v4629
    %v4668 = vpop.f32.mrb[0].mxu0
    %v4669 = vadd.f32 0.0, %v4668
    %v4670 = vpop.f32.mrb[0].mxu0
    %v4671 = vpop.f32.mrb[0].mxu0
    %v4672 = vpop.f32.mrb[0].mxu0
    %4673 = vdwg.mxu0
    %v4674 = vpack.c.bf16 %v4669, %v4669
    %v4676 = vsel %vm1956, %v4674, 0
    %4678 = vmatprep.subr.bf16.mxu0 %v3752
    %4679 = vmatpush1.bf16.msra.mxu0 %v3751
    %4680 = vmatprep.subr.bf16.mxu0 %v3755
    %4681 = vmatpush1.bf16.msra.mxu0 %v3754
    %4682 = vmatprep.subr.bf16.mxu0 %v3758
    %4683 = vmatpush1.bf16.msra.mxu0 %v3757
    %4684 = vmatprep.subr.bf16.mxu0 %v3761
    %4685 = vmatpush1.bf16.msra.mxu0 %v3760
    %4686 = vmatprep.subr.bf16.mxu0 0
    %4687 = vmatpush1.bf16.msra.mxu0 0
    %4688 = vmatprep.subr.bf16.mxu0 0
    %4689 = vmatpush1.bf16.msra.mxu0 0
    %4690 = vmatprep.subr.bf16.mxu0 0
    %4691 = vmatpush1.bf16.msra.mxu0 0
    %4692 = vmatprep.subr.bf16.mxu0 0
    %4693 = vmatpush1.bf16.msra.mxu0 0
    %4694 = vmatprep.subr.bf16.mxu0 0
    %4695 = vmatpush1.bf16.msra.mxu0 0
    %4696 = vmatprep.subr.bf16.mxu0 0
    %4697 = vmatpush1.bf16.msra.mxu0 0
    %4698 = vmatprep.subr.bf16.mxu0 0
    %4699 = vmatpush1.bf16.msra.mxu0 0
    %4700 = vmatprep.subr.bf16.mxu0 0
    %4701 = vmatpush1.bf16.msra.mxu0 0
    %4702 = vmatprep.subr.bf16.mxu0 0
    %4703 = vmatpush1.bf16.msra.mxu0 0
    %4704 = vmatprep.subr.bf16.mxu0 0
    %4705 = vmatpush1.bf16.msra.mxu0 0
    %4706 = vmatprep.subr.bf16.mxu0 0
    %4707 = vmatpush1.bf16.msra.mxu0 0
    %4708 = vmatprep.subr.bf16.mxu0 0
    %4709 = vmatpush1.bf16.msra.mxu0 0
    %4710 = vmatprep.mubr.bf16.mxu0 0
    %4711 = vmatmul.mubr.bf16.gmra.mrb[0].mxu0 %v4676
    %v4712 = vpop.f32.mrb[0].mxu0
    %v4713 = vadd.f32 0.0, %v4712
    %v4714 = vpop.f32.mrb[0].mxu0
    %v4715 = vadd.f32 0.0, %v4714
    %v4716 = vpop.f32.mrb[0].mxu0
    %v4717 = vpop.f32.mrb[0].mxu0
    %4718 = vdwg.mxu0
    %4719 = vmatprep.subr.bf16.mxu0 0
    %4720 = vmatpush1.bf16.msra.mxu0 %v3753
    %4721 = vmatprep.subr.bf16.mxu0 0
    %4722 = vmatpush1.bf16.msra.mxu0 %v3756
    %4723 = vmatprep.subr.bf16.mxu0 0
    %4724 = vmatpush1.bf16.msra.mxu0 %v3759
    %4725 = vmatprep.subr.bf16.mxu0 0
    %4726 = vmatpush1.bf16.msra.mxu0 %v3762
    %4727 = vmatprep.subr.bf16.mxu0 0
    %4728 = vmatpush1.bf16.msra.mxu0 0
    %4729 = vmatprep.subr.bf16.mxu0 0
    %4730 = vmatpush1.bf16.msra.mxu0 0
    %4731 = vmatprep.subr.bf16.mxu0 0
    %4732 = vmatpush1.bf16.msra.mxu0 0
    %4733 = vmatprep.subr.bf16.mxu0 0
    %4734 = vmatpush1.bf16.msra.mxu0 0
    %4735 = vmatprep.subr.bf16.mxu0 0
    %4736 = vmatpush1.bf16.msra.mxu0 0
    %4737 = vmatprep.subr.bf16.mxu0 0
    %4738 = vmatpush1.bf16.msra.mxu0 0
    %4739 = vmatprep.subr.bf16.mxu0 0
    %4740 = vmatpush1.bf16.msra.mxu0 0
    %4741 = vmatprep.subr.bf16.mxu0 0
    %4742 = vmatpush1.bf16.msra.mxu0 0
    %4743 = vmatprep.subr.bf16.mxu0 0
    %4744 = vmatpush1.bf16.msra.mxu0 0
    %4745 = vmatprep.subr.bf16.mxu0 0
    %4746 = vmatpush1.bf16.msra.mxu0 0
    %4747 = vmatprep.subr.bf16.mxu0 0
    %4748 = vmatpush1.bf16.msra.mxu0 0
    %4749 = vmatprep.subr.bf16.mxu0 0
    %4750 = vmatpush1.bf16.msra.mxu0 0
    %4751 = vmatprep.mubr.bf16.mxu0 0
    %4752 = vmatmul.mubr.bf16.gmra.mrb[0].mxu0 %v4676
    %v4753 = vpop.f32.mrb[0].mxu0
    %v4754 = vadd.f32 0.0, %v4753
    %v4755 = vpop.f32.mrb[0].mxu0
    %v4756 = vpop.f32.mrb[0].mxu0
    %v4757 = vpop.f32.mrb[0].mxu0
    %4758 = vdwg.mxu0
    %v4759 = vadd.f32 %v4624, %v4713
    %v4760 = vadd.f32 %v4625, %v4715
    %v4761 = vadd.f32 %v4626, %v4754
    %v4763 = vrot.slane %v2866, 4
    %4764 = vrot.lane.b32.xlu0 %v4627, 64
    %v4765 = vpop.permute.xlu0 %4764
    %v4767 = vsel %vm2728, %v4763, 0
    %v4770 = vsel %vm2870, %v4765, 0
    %4772 = vmatprep.subr.bf16.mxu0 0
    %4773 = vmatpush1.bf16.msra.mxu0 %v4770
    %4774 = vmatprep.subr.bf16.mxu0 0
    %4775 = vmatpush1.bf16.msra.mxu0 0
    %4776 = vmatprep.subr.bf16.mxu0 0
    %4777 = vmatpush1.bf16.msra.mxu0 0
    %4778 = vmatprep.subr.bf16.mxu0 0
    %4779 = vmatpush1.bf16.msra.mxu0 0
    %4780 = vmatprep.subr.bf16.mxu0 0
    %4781 = vmatpush1.bf16.msra.mxu0 0
    %4782 = vmatprep.subr.bf16.mxu0 0
    %4783 = vmatpush1.bf16.msra.mxu0 0
    %4784 = vmatprep.subr.bf16.mxu0 0
    %4785 = vmatpush1.bf16.msra.mxu0 0
    %4786 = vmatprep.subr.bf16.mxu0 0
    %4787 = vmatpush1.bf16.msra.mxu0 0
    %4788 = vmatprep.subr.bf16.mxu0 0
    %4789 = vmatpush1.bf16.msra.mxu0 0
    %4790 = vmatprep.subr.bf16.mxu0 0
    %4791 = vmatpush1.bf16.msra.mxu0 0
    %4792 = vmatprep.subr.bf16.mxu0 0
    %4793 = vmatpush1.bf16.msra.mxu0 0
    %4794 = vmatprep.subr.bf16.mxu0 0
    %4795 = vmatpush1.bf16.msra.mxu0 0
    %4796 = vmatprep.subr.bf16.mxu0 0
    %4797 = vmatpush1.bf16.msra.mxu0 0
    %4798 = vmatprep.subr.bf16.mxu0 0
    %4799 = vmatpush1.bf16.msra.mxu0 0
    %4800 = vmatprep.subr.bf16.mxu0 0
    %4801 = vmatpush1.bf16.msra.mxu0 0
    %4802 = vmatprep.subr.bf16.mxu0 0
    %4803 = vmatpush1.bf16.msra.mxu0 0
    %4804 = vmatprep.mubr.bf16.mxu0 0
    %4805 = vmatmul.mubr.bf16.gmra.mrb[0].mxu0 %v4767
    %v4806 = vpop.f32.mrb[0].mxu0
    %v4807 = vadd.f32 0.0, %v4806
    %v4808 = vpop.f32.mrb[0].mxu0
    %v4809 = vpop.f32.mrb[0].mxu0
    %v4810 = vpop.f32.mrb[0].mxu0
    %4811 = vdwg.mxu0
    %v4812 = vpack.c.bf16 %v4807, %v4807
    %v4814 = vsel %vm1956, %v4812, 0
    %4816 = vmatprep.subr.bf16.mxu0 %v3955
    %4817 = vmatpush1.bf16.msra.mxu0 %v3954
    %4818 = vmatprep.subr.bf16.mxu0 %v3958
    %4819 = vmatpush1.bf16.msra.mxu0 %v3957
    %4820 = vmatprep.subr.bf16.mxu0 %v3961
    %4821 = vmatpush1.bf16.msra.mxu0 %v3960
    %4822 = vmatprep.subr.bf16.mxu0 %v3964
    %4823 = vmatpush1.bf16.msra.mxu0 %v3963
    %4824 = vmatprep.subr.bf16.mxu0 0
    %4825 = vmatpush1.bf16.msra.mxu0 0
    %4826 = vmatprep.subr.bf16.mxu0 0
    %4827 = vmatpush1.bf16.msra.mxu0 0
    %4828 = vmatprep.subr.bf16.mxu0 0
    %4829 = vmatpush1.bf16.msra.mxu0 0
    %4830 = vmatprep.subr.bf16.mxu0 0
    %4831 = vmatpush1.bf16.msra.mxu0 0
    %4832 = vmatprep.subr.bf16.mxu0 0
    %4833 = vmatpush1.bf16.msra.mxu0 0
    %4834 = vmatprep.subr.bf16.mxu0 0
    %4835 = vmatpush1.bf16.msra.mxu0 0
    %4836 = vmatprep.subr.bf16.mxu0 0
    %4837 = vmatpush1.bf16.msra.mxu0 0
    %4838 = vmatprep.subr.bf16.mxu0 0
    %4839 = vmatpush1.bf16.msra.mxu0 0
    %4840 = vmatprep.subr.bf16.mxu0 0
    %4841 = vmatpush1.bf16.msra.mxu0 0
    %4842 = vmatprep.subr.bf16.mxu0 0
    %4843 = vmatpush1.bf16.msra.mxu0 0
    %4844 = vmatprep.subr.bf16.mxu0 0
    %4845 = vmatpush1.bf16.msra.mxu0 0
    %4846 = vmatprep.subr.bf16.mxu0 0
    %4847 = vmatpush1.bf16.msra.mxu0 0
    %4848 = vmatprep.mubr.bf16.mxu0 0
    %4849 = vmatmul.mubr.bf16.gmra.mrb[0].mxu0 %v4814
    %v4850 = vpop.f32.mrb[0].mxu0
    %v4851 = vadd.f32 0.0, %v4850
    %v4852 = vpop.f32.mrb[0].mxu0
    %v4853 = vadd.f32 0.0, %v4852
    %v4854 = vpop.f32.mrb[0].mxu0
    %v4855 = vpop.f32.mrb[0].mxu0
    %4856 = vdwg.mxu0
    %4857 = vmatprep.subr.bf16.mxu0 0
    %4858 = vmatpush1.bf16.msra.mxu0 %v3956
    %4859 = vmatprep.subr.bf16.mxu0 0
    %4860 = vmatpush1.bf16.msra.mxu0 %v3959
    %4861 = vmatprep.subr.bf16.mxu0 0
    %4862 = vmatpush1.bf16.msra.mxu0 %v3962
    %4863 = vmatprep.subr.bf16.mxu0 0
    %4864 = vmatpush1.bf16.msra.mxu0 %v3965
    %4865 = vmatprep.subr.bf16.mxu0 0
    %4866 = vmatpush1.bf16.msra.mxu0 0
    %4867 = vmatprep.subr.bf16.mxu0 0
    %4868 = vmatpush1.bf16.msra.mxu0 0
    %4869 = vmatprep.subr.bf16.mxu0 0
    %4870 = vmatpush1.bf16.msra.mxu0 0
    %4871 = vmatprep.subr.bf16.mxu0 0
    %4872 = vmatpush1.bf16.msra.mxu0 0
    %4873 = vmatprep.subr.bf16.mxu0 0
    %4874 = vmatpush1.bf16.msra.mxu0 0
    %4875 = vmatprep.subr.bf16.mxu0 0
    %4876 = vmatpush1.bf16.msra.mxu0 0
    %4877 = vmatprep.subr.bf16.mxu0 0
    %4878 = vmatpush1.bf16.msra.mxu0 0
    %4879 = vmatprep.subr.bf16.mxu0 0
    %4880 = vmatpush1.bf16.msra.mxu0 0
    %4881 = vmatprep.subr.bf16.mxu0 0
    %4882 = vmatpush1.bf16.msra.mxu0 0
    %4883 = vmatprep.subr.bf16.mxu0 0
    %4884 = vmatpush1.bf16.msra.mxu0 0
    %4885 = vmatprep.subr.bf16.mxu0 0
    %4886 = vmatpush1.bf16.msra.mxu0 0
    %4887 = vmatprep.subr.bf16.mxu0 0
    %4888 = vmatpush1.bf16.msra.mxu0 0
    %4889 = vmatprep.mubr.bf16.mxu0 0
    %4890 = vmatmul.mubr.bf16.gmra.mrb[0].mxu0 %v4814
    %v4891 = vpop.f32.mrb[0].mxu0
    %v4892 = vadd.f32 0.0, %v4891
    %v4893 = vpop.f32.mrb[0].mxu0
    %v4894 = vpop.f32.mrb[0].mxu0
    %v4895 = vpop.f32.mrb[0].mxu0
    %4896 = vdwg.mxu0
    %v4897 = vadd.f32 %v4759, %v4851
    %v4898 = vadd.f32 %v4760, %v4853
    %v4899 = vadd.f32 %v4761, %v4892
    %v4900 = vadd.f32 %v4897, %v4069
    %v4901 = vadd.f32 %v4898, %v4073
    %v4902 = vadd.f32 %v4899, %v4077
    %s4903 = scalar_lea.vmem [#allocation8], 24
    %4904 = vst [vmem:[%s4903] sm:$0xff] %v4900
    %4905 = vst [vmem:[%s4903 + $0x8] sm:$0xff] %v4901
    %4906 = vst [vmem:[%s4903 + $0x10] sm:$0xff] %v4902
    // Predicated region
    $region30: #{tpu_custom_call.1} parent=1 // pred_check
      _
    $region31: #{tpu_custom_call.1} parent=1 // pred_check_branch
      %4908 = sbr.rel (0) target = $region33
    $region32: #{tpu_custom_call.1} parent=1 // pred_region
      %s4910 = ssub.s32 768, 768
      %4911 = vsyncadd [#allocation4], %s4910
      %s4912 = sshll.u32 [#allocation8], 4
      %s4913 = int_to_ptr.vmem [resolvable:$true] %s4912
      %4918 = dma.vmem_to_hbm [thread:$0]  %s4913, 768, %s4, [#allocation4], 384, 384, 24
    $region33: #{tpu_custom_call.1} parent=1 // pred_fallthru
      _
    // Predicated region
    $region34: #{tpu_custom_call.1} parent=1 // pred_check
      _
    $region35: #{tpu_custom_call.1} parent=1 // pred_check_branch
      %4920 = sbr.rel (0) target = $region37
    $region36: #{tpu_custom_call.1} parent=1 // pred_region
      %4921 = dma.done [#allocation4], 768
    $region37: #{tpu_custom_call.1} parent=1 // pred_fallthru
      _
    %4922 = vsyncpa [#allocation3], 1
    %4923 = vsyncpa [#allocation6], 1
    %4924 = vsyncpa [#allocation4], 1

</llo_original>
